<compile_context>
chip_gen: v6e
topology: v6e:2x2x1
jax: 0.10.0
libtpu: 0.0.40
codegen_flags: <defaults>
</compile_context>

<pallas_src>
import math
import jax
import jax.numpy as jnp
from jax.experimental import pallas as pl
from jax.experimental.pallas import tpu as pltpu

# ----------------------------- configuration --------------------------------
B, S, D = 2, 8, 32          # batch, sequence, d_model
NHEAD = 4
HEAD_DIM = D // NHEAD
FFN = 64
NUM_LAYERS = 2
LN_EPS = 1e-5
NEG_INF = -1e9


# ------------------------------ Pallas kernel -------------------------------
def encoder_stack_kernel(x_ref, pad_ref, base_ref, cos_ref, sin_ref,
                         w_in_ref, b_in_ref, wo_ref, bo_ref,
                         ln1g_ref, ln1b_ref, ln2g_ref, ln2b_ref,
                         w1_ref, b1_ref, w2_ref, b2_ref,
                         out_ref):
    bb = x_ref.shape[0]                         # batch elements in this grid step

    # hoist all parameter / table loads out of the batch & layer loops
    base = base_ref[...]                        # (S, S) causal/src additive bias
    cos3 = cos_ref[...]                         # (NHEAD, S, HEAD_DIM) f32
    sin3 = sin_ref[...]                         # (NHEAD, S, HEAD_DIM) f32
    w_in = w_in_ref[...]                        # (NHEAD, D, 5*HEAD_DIM) bf16
    b_in = b_in_ref[...]                        # (NHEAD, 1, 5*HEAD_DIM) f32
    wo3 = wo_ref[...]                           # (NHEAD, HEAD_DIM, D) bf16
    bo = bo_ref[...]                            # (1, D) f32
    g1, be1 = ln1g_ref[...], ln1b_ref[...]
    g2, be2 = ln2g_ref[...], ln2b_ref[...]
    w1, b1 = w1_ref[...], b1_ref[...]           # (D, FFN) bf16, (1, FFN) f32
    w2, b2 = w2_ref[...], b2_ref[...]           # (FFN, D) bf16, (1, D) f32

    def layernorm(h, g, beta):
        mu = jnp.mean(h, axis=-1, keepdims=True)
        var = jnp.mean((h - mu) ** 2, axis=-1, keepdims=True)
        return (h - mu) * jax.lax.rsqrt(var + LN_EPS) * g + beta

    def layer(xb, bias3):
        # fused per-head projection: columns = [q*scale, rot_half(q)*scale,
        #                                       k, rot_half(k), v]
        x3 = jnp.broadcast_to(xb.astype(jnp.bfloat16)[None], (NHEAD, S, D))
        proj = jnp.einsum('hsd,hdf->hsf', x3, w_in,
                          preferred_element_type=jnp.float32) + b_in
        q = proj[..., 0 * HEAD_DIM:1 * HEAD_DIM]
        qr = proj[..., 1 * HEAD_DIM:2 * HEAD_DIM]
        k = proj[..., 2 * HEAD_DIM:3 * HEAD_DIM]
        kr = proj[..., 3 * HEAD_DIM:4 * HEAD_DIM]
        v = proj[..., 4 * HEAD_DIM:5 * HEAD_DIM]

        # rotary embedding (rotate_half already folded into qr/kr weights)
        q = q * cos3 + qr * sin3                 # (NHEAD, S, HEAD_DIM) f32
        k = k * cos3 + kr * sin3

        # head-batched attention (1/sqrt(hd) pre-folded into q weights)
        s = jnp.einsum('hqd,hkd->hqk',
                       q.astype(jnp.bfloat16), k.astype(jnp.bfloat16),
                       preferred_element_type=jnp.float32) + bias3
        m = jnp.max(s, axis=-1, keepdims=True)
        p = jnp.exp(s - m)
        p = p * pl.reciprocal(jnp.sum(p, axis=-1, keepdims=True), approx=True)
        pv = jnp.einsum('hqk,hkd->hqd',
                        p.astype(jnp.bfloat16), v.astype(jnp.bfloat16),
                        preferred_element_type=jnp.float32)
        # per-head output projection summed over heads (== concat(heads) @ Wo)
        oh = jnp.einsum('hqd,hde->hqe', pv.astype(jnp.bfloat16), wo3,
                        preferred_element_type=jnp.float32)
        attn_out = jnp.sum(oh, axis=0) + bo      # (S, D)

        # residual + LayerNorm 1 (post-norm)
        h1 = layernorm(xb + attn_out, g1, be1)

        # feed-forward (ReLU)
        ff = jnp.dot(h1.astype(jnp.bfloat16), w1,
                     preferred_element_type=jnp.float32) + b1
        ff = jnp.maximum(ff, 0.0)
        ff = jnp.dot(ff.astype(jnp.bfloat16), w2,
                     preferred_element_type=jnp.float32) + b2

        # residual + LayerNorm 2
        return layernorm(h1 + ff, g2, be2)

    for b in range(bb):                          # static unroll over batch block
        # attention bias for this batch element (constant across layers)
        bias2 = base + pad_ref[b]                # (S, S) + (1, S)
        bias3 = jnp.broadcast_to(bias2[None], (NHEAD, S, S))
        xb = x_ref[b].astype(jnp.float32)        # (S, D)
        for _ in range(NUM_LAYERS):              # shared-weight layers, fused
            xb = layer(xb, bias3)
        out_ref[b] = xb.astype(out_ref.dtype)


# ------------------------------ wrappers -------------------------------------
def _full_spec(arr):
    nd = arr.ndim
    return pl.BlockSpec(arr.shape, lambda i, _n=nd: (0,) * _n)


def _rotate_half_matrix(dim):
    """Right-multiplication matrix R with v @ R == rotate_half(v)."""
    half = dim // 2
    r = jnp.zeros((dim, dim), jnp.float32)
    r = r.at[jnp.arange(half) + half, jnp.arange(half)].set(-1.0)
    r = r.at[jnp.arange(half), jnp.arange(half) + half].set(1.0)
    return r


def rotary_tables(seq, dim):
    inv_freq = 1.0 / (10000.0 ** (jnp.arange(0, dim, 2, dtype=jnp.float32) / dim))
    t = jnp.arange(seq, dtype=jnp.float32)
    freqs = jnp.outer(t, inv_freq)                       # (S, dim/2)
    emb = jnp.concatenate([freqs, freqs], axis=-1)       # (S, dim)
    return jnp.cos(emb), jnp.sin(emb)


def prepare_layer_params(params):
    """Repack shared-layer params for the fused kernel (plain JAX, done once)."""
    wqkv, bqkv, wo, bo, ln1g, ln1b, ln2g, ln2b, w1, b1, w2, b2 = params
    scale = 1.0 / math.sqrt(HEAD_DIM)
    rot = _rotate_half_matrix(HEAD_DIM)

    def per_head(w, b):        # (D, D), (1, D) -> (NHEAD, D, HD), (NHEAD, 1, HD)
        w3 = jnp.transpose(w.reshape(D, NHEAD, HEAD_DIM), (1, 0, 2))
        b3 = jnp.transpose(b.reshape(1, NHEAD, HEAD_DIM), (1, 0, 2))
        return w3, b3

    wq3, bq3 = per_head(wqkv[:, :D], bqkv[:, :D])
    wk3, bk3 = per_head(wqkv[:, D:2 * D], bqkv[:, D:2 * D])
    wv3, bv3 = per_head(wqkv[:, 2 * D:], bqkv[:, 2 * D:])

    w_in = jnp.concatenate([wq3 * scale, (wq3 @ rot) * scale,
                            wk3, wk3 @ rot, wv3], axis=-1)       # (NHEAD, D, 5*HD)
    b_in = jnp.concatenate([bq3 * scale, (bq3 @ rot) * scale,
                            bk3, bk3 @ rot, bv3], axis=-1)       # (NHEAD, 1, 5*HD)
    wo3 = wo.reshape(NHEAD, HEAD_DIM, D)                         # (NHEAD, HD, D)

    cos, sin = rotary_tables(S, HEAD_DIM)                        # (S, HD)
    cos3 = jnp.broadcast_to(cos[None], (NHEAD, S, HEAD_DIM)).astype(jnp.float32)
    sin3 = jnp.broadcast_to(sin[None], (NHEAD, S, HEAD_DIM)).astype(jnp.float32)

    return [cos3, sin3,
            w_in.astype(jnp.bfloat16), b_in.astype(jnp.float32),
            wo3.astype(jnp.bfloat16), bo.astype(jnp.float32),
            ln1g, ln1b, ln2g, ln2b,
            w1.astype(jnp.bfloat16), b1.astype(jnp.float32),
            w2.astype(jnp.bfloat16), b2.astype(jnp.float32)]


def _batch_block_size():
    """One batch element per grid step on v7x (2 TensorCores/chip);
    collapse the whole batch into one step on single-core v5e/v6e."""
    try:
        kind = jax.devices()[0].device_kind.lower()
    except Exception:
        return B
    if "v7" in kind or "7x" in kind:
        return 1
    return B


def transformer_encoder_rot(x, src_mask, src_key_padding_mask, is_causal, params):
    """Applies the SAME encoder layer NUM_LAYERS times (shared weights),
    with the full layer stack fused inside one pallas_call."""
    prepped = prepare_layer_params(params)

    base = jnp.zeros((S, S), jnp.float32)                 # causal + src_mask bias
    if src_mask is not None:
        base = base + src_mask.astype(jnp.float32)
    if is_causal:
        base = base + jnp.where(jnp.tril(jnp.ones((S, S), bool)), 0.0, NEG_INF)

    if src_key_padding_mask is not None:                  # bool (B, S), True = masked
        pad = jnp.where(src_key_padding_mask, NEG_INF, 0.0).astype(jnp.float32)
    else:
        pad = jnp.zeros((B, S), jnp.float32)
    pad3 = pad[:, None, :]                                # (B, 1, S)

    bb = _batch_block_size()
    grid = (B // bb,)

    in_specs = [
        pl.BlockSpec((bb, S, D), lambda i: (i, 0, 0)),    # x
        pl.BlockSpec((bb, 1, S), lambda i: (i, 0, 0)),    # key-padding bias
        _full_spec(base),
    ] + [_full_spec(p) for p in prepped]

    out_spec = pl.BlockSpec((bb, S, D), lambda i: (i, 0, 0))

    return pl.pallas_call(
        encoder_stack_kernel,
        out_shape=jax.ShapeDtypeStruct((B, S, D), jnp.float32),
        grid_spec=pltpu.PrefetchScalarGridSpec(
            num_scalar_prefetch=0,
            grid=grid,
            in_specs=in_specs,
            out_specs=out_spec,
        ),
        compiler_params=pltpu.CompilerParams(dimension_semantics=("parallel",)),
    )(x, pad3, base, *prepped)


def init_params(key):
    ks = jax.random.split(key, 6)
    scl = 0.02
    wqkv = scl * jax.random.normal(ks[0], (D, 3 * D), jnp.float32)
    bqkv = jnp.zeros((1, 3 * D), jnp.float32)
    wo = scl * jax.random.normal(ks[1], (D, D), jnp.float32)
    bo = jnp.zeros((1, D), jnp.float32)
    ln1g = jnp.ones((1, D), jnp.float32)
    ln1b = jnp.zeros((1, D), jnp.float32)
    ln2g = jnp.ones((1, D), jnp.float32)
    ln2b = jnp.zeros((1, D), jnp.float32)
    w1 = scl * jax.random.normal(ks[2], (D, FFN), jnp.float32)
    b1 = jnp.zeros((1, FFN), jnp.float32)
    w2 = scl * jax.random.normal(ks[3], (FFN, D), jnp.float32)
    b2 = jnp.zeros((1, D), jnp.float32)
    return [wqkv, bqkv, wo, bo, ln1g, ln1b, ln2g, ln2b, w1, b1, w2, b2]


# --------------------------------- main --------------------------------------
if __name__ == "__main__":
    key = jax.random.PRNGKey(0)
    kx, kp = jax.random.split(key)

    x = jax.random.normal(kx, (B, S, D), jnp.float32)
    params = init_params(kp)

    src_mask = None
    # no padded positions in this synthetic example (False = keep)
    src_key_padding_mask = jnp.zeros((B, S), dtype=bool)
    is_causal = True

    out = transformer_encoder_rot(x, src_mask, src_key_padding_mask, is_causal, params)
    jax.block_until_ready(out)

    assert out.shape == (B, S, D) and out.dtype == jnp.float32
    assert bool(jnp.all(jnp.isfinite(out)))
    print("KERNEL_OK")
</pallas_src>

<mosaic_0001>
module attributes {stable_mosaic.version = 11 : i64} {
  func.func @encoder_stack_kernel(%arg0: i32, %arg1: memref<2x8x32xf32, #tpu.memory_space<vmem>>, %arg2: memref<2x1x8xf32, #tpu.memory_space<vmem>>, %arg3: memref<8x8xf32, #tpu.memory_space<vmem>>, %arg4: memref<4x8x8xf32, #tpu.memory_space<vmem>>, %arg5: memref<4x8x8xf32, #tpu.memory_space<vmem>>, %arg6: memref<4x32x40xbf16, #tpu.memory_space<vmem>>, %arg7: memref<4x1x40xf32, #tpu.memory_space<vmem>>, %arg8: memref<4x8x32xbf16, #tpu.memory_space<vmem>>, %arg9: memref<1x32xf32, #tpu.memory_space<vmem>>, %arg10: memref<1x32xf32, #tpu.memory_space<vmem>>, %arg11: memref<1x32xf32, #tpu.memory_space<vmem>>, %arg12: memref<1x32xf32, #tpu.memory_space<vmem>>, %arg13: memref<1x32xf32, #tpu.memory_space<vmem>>, %arg14: memref<32x64xbf16, #tpu.memory_space<vmem>>, %arg15: memref<1x64xf32, #tpu.memory_space<vmem>>, %arg16: memref<64x32xbf16, #tpu.memory_space<vmem>>, %arg17: memref<1x32xf32, #tpu.memory_space<vmem>>, %arg18: memref<2x8x32xf32, #tpu.memory_space<vmem>>) attributes {dimension_semantics = [#tpu.dimension_semantics<parallel>], iteration_bounds = array<i64: 1>, scalar_prefetch = 0 : i64, scratch_operands = 0 : i64, tpu.core_type = #tpu.core_type<tc>, window_params = [{transform_indices = @transform_0, window_bounds = array<i64: 2, 8, 32>}, {transform_indices = @transform_1, window_bounds = array<i64: 2, 1, 8>}, {pipeline_mode = #tpu.pipeline_mode<synchronous>, transform_indices = @transform_2, window_bounds = array<i64: 8, 8>}, {pipeline_mode = #tpu.pipeline_mode<synchronous>, transform_indices = @transform_3, window_bounds = array<i64: 4, 8, 8>}, {pipeline_mode = #tpu.pipeline_mode<synchronous>, transform_indices = @transform_4, window_bounds = array<i64: 4, 8, 8>}, {pipeline_mode = #tpu.pipeline_mode<synchronous>, transform_indices = @transform_5, window_bounds = array<i64: 4, 32, 40>}, {pipeline_mode = #tpu.pipeline_mode<synchronous>, transform_indices = @transform_6, window_bounds = array<i64: 4, 1, 40>}, {pipeline_mode = #tpu.pipeline_mode<synchronous>, transform_indices = @transform_7, window_bounds = array<i64: 4, 8, 32>}, {pipeline_mode = #tpu.pipeline_mode<synchronous>, transform_indices = @transform_8, window_bounds = array<i64: 1, 32>}, {pipeline_mode = #tpu.pipeline_mode<synchronous>, transform_indices = @transform_9, window_bounds = array<i64: 1, 32>}, {pipeline_mode = #tpu.pipeline_mode<synchronous>, transform_indices = @transform_10, window_bounds = array<i64: 1, 32>}, {pipeline_mode = #tpu.pipeline_mode<synchronous>, transform_indices = @transform_11, window_bounds = array<i64: 1, 32>}, {pipeline_mode = #tpu.pipeline_mode<synchronous>, transform_indices = @transform_12, window_bounds = array<i64: 1, 32>}, {pipeline_mode = #tpu.pipeline_mode<synchronous>, transform_indices = @transform_13, window_bounds = array<i64: 32, 64>}, {pipeline_mode = #tpu.pipeline_mode<synchronous>, transform_indices = @transform_14, window_bounds = array<i64: 1, 64>}, {pipeline_mode = #tpu.pipeline_mode<synchronous>, transform_indices = @transform_15, window_bounds = array<i64: 64, 32>}, {pipeline_mode = #tpu.pipeline_mode<synchronous>, transform_indices = @transform_16, window_bounds = array<i64: 1, 32>}, {transform_indices = @transform_17, window_bounds = array<i64: 2, 8, 32>}]} {
    %c0 = arith.constant 0 : index
    %c0_0 = arith.constant 0 : index
    %0 = vector.load %arg3[%c0, %c0_0] : memref<8x8xf32, #tpu.memory_space<vmem>>, vector<8x8xf32>
    %c0_1 = arith.constant 0 : index
    %c0_2 = arith.constant 0 : index
    %c0_3 = arith.constant 0 : index
    %1 = vector.load %arg4[%c0_1, %c0_2, %c0_3] : memref<4x8x8xf32, #tpu.memory_space<vmem>>, vector<4x8x8xf32>
    %c0_4 = arith.constant 0 : index
    %c0_5 = arith.constant 0 : index
    %c0_6 = arith.constant 0 : index
    %2 = vector.load %arg5[%c0_4, %c0_5, %c0_6] : memref<4x8x8xf32, #tpu.memory_space<vmem>>, vector<4x8x8xf32>
    %c0_7 = arith.constant 0 : index
    %c0_8 = arith.constant 0 : index
    %c0_9 = arith.constant 0 : index
    %3 = vector.load %arg6[%c0_7, %c0_8, %c0_9] : memref<4x32x40xbf16, #tpu.memory_space<vmem>>, vector<4x32x40xbf16>
    %c0_10 = arith.constant 0 : index
    %c0_11 = arith.constant 0 : index
    %c0_12 = arith.constant 0 : index
    %4 = vector.load %arg7[%c0_10, %c0_11, %c0_12] : memref<4x1x40xf32, #tpu.memory_space<vmem>>, vector<4x1x40xf32>
    %c0_13 = arith.constant 0 : index
    %c0_14 = arith.constant 0 : index
    %c0_15 = arith.constant 0 : index
    %5 = vector.load %arg8[%c0_13, %c0_14, %c0_15] : memref<4x8x32xbf16, #tpu.memory_space<vmem>>, vector<4x8x32xbf16>
    %c0_16 = arith.constant 0 : index
    %c0_17 = arith.constant 0 : index
    %6 = vector.load %arg9[%c0_16, %c0_17] : memref<1x32xf32, #tpu.memory_space<vmem>>, vector<1x32xf32>
    %c0_18 = arith.constant 0 : index
    %c0_19 = arith.constant 0 : index
    %7 = vector.load %arg10[%c0_18, %c0_19] : memref<1x32xf32, #tpu.memory_space<vmem>>, vector<1x32xf32>
    %c0_20 = arith.constant 0 : index
    %c0_21 = arith.constant 0 : index
    %8 = vector.load %arg11[%c0_20, %c0_21] : memref<1x32xf32, #tpu.memory_space<vmem>>, vector<1x32xf32>
    %c0_22 = arith.constant 0 : index
    %c0_23 = arith.constant 0 : index
    %9 = vector.load %arg12[%c0_22, %c0_23] : memref<1x32xf32, #tpu.memory_space<vmem>>, vector<1x32xf32>
    %c0_24 = arith.constant 0 : index
    %c0_25 = arith.constant 0 : index
    %10 = vector.load %arg13[%c0_24, %c0_25] : memref<1x32xf32, #tpu.memory_space<vmem>>, vector<1x32xf32>
    %c0_26 = arith.constant 0 : index
    %c0_27 = arith.constant 0 : index
    %11 = vector.load %arg14[%c0_26, %c0_27] : memref<32x64xbf16, #tpu.memory_space<vmem>>, vector<32x64xbf16>
    %c0_28 = arith.constant 0 : index
    %c0_29 = arith.constant 0 : index
    %12 = vector.load %arg15[%c0_28, %c0_29] : memref<1x64xf32, #tpu.memory_space<vmem>>, vector<1x64xf32>
    %c0_30 = arith.constant 0 : index
    %c0_31 = arith.constant 0 : index
    %13 = vector.load %arg16[%c0_30, %c0_31] : memref<64x32xbf16, #tpu.memory_space<vmem>>, vector<64x32xbf16>
    %c0_32 = arith.constant 0 : index
    %c0_33 = arith.constant 0 : index
    %14 = vector.load %arg17[%c0_32, %c0_33] : memref<1x32xf32, #tpu.memory_space<vmem>>, vector<1x32xf32>
    %c0_34 = arith.constant 0 : index
    %c0_35 = arith.constant 0 : index
    %c0_36 = arith.constant 0 : index
    %15 = vector.load %arg2[%c0_34, %c0_35, %c0_36] : memref<2x1x8xf32, #tpu.memory_space<vmem>>, vector<1x1x8xf32>
    %16 = vector.shape_cast %15 : vector<1x1x8xf32> to vector<1x8xf32>
    %17 = vector.broadcast %16 : vector<1x8xf32> to vector<8x8xf32>
    %18 = arith.addf %0, %17 : vector<8x8xf32>
    %19 = vector.shape_cast %18 : vector<8x8xf32> to vector<1x8x8xf32>
    %20 = vector.shape_cast %19 : vector<1x8x8xf32> to vector<1x8x8xf32>
    %21 = vector.broadcast %20 : vector<1x8x8xf32> to vector<4x8x8xf32>
    %c0_37 = arith.constant 0 : index
    %c0_38 = arith.constant 0 : index
    %c0_39 = arith.constant 0 : index
    %22 = vector.load %arg1[%c0_37, %c0_38, %c0_39] : memref<2x8x32xf32, #tpu.memory_space<vmem>>, vector<1x8x32xf32>
    %23 = vector.shape_cast %22 : vector<1x8x32xf32> to vector<8x32xf32>
    %24 = arith.truncf %23 : vector<8x32xf32> to vector<8x32xbf16>
    %25 = vector.shape_cast %24 : vector<8x32xbf16> to vector<1x8x32xbf16>
    %26 = vector.shape_cast %25 : vector<1x8x32xbf16> to vector<1x8x32xbf16>
    %27 = vector.broadcast %26 : vector<1x8x32xbf16> to vector<4x8x32xbf16>
    "tpu.trace_start"() <{level = 10 : i32, message = "hsd,hdf->hsf"}> : () -> ()
    %cst = arith.constant dense<0.000000e+00> : vector<4x8x40xf32>
    %28 = tpu.matmul %27, %3, %cst {dimension_numbers = #tpu.dot_dimension_numbers<[2], [1], [1], [2], [0, 0, 0, 1, 1, 2], [0], [0]>} : vector<4x8x32xbf16>, vector<4x32x40xbf16>, vector<4x8x40xf32> -> vector<4x8x40xf32>
    "tpu.trace_stop"() : () -> ()
    %29 = vector.broadcast %4 : vector<4x1x40xf32> to vector<4x8x40xf32>
    %30 = arith.addf %28, %29 : vector<4x8x40xf32>
    %31 = vector.extract_strided_slice %30 {offsets = [0, 0, 0], sizes = [4, 8, 8], strides = [1, 1, 1]} : vector<4x8x40xf32> to vector<4x8x8xf32>
    %32 = vector.extract_strided_slice %30 {offsets = [0, 0, 8], sizes = [4, 8, 8], strides = [1, 1, 1]} : vector<4x8x40xf32> to vector<4x8x8xf32>
    %33 = vector.extract_strided_slice %30 {offsets = [0, 0, 16], sizes = [4, 8, 8], strides = [1, 1, 1]} : vector<4x8x40xf32> to vector<4x8x8xf32>
    %34 = vector.extract_strided_slice %30 {offsets = [0, 0, 24], sizes = [4, 8, 8], strides = [1, 1, 1]} : vector<4x8x40xf32> to vector<4x8x8xf32>
    %35 = vector.extract_strided_slice %30 {offsets = [0, 0, 32], sizes = [4, 8, 8], strides = [1, 1, 1]} : vector<4x8x40xf32> to vector<4x8x8xf32>
    %36 = arith.mulf %31, %1 : vector<4x8x8xf32>
    %37 = arith.mulf %32, %2 : vector<4x8x8xf32>
    %38 = arith.addf %36, %37 : vector<4x8x8xf32>
    %39 = arith.mulf %33, %1 : vector<4x8x8xf32>
    %40 = arith.mulf %34, %2 : vector<4x8x8xf32>
    %41 = arith.addf %39, %40 : vector<4x8x8xf32>
    %42 = arith.truncf %38 : vector<4x8x8xf32> to vector<4x8x8xbf16>
    %43 = arith.truncf %41 : vector<4x8x8xf32> to vector<4x8x8xbf16>
    "tpu.trace_start"() <{level = 10 : i32, message = "hqd,hkd->hqk"}> : () -> ()
    %cst_40 = arith.constant dense<0.000000e+00> : vector<4x8x8xf32>
    %44 = tpu.matmul %42, %43, %cst_40 {dimension_numbers = #tpu.dot_dimension_numbers<[2], [2], [1], [1], [0, 0, 0, 1, 1, 1], [0], [0]>} : vector<4x8x8xbf16>, vector<4x8x8xbf16>, vector<4x8x8xf32> -> vector<4x8x8xf32>
    "tpu.trace_stop"() : () -> ()
    %45 = arith.addf %44, %21 : vector<4x8x8xf32>
    %cst_41 = arith.constant dense<0xFF800000> : vector<4x8xf32>
    %46 = vector.multi_reduction <maximumf>, %45, %cst_41 [2] : vector<4x8x8xf32> to vector<4x8xf32>
    %47 = vector.shape_cast %46 : vector<4x8xf32> to vector<4x8x1xf32>
    %48 = vector.broadcast %47 : vector<4x8x1xf32> to vector<4x8x8xf32>
    %49 = arith.subf %45, %48 : vector<4x8x8xf32>
    %50 = math.exp %49 : vector<4x8x8xf32>
    %cst_42 = arith.constant dense<0.000000e+00> : vector<4x8xf32>
    %51 = vector.multi_reduction <add>, %50, %cst_42 [2] : vector<4x8x8xf32> to vector<4x8xf32>
    %52 = vector.shape_cast %51 : vector<4x8xf32> to vector<4x8x1xf32>
    %53 = tpu.reciprocal %52 {approx = true} : vector<4x8x1xf32> -> vector<4x8x1xf32>
    %54 = vector.broadcast %53 : vector<4x8x1xf32> to vector<4x8x8xf32>
    %55 = arith.mulf %50, %54 : vector<4x8x8xf32>
    %56 = arith.truncf %55 : vector<4x8x8xf32> to vector<4x8x8xbf16>
    %57 = arith.truncf %35 : vector<4x8x8xf32> to vector<4x8x8xbf16>
    "tpu.trace_start"() <{level = 10 : i32, message = "hqk,hkd->hqd"}> : () -> ()
    %cst_43 = arith.constant dense<0.000000e+00> : vector<4x8x8xf32>
    %58 = tpu.matmul %56, %57, %cst_43 {dimension_numbers = #tpu.dot_dimension_numbers<[2], [1], [1], [2], [0, 0, 0, 1, 1, 2], [0], [0]>} : vector<4x8x8xbf16>, vector<4x8x8xbf16>, vector<4x8x8xf32> -> vector<4x8x8xf32>
    "tpu.trace_stop"() : () -> ()
    %59 = arith.truncf %58 : vector<4x8x8xf32> to vector<4x8x8xbf16>
    "tpu.trace_start"() <{level = 10 : i32, message = "hqd,hde->hqe"}> : () -> ()
    %cst_44 = arith.constant dense<0.000000e+00> : vector<4x8x32xf32>
    %60 = tpu.matmul %59, %5, %cst_44 {dimension_numbers = #tpu.dot_dimension_numbers<[2], [1], [1], [2], [0, 0, 0, 1, 1, 2], [0], [0]>} : vector<4x8x8xbf16>, vector<4x8x32xbf16>, vector<4x8x32xf32> -> vector<4x8x32xf32>
    "tpu.trace_stop"() : () -> ()
    %cst_45 = arith.constant dense<0.000000e+00> : vector<8x32xf32>
    %61 = vector.multi_reduction <add>, %60, %cst_45 [0] : vector<4x8x32xf32> to vector<8x32xf32>
    %62 = vector.broadcast %6 : vector<1x32xf32> to vector<8x32xf32>
    %63 = arith.addf %61, %62 : vector<8x32xf32>
    %64 = arith.addf %23, %63 : vector<8x32xf32>
    %cst_46 = arith.constant dense<0.000000e+00> : vector<8xf32>
    %65 = vector.multi_reduction <add>, %64, %cst_46 [1] : vector<8x32xf32> to vector<8xf32>
    %66 = vector.shape_cast %65 : vector<8xf32> to vector<8x1xf32>
    %cst_47 = arith.constant 3.200000e+01 : f32
    %67 = vector.broadcast %cst_47 : f32 to vector<8x1xf32>
    %68 = arith.divf %66, %67 : vector<8x1xf32>
    %69 = vector.broadcast %68 : vector<8x1xf32> to vector<8x32xf32>
    %70 = arith.subf %64, %69 : vector<8x32xf32>
    %71 = arith.mulf %70, %70 : vector<8x32xf32>
    %cst_48 = arith.constant dense<0.000000e+00> : vector<8xf32>
    %72 = vector.multi_reduction <add>, %71, %cst_48 [1] : vector<8x32xf32> to vector<8xf32>
    %73 = vector.shape_cast %72 : vector<8xf32> to vector<8x1xf32>
    %cst_49 = arith.constant 3.200000e+01 : f32
    %74 = vector.broadcast %cst_49 : f32 to vector<8x1xf32>
    %75 = arith.divf %73, %74 : vector<8x1xf32>
    %76 = vector.broadcast %68 : vector<8x1xf32> to vector<8x32xf32>
    %77 = arith.subf %64, %76 : vector<8x32xf32>
    %cst_50 = arith.constant 9.99999974E-6 : f32
    %78 = vector.broadcast %cst_50 : f32 to vector<8x1xf32>
    %79 = arith.addf %75, %78 : vector<8x1xf32>
    %80 = math.rsqrt %79 : vector<8x1xf32>
    %81 = vector.broadcast %80 : vector<8x1xf32> to vector<8x32xf32>
    %82 = arith.mulf %77, %81 : vector<8x32xf32>
    %83 = vector.broadcast %7 : vector<1x32xf32> to vector<8x32xf32>
    %84 = arith.mulf %82, %83 : vector<8x32xf32>
    %85 = vector.broadcast %8 : vector<1x32xf32> to vector<8x32xf32>
    %86 = arith.addf %84, %85 : vector<8x32xf32>
    %87 = arith.truncf %86 : vector<8x32xf32> to vector<8x32xbf16>
    %cst_51 = arith.constant dense<0.000000e+00> : vector<8x64xf32>
    %88 = tpu.matmul %87, %11, %cst_51 {dimension_numbers = #tpu.dot_dimension_numbers<[1], [0], [0], [1], [0, 0, 1, 1], [], []>} : vector<8x32xbf16>, vector<32x64xbf16>, vector<8x64xf32> -> vector<8x64xf32>
    %89 = vector.broadcast %12 : vector<1x64xf32> to vector<8x64xf32>
    %90 = arith.addf %88, %89 : vector<8x64xf32>
    %cst_52 = arith.constant 0.000000e+00 : f32
    %91 = vector.broadcast %cst_52 : f32 to vector<8x64xf32>
    %92 = arith.maximumf %90, %91 : vector<8x64xf32>
    %93 = arith.truncf %92 : vector<8x64xf32> to vector<8x64xbf16>
    %cst_53 = arith.constant dense<0.000000e+00> : vector<8x32xf32>
    %94 = tpu.matmul %93, %13, %cst_53 {dimension_numbers = #tpu.dot_dimension_numbers<[1], [0], [0], [1], [0, 0, 1, 1], [], []>} : vector<8x64xbf16>, vector<64x32xbf16>, vector<8x32xf32> -> vector<8x32xf32>
    %95 = vector.broadcast %14 : vector<1x32xf32> to vector<8x32xf32>
    %96 = arith.addf %94, %95 : vector<8x32xf32>
    %97 = arith.addf %86, %96 : vector<8x32xf32>
    %cst_54 = arith.constant dense<0.000000e+00> : vector<8xf32>
    %98 = vector.multi_reduction <add>, %97, %cst_54 [1] : vector<8x32xf32> to vector<8xf32>
    %99 = vector.shape_cast %98 : vector<8xf32> to vector<8x1xf32>
    %cst_55 = arith.constant 3.200000e+01 : f32
    %100 = vector.broadcast %cst_55 : f32 to vector<8x1xf32>
    %101 = arith.divf %99, %100 : vector<8x1xf32>
    %102 = vector.broadcast %101 : vector<8x1xf32> to vector<8x32xf32>
    %103 = arith.subf %97, %102 : vector<8x32xf32>
    %104 = arith.mulf %103, %103 : vector<8x32xf32>
    %cst_56 = arith.constant dense<0.000000e+00> : vector<8xf32>
    %105 = vector.multi_reduction <add>, %104, %cst_56 [1] : vector<8x32xf32> to vector<8xf32>
    %106 = vector.shape_cast %105 : vector<8xf32> to vector<8x1xf32>
    %cst_57 = arith.constant 3.200000e+01 : f32
    %107 = vector.broadcast %cst_57 : f32 to vector<8x1xf32>
    %108 = arith.divf %106, %107 : vector<8x1xf32>
    %109 = vector.broadcast %101 : vector<8x1xf32> to vector<8x32xf32>
    %110 = arith.subf %97, %109 : vector<8x32xf32>
    %cst_58 = arith.constant 9.99999974E-6 : f32
    %111 = vector.broadcast %cst_58 : f32 to vector<8x1xf32>
    %112 = arith.addf %108, %111 : vector<8x1xf32>
    %113 = math.rsqrt %112 : vector<8x1xf32>
    %114 = vector.broadcast %113 : vector<8x1xf32> to vector<8x32xf32>
    %115 = arith.mulf %110, %114 : vector<8x32xf32>
    %116 = vector.broadcast %9 : vector<1x32xf32> to vector<8x32xf32>
    %117 = arith.mulf %115, %116 : vector<8x32xf32>
    %118 = vector.broadcast %10 : vector<1x32xf32> to vector<8x32xf32>
    %119 = arith.addf %117, %118 : vector<8x32xf32>
    %120 = arith.truncf %119 : vector<8x32xf32> to vector<8x32xbf16>
    %121 = vector.shape_cast %120 : vector<8x32xbf16> to vector<1x8x32xbf16>
    %122 = vector.shape_cast %121 : vector<1x8x32xbf16> to vector<1x8x32xbf16>
    %123 = vector.broadcast %122 : vector<1x8x32xbf16> to vector<4x8x32xbf16>
    "tpu.trace_start"() <{level = 10 : i32, message = "hsd,hdf->hsf"}> : () -> ()
    %cst_59 = arith.constant dense<0.000000e+00> : vector<4x8x40xf32>
    %124 = tpu.matmul %123, %3, %cst_59 {dimension_numbers = #tpu.dot_dimension_numbers<[2], [1], [1], [2], [0, 0, 0, 1, 1, 2], [0], [0]>} : vector<4x8x32xbf16>, vector<4x32x40xbf16>, vector<4x8x40xf32> -> vector<4x8x40xf32>
    "tpu.trace_stop"() : () -> ()
    %125 = vector.broadcast %4 : vector<4x1x40xf32> to vector<4x8x40xf32>
    %126 = arith.addf %124, %125 : vector<4x8x40xf32>
    %127 = vector.extract_strided_slice %126 {offsets = [0, 0, 0], sizes = [4, 8, 8], strides = [1, 1, 1]} : vector<4x8x40xf32> to vector<4x8x8xf32>
    %128 = vector.extract_strided_slice %126 {offsets = [0, 0, 8], sizes = [4, 8, 8], strides = [1, 1, 1]} : vector<4x8x40xf32> to vector<4x8x8xf32>
    %129 = vector.extract_strided_slice %126 {offsets = [0, 0, 16], sizes = [4, 8, 8], strides = [1, 1, 1]} : vector<4x8x40xf32> to vector<4x8x8xf32>
    %130 = vector.extract_strided_slice %126 {offsets = [0, 0, 24], sizes = [4, 8, 8], strides = [1, 1, 1]} : vector<4x8x40xf32> to vector<4x8x8xf32>
    %131 = vector.extract_strided_slice %126 {offsets = [0, 0, 32], sizes = [4, 8, 8], strides = [1, 1, 1]} : vector<4x8x40xf32> to vector<4x8x8xf32>
    %132 = arith.mulf %127, %1 : vector<4x8x8xf32>
    %133 = arith.mulf %128, %2 : vector<4x8x8xf32>
    %134 = arith.addf %132, %133 : vector<4x8x8xf32>
    %135 = arith.mulf %129, %1 : vector<4x8x8xf32>
    %136 = arith.mulf %130, %2 : vector<4x8x8xf32>
    %137 = arith.addf %135, %136 : vector<4x8x8xf32>
    %138 = arith.truncf %134 : vector<4x8x8xf32> to vector<4x8x8xbf16>
    %139 = arith.truncf %137 : vector<4x8x8xf32> to vector<4x8x8xbf16>
    "tpu.trace_start"() <{level = 10 : i32, message = "hqd,hkd->hqk"}> : () -> ()
    %cst_60 = arith.constant dense<0.000000e+00> : vector<4x8x8xf32>
    %140 = tpu.matmul %138, %139, %cst_60 {dimension_numbers = #tpu.dot_dimension_numbers<[2], [2], [1], [1], [0, 0, 0, 1, 1, 1], [0], [0]>} : vector<4x8x8xbf16>, vector<4x8x8xbf16>, vector<4x8x8xf32> -> vector<4x8x8xf32>
    "tpu.trace_stop"() : () -> ()
    %141 = arith.addf %140, %21 : vector<4x8x8xf32>
    %cst_61 = arith.constant dense<0xFF800000> : vector<4x8xf32>
    %142 = vector.multi_reduction <maximumf>, %141, %cst_61 [2] : vector<4x8x8xf32> to vector<4x8xf32>
    %143 = vector.shape_cast %142 : vector<4x8xf32> to vector<4x8x1xf32>
    %144 = vector.broadcast %143 : vector<4x8x1xf32> to vector<4x8x8xf32>
    %145 = arith.subf %141, %144 : vector<4x8x8xf32>
    %146 = math.exp %145 : vector<4x8x8xf32>
    %cst_62 = arith.constant dense<0.000000e+00> : vector<4x8xf32>
    %147 = vector.multi_reduction <add>, %146, %cst_62 [2] : vector<4x8x8xf32> to vector<4x8xf32>
    %148 = vector.shape_cast %147 : vector<4x8xf32> to vector<4x8x1xf32>
    %149 = tpu.reciprocal %148 {approx = true} : vector<4x8x1xf32> -> vector<4x8x1xf32>
    %150 = vector.broadcast %149 : vector<4x8x1xf32> to vector<4x8x8xf32>
    %151 = arith.mulf %146, %150 : vector<4x8x8xf32>
    %152 = arith.truncf %151 : vector<4x8x8xf32> to vector<4x8x8xbf16>
    %153 = arith.truncf %131 : vector<4x8x8xf32> to vector<4x8x8xbf16>
    "tpu.trace_start"() <{level = 10 : i32, message = "hqk,hkd->hqd"}> : () -> ()
    %cst_63 = arith.constant dense<0.000000e+00> : vector<4x8x8xf32>
    %154 = tpu.matmul %152, %153, %cst_63 {dimension_numbers = #tpu.dot_dimension_numbers<[2], [1], [1], [2], [0, 0, 0, 1, 1, 2], [0], [0]>} : vector<4x8x8xbf16>, vector<4x8x8xbf16>, vector<4x8x8xf32> -> vector<4x8x8xf32>
    "tpu.trace_stop"() : () -> ()
    %155 = arith.truncf %154 : vector<4x8x8xf32> to vector<4x8x8xbf16>
    "tpu.trace_start"() <{level = 10 : i32, message = "hqd,hde->hqe"}> : () -> ()
    %cst_64 = arith.constant dense<0.000000e+00> : vector<4x8x32xf32>
    %156 = tpu.matmul %155, %5, %cst_64 {dimension_numbers = #tpu.dot_dimension_numbers<[2], [1], [1], [2], [0, 0, 0, 1, 1, 2], [0], [0]>} : vector<4x8x8xbf16>, vector<4x8x32xbf16>, vector<4x8x32xf32> -> vector<4x8x32xf32>
    "tpu.trace_stop"() : () -> ()
    %cst_65 = arith.constant dense<0.000000e+00> : vector<8x32xf32>
    %157 = vector.multi_reduction <add>, %156, %cst_65 [0] : vector<4x8x32xf32> to vector<8x32xf32>
    %158 = vector.broadcast %6 : vector<1x32xf32> to vector<8x32xf32>
    %159 = arith.addf %157, %158 : vector<8x32xf32>
    %160 = arith.addf %119, %159 : vector<8x32xf32>
    %cst_66 = arith.constant dense<0.000000e+00> : vector<8xf32>
    %161 = vector.multi_reduction <add>, %160, %cst_66 [1] : vector<8x32xf32> to vector<8xf32>
    %162 = vector.shape_cast %161 : vector<8xf32> to vector<8x1xf32>
    %cst_67 = arith.constant 3.200000e+01 : f32
    %163 = vector.broadcast %cst_67 : f32 to vector<8x1xf32>
    %164 = arith.divf %162, %163 : vector<8x1xf32>
    %165 = vector.broadcast %164 : vector<8x1xf32> to vector<8x32xf32>
    %166 = arith.subf %160, %165 : vector<8x32xf32>
    %167 = arith.mulf %166, %166 : vector<8x32xf32>
    %cst_68 = arith.constant dense<0.000000e+00> : vector<8xf32>
    %168 = vector.multi_reduction <add>, %167, %cst_68 [1] : vector<8x32xf32> to vector<8xf32>
    %169 = vector.shape_cast %168 : vector<8xf32> to vector<8x1xf32>
    %cst_69 = arith.constant 3.200000e+01 : f32
    %170 = vector.broadcast %cst_69 : f32 to vector<8x1xf32>
    %171 = arith.divf %169, %170 : vector<8x1xf32>
    %172 = vector.broadcast %164 : vector<8x1xf32> to vector<8x32xf32>
    %173 = arith.subf %160, %172 : vector<8x32xf32>
    %cst_70 = arith.constant 9.99999974E-6 : f32
    %174 = vector.broadcast %cst_70 : f32 to vector<8x1xf32>
    %175 = arith.addf %171, %174 : vector<8x1xf32>
    %176 = math.rsqrt %175 : vector<8x1xf32>
    %177 = vector.broadcast %176 : vector<8x1xf32> to vector<8x32xf32>
    %178 = arith.mulf %173, %177 : vector<8x32xf32>
    %179 = vector.broadcast %7 : vector<1x32xf32> to vector<8x32xf32>
    %180 = arith.mulf %178, %179 : vector<8x32xf32>
    %181 = vector.broadcast %8 : vector<1x32xf32> to vector<8x32xf32>
    %182 = arith.addf %180, %181 : vector<8x32xf32>
    %183 = arith.truncf %182 : vector<8x32xf32> to vector<8x32xbf16>
    %cst_71 = arith.constant dense<0.000000e+00> : vector<8x64xf32>
    %184 = tpu.matmul %183, %11, %cst_71 {dimension_numbers = #tpu.dot_dimension_numbers<[1], [0], [0], [1], [0, 0, 1, 1], [], []>} : vector<8x32xbf16>, vector<32x64xbf16>, vector<8x64xf32> -> vector<8x64xf32>
    %185 = vector.broadcast %12 : vector<1x64xf32> to vector<8x64xf32>
    %186 = arith.addf %184, %185 : vector<8x64xf32>
    %cst_72 = arith.constant 0.000000e+00 : f32
    %187 = vector.broadcast %cst_72 : f32 to vector<8x64xf32>
    %188 = arith.maximumf %186, %187 : vector<8x64xf32>
    %189 = arith.truncf %188 : vector<8x64xf32> to vector<8x64xbf16>
    %cst_73 = arith.constant dense<0.000000e+00> : vector<8x32xf32>
    %190 = tpu.matmul %189, %13, %cst_73 {dimension_numbers = #tpu.dot_dimension_numbers<[1], [0], [0], [1], [0, 0, 1, 1], [], []>} : vector<8x64xbf16>, vector<64x32xbf16>, vector<8x32xf32> -> vector<8x32xf32>
    %191 = vector.broadcast %14 : vector<1x32xf32> to vector<8x32xf32>
    %192 = arith.addf %190, %191 : vector<8x32xf32>
    %193 = arith.addf %182, %192 : vector<8x32xf32>
    %cst_74 = arith.constant dense<0.000000e+00> : vector<8xf32>
    %194 = vector.multi_reduction <add>, %193, %cst_74 [1] : vector<8x32xf32> to vector<8xf32>
    %195 = vector.shape_cast %194 : vector<8xf32> to vector<8x1xf32>
    %cst_75 = arith.constant 3.200000e+01 : f32
    %196 = vector.broadcast %cst_75 : f32 to vector<8x1xf32>
    %197 = arith.divf %195, %196 : vector<8x1xf32>
    %198 = vector.broadcast %197 : vector<8x1xf32> to vector<8x32xf32>
    %199 = arith.subf %193, %198 : vector<8x32xf32>
    %200 = arith.mulf %199, %199 : vector<8x32xf32>
    %cst_76 = arith.constant dense<0.000000e+00> : vector<8xf32>
    %201 = vector.multi_reduction <add>, %200, %cst_76 [1] : vector<8x32xf32> to vector<8xf32>
    %202 = vector.shape_cast %201 : vector<8xf32> to vector<8x1xf32>
    %cst_77 = arith.constant 3.200000e+01 : f32
    %203 = vector.broadcast %cst_77 : f32 to vector<8x1xf32>
    %204 = arith.divf %202, %203 : vector<8x1xf32>
    %205 = vector.broadcast %197 : vector<8x1xf32> to vector<8x32xf32>
    %206 = arith.subf %193, %205 : vector<8x32xf32>
    %cst_78 = arith.constant 9.99999974E-6 : f32
    %207 = vector.broadcast %cst_78 : f32 to vector<8x1xf32>
    %208 = arith.addf %204, %207 : vector<8x1xf32>
    %209 = math.rsqrt %208 : vector<8x1xf32>
    %210 = vector.broadcast %209 : vector<8x1xf32> to vector<8x32xf32>
    %211 = arith.mulf %206, %210 : vector<8x32xf32>
    %212 = vector.broadcast %9 : vector<1x32xf32> to vector<8x32xf32>
    %213 = arith.mulf %211, %212 : vector<8x32xf32>
    %214 = vector.broadcast %10 : vector<1x32xf32> to vector<8x32xf32>
    %215 = arith.addf %213, %214 : vector<8x32xf32>
    %c0_79 = arith.constant 0 : index
    %c0_80 = arith.constant 0 : index
    %c0_81 = arith.constant 0 : index
    %216 = vector.load %arg18[%c0_79, %c0_80, %c0_81] : memref<2x8x32xf32, #tpu.memory_space<vmem>>, vector<1x8x32xf32>
    %217 = vector.shape_cast %216 : vector<1x8x32xf32> to vector<8x32xf32>
    %218 = vector.shape_cast %215 : vector<8x32xf32> to vector<1x8x32xf32>
    tpu.vector_store %arg18[%c0_79, %c0_80, %c0_81], %218 {strides = array<i32>} : memref<2x8x32xf32, #tpu.memory_space<vmem>>, vector<1x8x32xf32>,
    %c1 = arith.constant 1 : index
    %c0_82 = arith.constant 0 : index
    %c0_83 = arith.constant 0 : index
    %219 = vector.load %arg2[%c1, %c0_82, %c0_83] : memref<2x1x8xf32, #tpu.memory_space<vmem>>, vector<1x1x8xf32>
    %220 = vector.shape_cast %219 : vector<1x1x8xf32> to vector<1x8xf32>
    %221 = vector.broadcast %220 : vector<1x8xf32> to vector<8x8xf32>
    %222 = arith.addf %0, %221 : vector<8x8xf32>
    %223 = vector.shape_cast %222 : vector<8x8xf32> to vector<1x8x8xf32>
    %224 = vector.shape_cast %223 : vector<1x8x8xf32> to vector<1x8x8xf32>
    %225 = vector.broadcast %224 : vector<1x8x8xf32> to vector<4x8x8xf32>
    %c1_84 = arith.constant 1 : index
    %c0_85 = arith.constant 0 : index
    %c0_86 = arith.constant 0 : index
    %226 = vector.load %arg1[%c1_84, %c0_85, %c0_86] : memref<2x8x32xf32, #tpu.memory_space<vmem>>, vector<1x8x32xf32>
    %227 = vector.shape_cast %226 : vector<1x8x32xf32> to vector<8x32xf32>
    %228 = arith.truncf %227 : vector<8x32xf32> to vector<8x32xbf16>
    %229 = vector.shape_cast %228 : vector<8x32xbf16> to vector<1x8x32xbf16>
    %230 = vector.shape_cast %229 : vector<1x8x32xbf16> to vector<1x8x32xbf16>
    %231 = vector.broadcast %230 : vector<1x8x32xbf16> to vector<4x8x32xbf16>
    "tpu.trace_start"() <{level = 10 : i32, message = "hsd,hdf->hsf"}> : () -> ()
    %cst_87 = arith.constant dense<0.000000e+00> : vector<4x8x40xf32>
    %232 = tpu.matmul %231, %3, %cst_87 {dimension_numbers = #tpu.dot_dimension_numbers<[2], [1], [1], [2], [0, 0, 0, 1, 1, 2], [0], [0]>} : vector<4x8x32xbf16>, vector<4x32x40xbf16>, vector<4x8x40xf32> -> vector<4x8x40xf32>
    "tpu.trace_stop"() : () -> ()
    %233 = vector.broadcast %4 : vector<4x1x40xf32> to vector<4x8x40xf32>
    %234 = arith.addf %232, %233 : vector<4x8x40xf32>
    %235 = vector.extract_strided_slice %234 {offsets = [0, 0, 0], sizes = [4, 8, 8], strides = [1, 1, 1]} : vector<4x8x40xf32> to vector<4x8x8xf32>
    %236 = vector.extract_strided_slice %234 {offsets = [0, 0, 8], sizes = [4, 8, 8], strides = [1, 1, 1]} : vector<4x8x40xf32> to vector<4x8x8xf32>
    %237 = vector.extract_strided_slice %234 {offsets = [0, 0, 16], sizes = [4, 8, 8], strides = [1, 1, 1]} : vector<4x8x40xf32> to vector<4x8x8xf32>
    %238 = vector.extract_strided_slice %234 {offsets = [0, 0, 24], sizes = [4, 8, 8], strides = [1, 1, 1]} : vector<4x8x40xf32> to vector<4x8x8xf32>
    %239 = vector.extract_strided_slice %234 {offsets = [0, 0, 32], sizes = [4, 8, 8], strides = [1, 1, 1]} : vector<4x8x40xf32> to vector<4x8x8xf32>
    %240 = arith.mulf %235, %1 : vector<4x8x8xf32>
    %241 = arith.mulf %236, %2 : vector<4x8x8xf32>
    %242 = arith.addf %240, %241 : vector<4x8x8xf32>
    %243 = arith.mulf %237, %1 : vector<4x8x8xf32>
    %244 = arith.mulf %238, %2 : vector<4x8x8xf32>
    %245 = arith.addf %243, %244 : vector<4x8x8xf32>
    %246 = arith.truncf %242 : vector<4x8x8xf32> to vector<4x8x8xbf16>
    %247 = arith.truncf %245 : vector<4x8x8xf32> to vector<4x8x8xbf16>
    "tpu.trace_start"() <{level = 10 : i32, message = "hqd,hkd->hqk"}> : () -> ()
    %cst_88 = arith.constant dense<0.000000e+00> : vector<4x8x8xf32>
    %248 = tpu.matmul %246, %247, %cst_88 {dimension_numbers = #tpu.dot_dimension_numbers<[2], [2], [1], [1], [0, 0, 0, 1, 1, 1], [0], [0]>} : vector<4x8x8xbf16>, vector<4x8x8xbf16>, vector<4x8x8xf32> -> vector<4x8x8xf32>
    "tpu.trace_stop"() : () -> ()
    %249 = arith.addf %248, %225 : vector<4x8x8xf32>
    %cst_89 = arith.constant dense<0xFF800000> : vector<4x8xf32>
    %250 = vector.multi_reduction <maximumf>, %249, %cst_89 [2] : vector<4x8x8xf32> to vector<4x8xf32>
    %251 = vector.shape_cast %250 : vector<4x8xf32> to vector<4x8x1xf32>
    %252 = vector.broadcast %251 : vector<4x8x1xf32> to vector<4x8x8xf32>
    %253 = arith.subf %249, %252 : vector<4x8x8xf32>
    %254 = math.exp %253 : vector<4x8x8xf32>
    %cst_90 = arith.constant dense<0.000000e+00> : vector<4x8xf32>
    %255 = vector.multi_reduction <add>, %254, %cst_90 [2] : vector<4x8x8xf32> to vector<4x8xf32>
    %256 = vector.shape_cast %255 : vector<4x8xf32> to vector<4x8x1xf32>
    %257 = tpu.reciprocal %256 {approx = true} : vector<4x8x1xf32> -> vector<4x8x1xf32>
    %258 = vector.broadcast %257 : vector<4x8x1xf32> to vector<4x8x8xf32>
    %259 = arith.mulf %254, %258 : vector<4x8x8xf32>
    %260 = arith.truncf %259 : vector<4x8x8xf32> to vector<4x8x8xbf16>
    %261 = arith.truncf %239 : vector<4x8x8xf32> to vector<4x8x8xbf16>
    "tpu.trace_start"() <{level = 10 : i32, message = "hqk,hkd->hqd"}> : () -> ()
    %cst_91 = arith.constant dense<0.000000e+00> : vector<4x8x8xf32>
    %262 = tpu.matmul %260, %261, %cst_91 {dimension_numbers = #tpu.dot_dimension_numbers<[2], [1], [1], [2], [0, 0, 0, 1, 1, 2], [0], [0]>} : vector<4x8x8xbf16>, vector<4x8x8xbf16>, vector<4x8x8xf32> -> vector<4x8x8xf32>
    "tpu.trace_stop"() : () -> ()
    %263 = arith.truncf %262 : vector<4x8x8xf32> to vector<4x8x8xbf16>
    "tpu.trace_start"() <{level = 10 : i32, message = "hqd,hde->hqe"}> : () -> ()
    %cst_92 = arith.constant dense<0.000000e+00> : vector<4x8x32xf32>
    %264 = tpu.matmul %263, %5, %cst_92 {dimension_numbers = #tpu.dot_dimension_numbers<[2], [1], [1], [2], [0, 0, 0, 1, 1, 2], [0], [0]>} : vector<4x8x8xbf16>, vector<4x8x32xbf16>, vector<4x8x32xf32> -> vector<4x8x32xf32>
    "tpu.trace_stop"() : () -> ()
    %cst_93 = arith.constant dense<0.000000e+00> : vector<8x32xf32>
    %265 = vector.multi_reduction <add>, %264, %cst_93 [0] : vector<4x8x32xf32> to vector<8x32xf32>
    %266 = vector.broadcast %6 : vector<1x32xf32> to vector<8x32xf32>
    %267 = arith.addf %265, %266 : vector<8x32xf32>
    %268 = arith.addf %227, %267 : vector<8x32xf32>
    %cst_94 = arith.constant dense<0.000000e+00> : vector<8xf32>
    %269 = vector.multi_reduction <add>, %268, %cst_94 [1] : vector<8x32xf32> to vector<8xf32>
    %270 = vector.shape_cast %269 : vector<8xf32> to vector<8x1xf32>
    %cst_95 = arith.constant 3.200000e+01 : f32
    %271 = vector.broadcast %cst_95 : f32 to vector<8x1xf32>
    %272 = arith.divf %270, %271 : vector<8x1xf32>
    %273 = vector.broadcast %272 : vector<8x1xf32> to vector<8x32xf32>
    %274 = arith.subf %268, %273 : vector<8x32xf32>
    %275 = arith.mulf %274, %274 : vector<8x32xf32>
    %cst_96 = arith.constant dense<0.000000e+00> : vector<8xf32>
    %276 = vector.multi_reduction <add>, %275, %cst_96 [1] : vector<8x32xf32> to vector<8xf32>
    %277 = vector.shape_cast %276 : vector<8xf32> to vector<8x1xf32>
    %cst_97 = arith.constant 3.200000e+01 : f32
    %278 = vector.broadcast %cst_97 : f32 to vector<8x1xf32>
    %279 = arith.divf %277, %278 : vector<8x1xf32>
    %280 = vector.broadcast %272 : vector<8x1xf32> to vector<8x32xf32>
    %281 = arith.subf %268, %280 : vector<8x32xf32>
    %cst_98 = arith.constant 9.99999974E-6 : f32
    %282 = vector.broadcast %cst_98 : f32 to vector<8x1xf32>
    %283 = arith.addf %279, %282 : vector<8x1xf32>
    %284 = math.rsqrt %283 : vector<8x1xf32>
    %285 = vector.broadcast %284 : vector<8x1xf32> to vector<8x32xf32>
    %286 = arith.mulf %281, %285 : vector<8x32xf32>
    %287 = vector.broadcast %7 : vector<1x32xf32> to vector<8x32xf32>
    %288 = arith.mulf %286, %287 : vector<8x32xf32>
    %289 = vector.broadcast %8 : vector<1x32xf32> to vector<8x32xf32>
    %290 = arith.addf %288, %289 : vector<8x32xf32>
    %291 = arith.truncf %290 : vector<8x32xf32> to vector<8x32xbf16>
    %cst_99 = arith.constant dense<0.000000e+00> : vector<8x64xf32>
    %292 = tpu.matmul %291, %11, %cst_99 {dimension_numbers = #tpu.dot_dimension_numbers<[1], [0], [0], [1], [0, 0, 1, 1], [], []>} : vector<8x32xbf16>, vector<32x64xbf16>, vector<8x64xf32> -> vector<8x64xf32>
    %293 = vector.broadcast %12 : vector<1x64xf32> to vector<8x64xf32>
    %294 = arith.addf %292, %293 : vector<8x64xf32>
    %cst_100 = arith.constant 0.000000e+00 : f32
    %295 = vector.broadcast %cst_100 : f32 to vector<8x64xf32>
    %296 = arith.maximumf %294, %295 : vector<8x64xf32>
    %297 = arith.truncf %296 : vector<8x64xf32> to vector<8x64xbf16>
    %cst_101 = arith.constant dense<0.000000e+00> : vector<8x32xf32>
    %298 = tpu.matmul %297, %13, %cst_101 {dimension_numbers = #tpu.dot_dimension_numbers<[1], [0], [0], [1], [0, 0, 1, 1], [], []>} : vector<8x64xbf16>, vector<64x32xbf16>, vector<8x32xf32> -> vector<8x32xf32>
    %299 = vector.broadcast %14 : vector<1x32xf32> to vector<8x32xf32>
    %300 = arith.addf %298, %299 : vector<8x32xf32>
    %301 = arith.addf %290, %300 : vector<8x32xf32>
    %cst_102 = arith.constant dense<0.000000e+00> : vector<8xf32>
    %302 = vector.multi_reduction <add>, %301, %cst_102 [1] : vector<8x32xf32> to vector<8xf32>
    %303 = vector.shape_cast %302 : vector<8xf32> to vector<8x1xf32>
    %cst_103 = arith.constant 3.200000e+01 : f32
    %304 = vector.broadcast %cst_103 : f32 to vector<8x1xf32>
    %305 = arith.divf %303, %304 : vector<8x1xf32>
    %306 = vector.broadcast %305 : vector<8x1xf32> to vector<8x32xf32>
    %307 = arith.subf %301, %306 : vector<8x32xf32>
    %308 = arith.mulf %307, %307 : vector<8x32xf32>
    %cst_104 = arith.constant dense<0.000000e+00> : vector<8xf32>
    %309 = vector.multi_reduction <add>, %308, %cst_104 [1] : vector<8x32xf32> to vector<8xf32>
    %310 = vector.shape_cast %309 : vector<8xf32> to vector<8x1xf32>
    %cst_105 = arith.constant 3.200000e+01 : f32
    %311 = vector.broadcast %cst_105 : f32 to vector<8x1xf32>
    %312 = arith.divf %310, %311 : vector<8x1xf32>
    %313 = vector.broadcast %305 : vector<8x1xf32> to vector<8x32xf32>
    %314 = arith.subf %301, %313 : vector<8x32xf32>
    %cst_106 = arith.constant 9.99999974E-6 : f32
    %315 = vector.broadcast %cst_106 : f32 to vector<8x1xf32>
    %316 = arith.addf %312, %315 : vector<8x1xf32>
    %317 = math.rsqrt %316 : vector<8x1xf32>
    %318 = vector.broadcast %317 : vector<8x1xf32> to vector<8x32xf32>
    %319 = arith.mulf %314, %318 : vector<8x32xf32>
    %320 = vector.broadcast %9 : vector<1x32xf32> to vector<8x32xf32>
    %321 = arith.mulf %319, %320 : vector<8x32xf32>
    %322 = vector.broadcast %10 : vector<1x32xf32> to vector<8x32xf32>
    %323 = arith.addf %321, %322 : vector<8x32xf32>
    %324 = arith.truncf %323 : vector<8x32xf32> to vector<8x32xbf16>
    %325 = vector.shape_cast %324 : vector<8x32xbf16> to vector<1x8x32xbf16>
    %326 = vector.shape_cast %325 : vector<1x8x32xbf16> to vector<1x8x32xbf16>
    %327 = vector.broadcast %326 : vector<1x8x32xbf16> to vector<4x8x32xbf16>
    "tpu.trace_start"() <{level = 10 : i32, message = "hsd,hdf->hsf"}> : () -> ()
    %cst_107 = arith.constant dense<0.000000e+00> : vector<4x8x40xf32>
    %328 = tpu.matmul %327, %3, %cst_107 {dimension_numbers = #tpu.dot_dimension_numbers<[2], [1], [1], [2], [0, 0, 0, 1, 1, 2], [0], [0]>} : vector<4x8x32xbf16>, vector<4x32x40xbf16>, vector<4x8x40xf32> -> vector<4x8x40xf32>
    "tpu.trace_stop"() : () -> ()
    %329 = vector.broadcast %4 : vector<4x1x40xf32> to vector<4x8x40xf32>
    %330 = arith.addf %328, %329 : vector<4x8x40xf32>
    %331 = vector.extract_strided_slice %330 {offsets = [0, 0, 0], sizes = [4, 8, 8], strides = [1, 1, 1]} : vector<4x8x40xf32> to vector<4x8x8xf32>
    %332 = vector.extract_strided_slice %330 {offsets = [0, 0, 8], sizes = [4, 8, 8], strides = [1, 1, 1]} : vector<4x8x40xf32> to vector<4x8x8xf32>
    %333 = vector.extract_strided_slice %330 {offsets = [0, 0, 16], sizes = [4, 8, 8], strides = [1, 1, 1]} : vector<4x8x40xf32> to vector<4x8x8xf32>
    %334 = vector.extract_strided_slice %330 {offsets = [0, 0, 24], sizes = [4, 8, 8], strides = [1, 1, 1]} : vector<4x8x40xf32> to vector<4x8x8xf32>
    %335 = vector.extract_strided_slice %330 {offsets = [0, 0, 32], sizes = [4, 8, 8], strides = [1, 1, 1]} : vector<4x8x40xf32> to vector<4x8x8xf32>
    %336 = arith.mulf %331, %1 : vector<4x8x8xf32>
    %337 = arith.mulf %332, %2 : vector<4x8x8xf32>
    %338 = arith.addf %336, %337 : vector<4x8x8xf32>
    %339 = arith.mulf %333, %1 : vector<4x8x8xf32>
    %340 = arith.mulf %334, %2 : vector<4x8x8xf32>
    %341 = arith.addf %339, %340 : vector<4x8x8xf32>
    %342 = arith.truncf %338 : vector<4x8x8xf32> to vector<4x8x8xbf16>
    %343 = arith.truncf %341 : vector<4x8x8xf32> to vector<4x8x8xbf16>
    "tpu.trace_start"() <{level = 10 : i32, message = "hqd,hkd->hqk"}> : () -> ()
    %cst_108 = arith.constant dense<0.000000e+00> : vector<4x8x8xf32>
    %344 = tpu.matmul %342, %343, %cst_108 {dimension_numbers = #tpu.dot_dimension_numbers<[2], [2], [1], [1], [0, 0, 0, 1, 1, 1], [0], [0]>} : vector<4x8x8xbf16>, vector<4x8x8xbf16>, vector<4x8x8xf32> -> vector<4x8x8xf32>
    "tpu.trace_stop"() : () -> ()
    %345 = arith.addf %344, %225 : vector<4x8x8xf32>
    %cst_109 = arith.constant dense<0xFF800000> : vector<4x8xf32>
    %346 = vector.multi_reduction <maximumf>, %345, %cst_109 [2] : vector<4x8x8xf32> to vector<4x8xf32>
    %347 = vector.shape_cast %346 : vector<4x8xf32> to vector<4x8x1xf32>
    %348 = vector.broadcast %347 : vector<4x8x1xf32> to vector<4x8x8xf32>
    %349 = arith.subf %345, %348 : vector<4x8x8xf32>
    %350 = math.exp %349 : vector<4x8x8xf32>
    %cst_110 = arith.constant dense<0.000000e+00> : vector<4x8xf32>
    %351 = vector.multi_reduction <add>, %350, %cst_110 [2] : vector<4x8x8xf32> to vector<4x8xf32>
    %352 = vector.shape_cast %351 : vector<4x8xf32> to vector<4x8x1xf32>
    %353 = tpu.reciprocal %352 {approx = true} : vector<4x8x1xf32> -> vector<4x8x1xf32>
    %354 = vector.broadcast %353 : vector<4x8x1xf32> to vector<4x8x8xf32>
    %355 = arith.mulf %350, %354 : vector<4x8x8xf32>
    %356 = arith.truncf %355 : vector<4x8x8xf32> to vector<4x8x8xbf16>
    %357 = arith.truncf %335 : vector<4x8x8xf32> to vector<4x8x8xbf16>
    "tpu.trace_start"() <{level = 10 : i32, message = "hqk,hkd->hqd"}> : () -> ()
    %cst_111 = arith.constant dense<0.000000e+00> : vector<4x8x8xf32>
    %358 = tpu.matmul %356, %357, %cst_111 {dimension_numbers = #tpu.dot_dimension_numbers<[2], [1], [1], [2], [0, 0, 0, 1, 1, 2], [0], [0]>} : vector<4x8x8xbf16>, vector<4x8x8xbf16>, vector<4x8x8xf32> -> vector<4x8x8xf32>
    "tpu.trace_stop"() : () -> ()
    %359 = arith.truncf %358 : vector<4x8x8xf32> to vector<4x8x8xbf16>
    "tpu.trace_start"() <{level = 10 : i32, message = "hqd,hde->hqe"}> : () -> ()
    %cst_112 = arith.constant dense<0.000000e+00> : vector<4x8x32xf32>
    %360 = tpu.matmul %359, %5, %cst_112 {dimension_numbers = #tpu.dot_dimension_numbers<[2], [1], [1], [2], [0, 0, 0, 1, 1, 2], [0], [0]>} : vector<4x8x8xbf16>, vector<4x8x32xbf16>, vector<4x8x32xf32> -> vector<4x8x32xf32>
    "tpu.trace_stop"() : () -> ()
    %cst_113 = arith.constant dense<0.000000e+00> : vector<8x32xf32>
    %361 = vector.multi_reduction <add>, %360, %cst_113 [0] : vector<4x8x32xf32> to vector<8x32xf32>
    %362 = vector.broadcast %6 : vector<1x32xf32> to vector<8x32xf32>
    %363 = arith.addf %361, %362 : vector<8x32xf32>
    %364 = arith.addf %323, %363 : vector<8x32xf32>
    %cst_114 = arith.constant dense<0.000000e+00> : vector<8xf32>
    %365 = vector.multi_reduction <add>, %364, %cst_114 [1] : vector<8x32xf32> to vector<8xf32>
    %366 = vector.shape_cast %365 : vector<8xf32> to vector<8x1xf32>
    %cst_115 = arith.constant 3.200000e+01 : f32
    %367 = vector.broadcast %cst_115 : f32 to vector<8x1xf32>
    %368 = arith.divf %366, %367 : vector<8x1xf32>
    %369 = vector.broadcast %368 : vector<8x1xf32> to vector<8x32xf32>
    %370 = arith.subf %364, %369 : vector<8x32xf32>
    %371 = arith.mulf %370, %370 : vector<8x32xf32>
    %cst_116 = arith.constant dense<0.000000e+00> : vector<8xf32>
    %372 = vector.multi_reduction <add>, %371, %cst_116 [1] : vector<8x32xf32> to vector<8xf32>
    %373 = vector.shape_cast %372 : vector<8xf32> to vector<8x1xf32>
    %cst_117 = arith.constant 3.200000e+01 : f32
    %374 = vector.broadcast %cst_117 : f32 to vector<8x1xf32>
    %375 = arith.divf %373, %374 : vector<8x1xf32>
    %376 = vector.broadcast %368 : vector<8x1xf32> to vector<8x32xf32>
    %377 = arith.subf %364, %376 : vector<8x32xf32>
    %cst_118 = arith.constant 9.99999974E-6 : f32
    %378 = vector.broadcast %cst_118 : f32 to vector<8x1xf32>
    %379 = arith.addf %375, %378 : vector<8x1xf32>
    %380 = math.rsqrt %379 : vector<8x1xf32>
    %381 = vector.broadcast %380 : vector<8x1xf32> to vector<8x32xf32>
    %382 = arith.mulf %377, %381 : vector<8x32xf32>
    %383 = vector.broadcast %7 : vector<1x32xf32> to vector<8x32xf32>
    %384 = arith.mulf %382, %383 : vector<8x32xf32>
    %385 = vector.broadcast %8 : vector<1x32xf32> to vector<8x32xf32>
    %386 = arith.addf %384, %385 : vector<8x32xf32>
    %387 = arith.truncf %386 : vector<8x32xf32> to vector<8x32xbf16>
    %cst_119 = arith.constant dense<0.000000e+00> : vector<8x64xf32>
    %388 = tpu.matmul %387, %11, %cst_119 {dimension_numbers = #tpu.dot_dimension_numbers<[1], [0], [0], [1], [0, 0, 1, 1], [], []>} : vector<8x32xbf16>, vector<32x64xbf16>, vector<8x64xf32> -> vector<8x64xf32>
    %389 = vector.broadcast %12 : vector<1x64xf32> to vector<8x64xf32>
    %390 = arith.addf %388, %389 : vector<8x64xf32>
    %cst_120 = arith.constant 0.000000e+00 : f32
    %391 = vector.broadcast %cst_120 : f32 to vector<8x64xf32>
    %392 = arith.maximumf %390, %391 : vector<8x64xf32>
    %393 = arith.truncf %392 : vector<8x64xf32> to vector<8x64xbf16>
    %cst_121 = arith.constant dense<0.000000e+00> : vector<8x32xf32>
    %394 = tpu.matmul %393, %13, %cst_121 {dimension_numbers = #tpu.dot_dimension_numbers<[1], [0], [0], [1], [0, 0, 1, 1], [], []>} : vector<8x64xbf16>, vector<64x32xbf16>, vector<8x32xf32> -> vector<8x32xf32>
    %395 = vector.broadcast %14 : vector<1x32xf32> to vector<8x32xf32>
    %396 = arith.addf %394, %395 : vector<8x32xf32>
    %397 = arith.addf %386, %396 : vector<8x32xf32>
    %cst_122 = arith.constant dense<0.000000e+00> : vector<8xf32>
    %398 = vector.multi_reduction <add>, %397, %cst_122 [1] : vector<8x32xf32> to vector<8xf32>
    %399 = vector.shape_cast %398 : vector<8xf32> to vector<8x1xf32>
    %cst_123 = arith.constant 3.200000e+01 : f32
    %400 = vector.broadcast %cst_123 : f32 to vector<8x1xf32>
    %401 = arith.divf %399, %400 : vector<8x1xf32>
    %402 = vector.broadcast %401 : vector<8x1xf32> to vector<8x32xf32>
    %403 = arith.subf %397, %402 : vector<8x32xf32>
    %404 = arith.mulf %403, %403 : vector<8x32xf32>
    %cst_124 = arith.constant dense<0.000000e+00> : vector<8xf32>
    %405 = vector.multi_reduction <add>, %404, %cst_124 [1] : vector<8x32xf32> to vector<8xf32>
    %406 = vector.shape_cast %405 : vector<8xf32> to vector<8x1xf32>
    %cst_125 = arith.constant 3.200000e+01 : f32
    %407 = vector.broadcast %cst_125 : f32 to vector<8x1xf32>
    %408 = arith.divf %406, %407 : vector<8x1xf32>
    %409 = vector.broadcast %401 : vector<8x1xf32> to vector<8x32xf32>
    %410 = arith.subf %397, %409 : vector<8x32xf32>
    %cst_126 = arith.constant 9.99999974E-6 : f32
    %411 = vector.broadcast %cst_126 : f32 to vector<8x1xf32>
    %412 = arith.addf %408, %411 : vector<8x1xf32>
    %413 = math.rsqrt %412 : vector<8x1xf32>
    %414 = vector.broadcast %413 : vector<8x1xf32> to vector<8x32xf32>
    %415 = arith.mulf %410, %414 : vector<8x32xf32>
    %416 = vector.broadcast %9 : vector<1x32xf32> to vector<8x32xf32>
    %417 = arith.mulf %415, %416 : vector<8x32xf32>
    %418 = vector.broadcast %10 : vector<1x32xf32> to vector<8x32xf32>
    %419 = arith.addf %417, %418 : vector<8x32xf32>
    %c1_127 = arith.constant 1 : index
    %c0_128 = arith.constant 0 : index
    %c0_129 = arith.constant 0 : index
    %420 = vector.load %arg18[%c1_127, %c0_128, %c0_129] : memref<2x8x32xf32, #tpu.memory_space<vmem>>, vector<1x8x32xf32>
    %421 = vector.shape_cast %420 : vector<1x8x32xf32> to vector<8x32xf32>
    %422 = vector.shape_cast %419 : vector<8x32xf32> to vector<1x8x32xf32>
    tpu.vector_store %arg18[%c1_127, %c0_128, %c0_129], %422 {strides = array<i32>} : memref<2x8x32xf32, #tpu.memory_space<vmem>>, vector<1x8x32xf32>,
    return
  }
  func.func @transform_0(%arg0: i32) -> (i32, i32, i32) {
    %c0_i32 = arith.constant 0 : i32
    %c0_i32_0 = arith.constant 0 : i32
    %c0_i32_1 = arith.constant 0 : i32
    return %arg0, %c0_i32, %c0_i32_0 : i32, i32, i32
  }
  func.func @transform_1(%arg0: i32) -> (i32, i32, i32) {
    %c0_i32 = arith.constant 0 : i32
    %c0_i32_0 = arith.constant 0 : i32
    %c0_i32_1 = arith.constant 0 : i32
    return %arg0, %c0_i32, %c0_i32_0 : i32, i32, i32
  }
  func.func @transform_2(%arg0: i32) -> (i32, i32) {
    %c0_i32 = arith.constant 0 : i32
    %c0_i32_0 = arith.constant 0 : i32
    %c0_i32_1 = arith.constant 0 : i32
    return %c0_i32, %c0_i32_0 : i32, i32
  }
  func.func @transform_3(%arg0: i32) -> (i32, i32, i32) {
    %c0_i32 = arith.constant 0 : i32
    %c0_i32_0 = arith.constant 0 : i32
    %c0_i32_1 = arith.constant 0 : i32
    %c0_i32_2 = arith.constant 0 : i32
    return %c0_i32, %c0_i32_0, %c0_i32_1 : i32, i32, i32
  }
  func.func @transform_4(%arg0: i32) -> (i32, i32, i32) {
    %c0_i32 = arith.constant 0 : i32
    %c0_i32_0 = arith.constant 0 : i32
    %c0_i32_1 = arith.constant 0 : i32
    %c0_i32_2 = arith.constant 0 : i32
    return %c0_i32, %c0_i32_0, %c0_i32_1 : i32, i32, i32
  }
  func.func @transform_5(%arg0: i32) -> (i32, i32, i32) {
    %c0_i32 = arith.constant 0 : i32
    %c0_i32_0 = arith.constant 0 : i32
    %c0_i32_1 = arith.constant 0 : i32
    %c0_i32_2 = arith.constant 0 : i32
    return %c0_i32, %c0_i32_0, %c0_i32_1 : i32, i32, i32
  }
  func.func @transform_6(%arg0: i32) -> (i32, i32, i32) {
    %c0_i32 = arith.constant 0 : i32
    %c0_i32_0 = arith.constant 0 : i32
    %c0_i32_1 = arith.constant 0 : i32
    %c0_i32_2 = arith.constant 0 : i32
    return %c0_i32, %c0_i32_0, %c0_i32_1 : i32, i32, i32
  }
  func.func @transform_7(%arg0: i32) -> (i32, i32, i32) {
    %c0_i32 = arith.constant 0 : i32
    %c0_i32_0 = arith.constant 0 : i32
    %c0_i32_1 = arith.constant 0 : i32
    %c0_i32_2 = arith.constant 0 : i32
    return %c0_i32, %c0_i32_0, %c0_i32_1 : i32, i32, i32
  }
  func.func @transform_8(%arg0: i32) -> (i32, i32) {
    %c0_i32 = arith.constant 0 : i32
    %c0_i32_0 = arith.constant 0 : i32
    %c0_i32_1 = arith.constant 0 : i32
    return %c0_i32, %c0_i32_0 : i32, i32
  }
  func.func @transform_9(%arg0: i32) -> (i32, i32) {
    %c0_i32 = arith.constant 0 : i32
    %c0_i32_0 = arith.constant 0 : i32
    %c0_i32_1 = arith.constant 0 : i32
    return %c0_i32, %c0_i32_0 : i32, i32
  }
  func.func @transform_10(%arg0: i32) -> (i32, i32) {
    %c0_i32 = arith.constant 0 : i32
    %c0_i32_0 = arith.constant 0 : i32
    %c0_i32_1 = arith.constant 0 : i32
    return %c0_i32, %c0_i32_0 : i32, i32
  }
  func.func @transform_11(%arg0: i32) -> (i32, i32) {
    %c0_i32 = arith.constant 0 : i32
    %c0_i32_0 = arith.constant 0 : i32
    %c0_i32_1 = arith.constant 0 : i32
    return %c0_i32, %c0_i32_0 : i32, i32
  }
  func.func @transform_12(%arg0: i32) -> (i32, i32) {
    %c0_i32 = arith.constant 0 : i32
    %c0_i32_0 = arith.constant 0 : i32
    %c0_i32_1 = arith.constant 0 : i32
    return %c0_i32, %c0_i32_0 : i32, i32
  }
  func.func @transform_13(%arg0: i32) -> (i32, i32) {
    %c0_i32 = arith.constant 0 : i32
    %c0_i32_0 = arith.constant 0 : i32
    %c0_i32_1 = arith.constant 0 : i32
    return %c0_i32, %c0_i32_0 : i32, i32
  }
  func.func @transform_14(%arg0: i32) -> (i32, i32) {
    %c0_i32 = arith.constant 0 : i32
    %c0_i32_0 = arith.constant 0 : i32
    %c0_i32_1 = arith.constant 0 : i32
    return %c0_i32, %c0_i32_0 : i32, i32
  }
  func.func @transform_15(%arg0: i32) -> (i32, i32) {
    %c0_i32 = arith.constant 0 : i32
    %c0_i32_0 = arith.constant 0 : i32
    %c0_i32_1 = arith.constant 0 : i32
    return %c0_i32, %c0_i32_0 : i32, i32
  }
  func.func @transform_16(%arg0: i32) -> (i32, i32) {
    %c0_i32 = arith.constant 0 : i32
    %c0_i32_0 = arith.constant 0 : i32
    %c0_i32_1 = arith.constant 0 : i32
    return %c0_i32, %c0_i32_0 : i32, i32
  }
  func.func @transform_17(%arg0: i32) -> (i32, i32, i32) {
    %c0_i32 = arith.constant 0 : i32
    %c0_i32_0 = arith.constant 0 : i32
    %c0_i32_1 = arith.constant 0 : i32
    return %arg0, %c0_i32, %c0_i32_0 : i32, i32, i32
  }
}

</mosaic_0001>

<llo_original>
// kernel: tpu_custom_call.1
$region0: #{tpu_custom_call.1}
  #allocation0 [shape = 'u32[]', space=smem, size = 0x4, offset = 0x4, fixed_abs, tag = 'smem constant byte address 0x4 - core index']
  #allocation1 [shape = 'u32[144,128]{1,0:T(1,128)}', space=vmem, size = 0x12000, scoped, tag = 'internal scratch']
  %s0 = inlined_call_operand.vmem [shape: f32[2,8,32], index: 0, kind: input, shape index: {}]
  %s1 = inlined_call_operand.hbm [shape: f32[2,1,8], index: 1, kind: input, shape index: {}]
  %s2 = inlined_call_operand.hbm [shape: f32[8,8], index: 2, kind: input, shape index: {}]
  %s3 = inlined_call_operand.vmem [shape: f32[4,8,8], index: 3, kind: input, shape index: {}]
  %s4 = inlined_call_operand.hbm [shape: f32[4,8,8], index: 4, kind: input, shape index: {}]
  %s5 = inlined_call_operand.hbm [shape: bf16[4,32,40], index: 5, kind: input, shape index: {}]
  %s6 = inlined_call_operand.vmem [shape: f32[4,1,40], index: 6, kind: input, shape index: {}]
  %s7 = inlined_call_operand.hbm [shape: bf16[4,8,32], index: 7, kind: input, shape index: {}]
  %s8 = inlined_call_operand.vmem [shape: f32[1,32], index: 8, kind: input, shape index: {}]
  %s9 = inlined_call_operand.vmem [shape: f32[1,32], index: 9, kind: input, shape index: {}]
  %s10 = inlined_call_operand.vmem [shape: f32[1,32], index: 10, kind: input, shape index: {}]
  %s11 = inlined_call_operand.vmem [shape: f32[1,32], index: 11, kind: input, shape index: {}]
  %s12 = inlined_call_operand.vmem [shape: f32[1,32], index: 12, kind: input, shape index: {}]
  %s13 = inlined_call_operand.hbm [shape: bf16[32,64], index: 13, kind: input, shape index: {}]
  %s14 = inlined_call_operand.vmem [shape: f32[1,64], index: 14, kind: input, shape index: {}]
  %s15 = inlined_call_operand.vmem [shape: bf16[64,32], index: 15, kind: input, shape index: {}]
  %s16 = inlined_call_operand.vmem [shape: f32[1,32], index: 16, kind: input, shape index: {}]
  %s17 = inlined_call_operand.hbm [shape: f32[2,8,32], index: 17, kind: output, shape index: {}]
  %s18 = sld [smem:[#allocation0]]
  $region102: #{tpu_custom_call.1} parent=0
    _
  %s20 = ssub.s32 1, %s18
  %s21 = scalar_select 0, %s20, %s18
  $region1: #{tpu_custom_call.1} parent=0
    #allocation2 [shape = 'u8[1024]{0}', space=vmem, size = 0x400, scoped, tag = 'input window, operand 1, single buffered']
    #allocation3 [shape = 's32[1]{0}', space=sflag, size = 0x4, scoped, tag = 'scoped memory for tpu_custom_call.1']
    #allocation4 [shape = 's32[1]{0}', space=sflag, size = 0x4, scoped, tag = 'scoped memory for tpu_custom_call.1']
    #allocation5 [shape = 'u8[4096]{0}', space=vmem, size = 0x1000, scoped, tag = 'input window, operand 2, single buffered']
    #allocation6 [shape = 's32[1]{0}', space=sflag, size = 0x4, scoped, tag = 'scoped memory for tpu_custom_call.1']
    #allocation7 [shape = 'u8[16384]{0}', space=vmem, size = 0x4000, scoped, tag = 'input window, operand 4, single buffered']
    #allocation8 [shape = 'u8[32768]{0}', space=vmem, size = 0x8000, scoped, tag = 'input window, operand 5, single buffered']
    #allocation9 [shape = 's32[1]{0}', space=sflag, size = 0x4, scoped, tag = 'scoped memory for tpu_custom_call.1']
    #allocation10 [shape = 'u8[8192]{0}', space=vmem, size = 0x2000, scoped, tag = 'input window, operand 7, single buffered']
    #allocation11 [shape = 'u8[8192]{0}', space=vmem, size = 0x2000, scoped, tag = 'input window, operand 13, single buffered']
    #allocation12 [shape = 's32[1]{0}', space=sflag, size = 0x4, scoped, tag = 'scoped memory for tpu_custom_call.1']
    #allocation13 [shape = 'u8[8192]{0}', space=vmem, size = 0x2000, scoped, tag = 'output window, operand 0, single buffered']
    %22 = vsyncpa [#allocation3], 0
    %23 = vsyncpa [#allocation6], 0
    %24 = vsyncpa [#allocation9], 0
    %25 = vsyncpa [#allocation12], 0
    %26 = vsyncpa [#allocation4], 0
    // Predicated region
    $region2: #{tpu_custom_call.1} parent=1 // pred_check
      _
    $region3: #{tpu_custom_call.1} parent=1 // pred_check_branch
      %28 = sbr.rel (0) target = $region5
    $region4: #{tpu_custom_call.1} parent=1 // pred_region
      _
    $region5: #{tpu_custom_call.1} parent=1 // pred_fallthru
      _
    // Predicated region
    $region6: #{tpu_custom_call.1} parent=1 // pred_check
      _
    $region7: #{tpu_custom_call.1} parent=1 // pred_check_branch
      %30 = sbr.rel (0) target = $region9
    $region8: #{tpu_custom_call.1} parent=1 // pred_region
      %s32 = ssub.s32 32, 32
      %33 = vsyncadd [#allocation3], %s32
      %s34 = sshll.u32 [#allocation2], 4
      %s35 = int_to_ptr.vmem [resolvable:$true] %s34
      %40 = dma.hbm_to_vmem [thread:$0]  %s1, 32, %s35, [#allocation3], 16, 16, 1
    $region9: #{tpu_custom_call.1} parent=1 // pred_fallthru
      _
    // Predicated region
    $region10: #{tpu_custom_call.1} parent=1 // pred_check
      _
    $region11: #{tpu_custom_call.1} parent=1 // pred_check_branch
      %42 = sbr.rel (0) target = $region13
    $region12: #{tpu_custom_call.1} parent=1 // pred_region
      %s44 = ssub.s32 128, 128
      %45 = vsyncadd [#allocation6], %s44
      %s47 = sshll.u32 [#allocation5], 4
      %s48 = int_to_ptr.vmem [resolvable:$true] %s47
      %50 = dma.hbm_to_vmem [thread:$0]  %s2, 128, %s48, [#allocation6]
    $region13: #{tpu_custom_call.1} parent=1 // pred_fallthru
      _
    // Predicated region
    $region14: #{tpu_custom_call.1} parent=1 // pred_check
      _
    $region15: #{tpu_custom_call.1} parent=1 // pred_check_branch
      %52 = sbr.rel (0) target = $region17
    $region16: #{tpu_custom_call.1} parent=1 // pred_region
      _
    $region17: #{tpu_custom_call.1} parent=1 // pred_fallthru
      _
    // Predicated region
    $region18: #{tpu_custom_call.1} parent=1 // pred_check
      _
    $region19: #{tpu_custom_call.1} parent=1 // pred_check_branch
      %54 = sbr.rel (0) target = $region21
    $region20: #{tpu_custom_call.1} parent=1 // pred_region
      %s56 = ssub.s32 512, 512
      %57 = vsyncadd [#allocation6], %s56
      %s58 = sshll.u32 [#allocation7], 4
      %s59 = int_to_ptr.vmem [resolvable:$true] %s58
      %64 = dma.hbm_to_vmem [thread:$0]  %s4, 512, %s59, [#allocation6], 128, 128, 8
    $region21: #{tpu_custom_call.1} parent=1 // pred_fallthru
      _
    // Predicated region
    $region22: #{tpu_custom_call.1} parent=1 // pred_check
      _
    $region23: #{tpu_custom_call.1} parent=1 // pred_check_branch
      %66 = sbr.rel (0) target = $region25
    $region24: #{tpu_custom_call.1} parent=1 // pred_region
      %s68 = ssub.s32 1024, 1024
      %69 = vsyncadd [#allocation9], %s68
      %s70 = sshll.u32 [#allocation8], 4
      %s71 = int_to_ptr.vmem [resolvable:$true] %s70
      %76 = dma.hbm_to_vmem [thread:$0]  %s5, 1024, %s71, [#allocation9], 64, 64, 4
    $region25: #{tpu_custom_call.1} parent=1 // pred_fallthru
      _
    // Predicated region
    $region26: #{tpu_custom_call.1} parent=1 // pred_check
      _
    $region27: #{tpu_custom_call.1} parent=1 // pred_check_branch
      %78 = sbr.rel (0) target = $region29
    $region28: #{tpu_custom_call.1} parent=1 // pred_region
      _
    $region29: #{tpu_custom_call.1} parent=1 // pred_fallthru
      _
    // Predicated region
    $region30: #{tpu_custom_call.1} parent=1 // pred_check
      _
    $region31: #{tpu_custom_call.1} parent=1 // pred_check_branch
      %80 = sbr.rel (0) target = $region33
    $region32: #{tpu_custom_call.1} parent=1 // pred_region
      %s82 = ssub.s32 256, 256
      %83 = vsyncadd [#allocation9], %s82
      %s84 = sshll.u32 [#allocation10], 4
      %s85 = int_to_ptr.vmem [resolvable:$true] %s84
      %90 = dma.hbm_to_vmem [thread:$0]  %s7, 256, %s85, [#allocation9], 64, 64, 4
    $region33: #{tpu_custom_call.1} parent=1 // pred_fallthru
      _
    // Predicated region
    $region34: #{tpu_custom_call.1} parent=1 // pred_check
      _
    $region35: #{tpu_custom_call.1} parent=1 // pred_check_branch
      %92 = sbr.rel (0) target = $region37
    $region36: #{tpu_custom_call.1} parent=1 // pred_region
      _
    $region37: #{tpu_custom_call.1} parent=1 // pred_fallthru
      _
    // Predicated region
    $region38: #{tpu_custom_call.1} parent=1 // pred_check
      _
    $region39: #{tpu_custom_call.1} parent=1 // pred_check_branch
      %94 = sbr.rel (0) target = $region41
    $region40: #{tpu_custom_call.1} parent=1 // pred_region
      _
    $region41: #{tpu_custom_call.1} parent=1 // pred_fallthru
      _
    // Predicated region
    $region42: #{tpu_custom_call.1} parent=1 // pred_check
      _
    $region43: #{tpu_custom_call.1} parent=1 // pred_check_branch
      %96 = sbr.rel (0) target = $region45
    $region44: #{tpu_custom_call.1} parent=1 // pred_region
      _
    $region45: #{tpu_custom_call.1} parent=1 // pred_fallthru
      _
    // Predicated region
    $region46: #{tpu_custom_call.1} parent=1 // pred_check
      _
    $region47: #{tpu_custom_call.1} parent=1 // pred_check_branch
      %98 = sbr.rel (0) target = $region49
    $region48: #{tpu_custom_call.1} parent=1 // pred_region
      _
    $region49: #{tpu_custom_call.1} parent=1 // pred_fallthru
      _
    // Predicated region
    $region50: #{tpu_custom_call.1} parent=1 // pred_check
      _
    $region51: #{tpu_custom_call.1} parent=1 // pred_check_branch
      %100 = sbr.rel (0) target = $region53
    $region52: #{tpu_custom_call.1} parent=1 // pred_region
      _
    $region53: #{tpu_custom_call.1} parent=1 // pred_fallthru
      _
    // Predicated region
    $region54: #{tpu_custom_call.1} parent=1 // pred_check
      _
    $region55: #{tpu_custom_call.1} parent=1 // pred_check_branch
      %102 = sbr.rel (0) target = $region57
    $region56: #{tpu_custom_call.1} parent=1 // pred_region
      %s104 = ssub.s32 256, 256
      %105 = vsyncadd [#allocation12], %s104
      %s106 = sshll.u32 [#allocation11], 4
      %s107 = int_to_ptr.vmem [resolvable:$true] %s106
      %112 = dma.hbm_to_vmem [thread:$0]  %s13, 256, %s107, [#allocation12], 64, 64, 4
    $region57: #{tpu_custom_call.1} parent=1 // pred_fallthru
      _
    // Predicated region
    $region58: #{tpu_custom_call.1} parent=1 // pred_check
      _
    $region59: #{tpu_custom_call.1} parent=1 // pred_check_branch
      %114 = sbr.rel (0) target = $region61
    $region60: #{tpu_custom_call.1} parent=1 // pred_region
      _
    $region61: #{tpu_custom_call.1} parent=1 // pred_fallthru
      _
    // Predicated region
    $region62: #{tpu_custom_call.1} parent=1 // pred_check
      _
    $region63: #{tpu_custom_call.1} parent=1 // pred_check_branch
      %116 = sbr.rel (0) target = $region65
    $region64: #{tpu_custom_call.1} parent=1 // pred_region
      _
    $region65: #{tpu_custom_call.1} parent=1 // pred_fallthru
      _
    // Predicated region
    $region66: #{tpu_custom_call.1} parent=1 // pred_check
      _
    $region67: #{tpu_custom_call.1} parent=1 // pred_check_branch
      %118 = sbr.rel (0) target = $region69
    $region68: #{tpu_custom_call.1} parent=1 // pred_region
      _
    $region69: #{tpu_custom_call.1} parent=1 // pred_fallthru
      _
    // Predicated region
    $region70: #{tpu_custom_call.1} parent=1 // pred_check
      _
    $region71: #{tpu_custom_call.1} parent=1 // pred_check_branch
      %120 = sbr.rel (0) target = $region73
    $region72: #{tpu_custom_call.1} parent=1 // pred_region
      %121 = dma.done [#allocation3], 32
    $region73: #{tpu_custom_call.1} parent=1 // pred_fallthru
      _
    // Predicated region
    $region74: #{tpu_custom_call.1} parent=1 // pred_check
      _
    $region75: #{tpu_custom_call.1} parent=1 // pred_check_branch
      %123 = sbr.rel (0) target = $region77
    $region76: #{tpu_custom_call.1} parent=1 // pred_region
      %124 = dma.done [#allocation6], 128
    $region77: #{tpu_custom_call.1} parent=1 // pred_fallthru
      _
    // Predicated region
    $region78: #{tpu_custom_call.1} parent=1 // pred_check
      _
    $region79: #{tpu_custom_call.1} parent=1 // pred_check_branch
      %126 = sbr.rel (0) target = $region81
    $region80: #{tpu_custom_call.1} parent=1 // pred_region
      %127 = dma.done [#allocation6], 512
    $region81: #{tpu_custom_call.1} parent=1 // pred_fallthru
      _
    // Predicated region
    $region82: #{tpu_custom_call.1} parent=1 // pred_check
      _
    $region83: #{tpu_custom_call.1} parent=1 // pred_check_branch
      %129 = sbr.rel (0) target = $region85
    $region84: #{tpu_custom_call.1} parent=1 // pred_region
      %130 = dma.done [#allocation9], 1024
    $region85: #{tpu_custom_call.1} parent=1 // pred_fallthru
      _
    // Predicated region
    $region86: #{tpu_custom_call.1} parent=1 // pred_check
      _
    $region87: #{tpu_custom_call.1} parent=1 // pred_check_branch
      %132 = sbr.rel (0) target = $region89
    $region88: #{tpu_custom_call.1} parent=1 // pred_region
      %133 = dma.done [#allocation9], 256
    $region89: #{tpu_custom_call.1} parent=1 // pred_fallthru
      _
    // Predicated region
    $region90: #{tpu_custom_call.1} parent=1 // pred_check
      _
    $region91: #{tpu_custom_call.1} parent=1 // pred_check_branch
      %135 = sbr.rel (0) target = $region93
    $region92: #{tpu_custom_call.1} parent=1 // pred_region
      %136 = dma.done [#allocation12], 256
    $region93: #{tpu_custom_call.1} parent=1 // pred_fallthru
      _
    %v138 = vld [vmem:[#allocation5] sm:$0xff]
    %v139 = vld [vmem:[%s3] sm:$0xff]
    %v140 = vld [vmem:[%s3 + $0x8] sm:$0xff]
    %v141 = vld [vmem:[%s3 + $0x10] sm:$0xff]
    %v142 = vld [vmem:[%s3 + $0x18] sm:$0xff]
    %v143 = vld [vmem:[#allocation7] sm:$0xff]
    %v144 = vld [vmem:[#allocation7 + $0x8] sm:$0xff]
    %v145 = vld [vmem:[#allocation7 + $0x10] sm:$0xff]
    %v146 = vld [vmem:[#allocation7 + $0x18] sm:$0xff]
    %v147 = vld [vmem:[#allocation8] sm:$0xf]
    %v148 = vld [vmem:[#allocation8 + $0x4] sm:$0xf]
    %v149 = vld [vmem:[#allocation8 + $0x8] sm:$0xf]
    %v150 = vld [vmem:[#allocation8 + $0xc] sm:$0xf]
    %v151 = vld [vmem:[#allocation8 + $0x10] sm:$0xf]
    %v152 = vld [vmem:[#allocation8 + $0x14] sm:$0xf]
    %v153 = vld [vmem:[#allocation8 + $0x18] sm:$0xf]
    %v154 = vld [vmem:[#allocation8 + $0x1c] sm:$0xf]
    %v155 = vld [vmem:[#allocation8 + $0x20] sm:$0xf]
    %v156 = vld [vmem:[#allocation8 + $0x24] sm:$0xf]
    %v157 = vld [vmem:[#allocation8 + $0x28] sm:$0xf]
    %v158 = vld [vmem:[#allocation8 + $0x2c] sm:$0xf]
    %v159 = vld [vmem:[#allocation8 + $0x30] sm:$0xf]
    %v160 = vld [vmem:[#allocation8 + $0x34] sm:$0xf]
    %v161 = vld [vmem:[#allocation8 + $0x38] sm:$0xf]
    %v162 = vld [vmem:[#allocation8 + $0x3c] sm:$0xf]
    %v163 = vld [vmem:[%s6] sm:$0x1]
    %v164 = vld [vmem:[%s6 + $0x1] sm:$0x1]
    %v165 = vld [vmem:[%s6 + $0x2] sm:$0x1]
    %v166 = vld [vmem:[%s6 + $0x3] sm:$0x1]
    %v167 = vld [vmem:[#allocation10] sm:$0xf]
    %v168 = vld [vmem:[#allocation10 + $0x4] sm:$0xf]
    %v169 = vld [vmem:[#allocation10 + $0x8] sm:$0xf]
    %v170 = vld [vmem:[#allocation10 + $0xc] sm:$0xf]
    %v171 = vld [vmem:[%s8] sm:$0x1]
    %v172 = vld [vmem:[%s9] sm:$0x1]
    %v173 = vld [vmem:[%s10] sm:$0x1]
    %v174 = vld [vmem:[%s11] sm:$0x1]
    %v175 = vld [vmem:[%s12] sm:$0x1]
    %v176 = vld [vmem:[#allocation11] sm:$0xf]
    %v177 = vld [vmem:[#allocation11 + $0x4] sm:$0xf]
    %v178 = vld [vmem:[#allocation11 + $0x8] sm:$0xf]
    %v179 = vld [vmem:[#allocation11 + $0xc] sm:$0xf]
    %v180 = vld [vmem:[%s14] sm:$0x1]
    %v181 = vld [vmem:[%s15] sm:$0xf]
    %v182 = vld [vmem:[%s15 + $0x4] sm:$0xf]
    %v183 = vld [vmem:[%s15 + $0x8] sm:$0xf]
    %v184 = vld [vmem:[%s15 + $0xc] sm:$0xf]
    %v185 = vld [vmem:[%s15 + $0x10] sm:$0xf]
    %v186 = vld [vmem:[%s15 + $0x14] sm:$0xf]
    %v187 = vld [vmem:[%s15 + $0x18] sm:$0xf]
    %v188 = vld [vmem:[%s15 + $0x1c] sm:$0xf]
    %v189 = vld [vmem:[%s16] sm:$0x1]
    %v190 = vld [vmem:[#allocation2] sm:$0x1]
    %v192 = vlaneseq
    %v193 = vshrl.u32 %v192, 7
    %v194 = vsub.s32 0, %v193
    %v195 = vrot.slane %v190, %v194
    %v197 = vadd.f32 %v138, %v195
    %v198 = vld [vmem:[%s0] sm:$0xff]
    %v199 = vpack.c.bf16 %v198, %v198
    %v204 = vlaneseq
    %v205 = vshrl.u32 %v204, 7
    %v206 = vsub.s32 0, %v205
    %v207 = vrot.slane %v163, %v206
    %v208 = vlaneseq
    %v209 = vshrl.u32 %v208, 7
    %v210 = vsub.s32 0, %v209
    %v211 = vrot.slane %v164, %v210
    %v212 = vlaneseq
    %v213 = vshrl.u32 %v212, 7
    %v214 = vsub.s32 0, %v213
    %v215 = vrot.slane %v165, %v214
    %v216 = vlaneseq
    %v217 = vshrl.u32 %v216, 7
    %v218 = vsub.s32 0, %v217
    %v219 = vrot.slane %v166, %v218
    %v228 = vunpack.c.l.b16 %v147
    %v229 = vunpack.c.l.b16 %v148
    %v230 = vunpack.c.l.b16 %v149
    %v231 = vunpack.c.l.b16 %v150
    %v232 = vpack.c.b16 %v229, %v228
    %v233 = vpack.c.b16 %v231, %v230
    %vm236 = vcmask 261120
    %v238 = vsel %vm236, %v199, 0
    %240 = vmatprep.subr.bf16.mxu0 0
    %241 = vmatpush1.bf16.msra.mxu0 0
    %242 = vmatprep.subr.bf16.mxu0 0
    %243 = vmatpush1.bf16.msra.mxu0 0
    %244 = vmatprep.subr.bf16.mxu0 0
    %245 = vmatpush1.bf16.msra.mxu0 0
    %246 = vmatprep.subr.bf16.mxu0 0
    %247 = vmatpush1.bf16.msra.mxu0 0
    %248 = vmatprep.subr.bf16.mxu0 0
    %249 = vmatpush1.bf16.msra.mxu0 0
    %250 = vmatprep.subr.bf16.mxu0 0
    %251 = vmatpush1.bf16.msra.mxu0 0
    %252 = vmatprep.subr.bf16.mxu0 0
    %253 = vmatpush1.bf16.msra.mxu0 %v233
    %254 = vmatprep.subr.bf16.mxu0 0
    %255 = vmatpush1.bf16.msra.mxu0 %v232
    %256 = vmatprep.subr.bf16.mxu0 0
    %257 = vmatpush2.bf16.msra.mxu0 0
    %258 = vmatprep.subr.bf16.mxu0 0
    %259 = vmatpush2.bf16.msra.mxu0 0
    %260 = vmatprep.subr.bf16.mxu0 0
    %261 = vmatpush2.bf16.msra.mxu0 0
    %262 = vmatprep.subr.bf16.mxu0 0
    %263 = vmatpush2.bf16.msra.mxu0 0
    %264 = vmatprep.subr.bf16.mxu0 0
    %265 = vmatpush2.bf16.msra.mxu0 0
    %266 = vmatprep.subr.bf16.mxu0 0
    %267 = vmatpush2.bf16.msra.mxu0 0
    %268 = vmatprep.subr.bf16.mxu0 0
    %269 = vmatpush2.bf16.msra.mxu0 0
    %270 = vmatprep.subr.bf16.mxu0 0
    %271 = vmatpush2.bf16.msra.mxu0 0
    %272 = vmatprep.mubr.bf16.mxu0 0
    %273 = vmatmul.mubr.bf16.gmra.mxu0 %v238
    %v274 = vpop.f32.mrf.mxu0
    %v275 = vadd.f32 %v207, %v274
    %v276 = vpop.f32.mrf.mxu0
    %v277 = vpop.f32.mrf.mxu0
    %v278 = vpop.f32.mrf.mxu0
    %279 = vdwg.mxu0
    %v284 = vunpack.c.l.b16 %v151
    %v285 = vunpack.c.l.b16 %v152
    %v286 = vunpack.c.l.b16 %v153
    %v287 = vunpack.c.l.b16 %v154
    %v288 = vpack.c.b16 %v285, %v284
    %v289 = vpack.c.b16 %v287, %v286
    %292 = vmatprep.subr.bf16.mxu0 0
    %293 = vmatpush1.bf16.msra.mxu0 0
    %294 = vmatprep.subr.bf16.mxu0 0
    %295 = vmatpush1.bf16.msra.mxu0 0
    %296 = vmatprep.subr.bf16.mxu0 0
    %297 = vmatpush1.bf16.msra.mxu0 0
    %298 = vmatprep.subr.bf16.mxu0 0
    %299 = vmatpush1.bf16.msra.mxu0 0
    %300 = vmatprep.subr.bf16.mxu0 0
    %301 = vmatpush1.bf16.msra.mxu0 0
    %302 = vmatprep.subr.bf16.mxu0 0
    %303 = vmatpush1.bf16.msra.mxu0 0
    %304 = vmatprep.subr.bf16.mxu0 0
    %305 = vmatpush1.bf16.msra.mxu0 %v289
    %306 = vmatprep.subr.bf16.mxu0 0
    %307 = vmatpush1.bf16.msra.mxu0 %v288
    %308 = vmatprep.subr.bf16.mxu0 0
    %309 = vmatpush2.bf16.msra.mxu0 0
    %310 = vmatprep.subr.bf16.mxu0 0
    %311 = vmatpush2.bf16.msra.mxu0 0
    %312 = vmatprep.subr.bf16.mxu0 0
    %313 = vmatpush2.bf16.msra.mxu0 0
    %314 = vmatprep.subr.bf16.mxu0 0
    %315 = vmatpush2.bf16.msra.mxu0 0
    %316 = vmatprep.subr.bf16.mxu0 0
    %317 = vmatpush2.bf16.msra.mxu0 0
    %318 = vmatprep.subr.bf16.mxu0 0
    %319 = vmatpush2.bf16.msra.mxu0 0
    %320 = vmatprep.subr.bf16.mxu0 0
    %321 = vmatpush2.bf16.msra.mxu0 0
    %322 = vmatprep.subr.bf16.mxu0 0
    %323 = vmatpush2.bf16.msra.mxu0 0
    %324 = vmatprep.mubr.bf16.mxu0 0
    %325 = vmatmul.mubr.bf16.gmra.mxu0 %v238
    %v326 = vpop.f32.mrf.mxu0
    %v327 = vadd.f32 %v211, %v326
    %v328 = vpop.f32.mrf.mxu0
    %v329 = vpop.f32.mrf.mxu0
    %v330 = vpop.f32.mrf.mxu0
    %331 = vdwg.mxu0
    %v336 = vunpack.c.l.b16 %v155
    %v337 = vunpack.c.l.b16 %v156
    %v338 = vunpack.c.l.b16 %v157
    %v339 = vunpack.c.l.b16 %v158
    %v340 = vpack.c.b16 %v337, %v336
    %v341 = vpack.c.b16 %v339, %v338
    %344 = vmatprep.subr.bf16.mxu0 0
    %345 = vmatpush1.bf16.msra.mxu0 0
    %346 = vmatprep.subr.bf16.mxu0 0
    %347 = vmatpush1.bf16.msra.mxu0 0
    %348 = vmatprep.subr.bf16.mxu0 0
    %349 = vmatpush1.bf16.msra.mxu0 0
    %350 = vmatprep.subr.bf16.mxu0 0
    %351 = vmatpush1.bf16.msra.mxu0 0
    %352 = vmatprep.subr.bf16.mxu0 0
    %353 = vmatpush1.bf16.msra.mxu0 0
    %354 = vmatprep.subr.bf16.mxu0 0
    %355 = vmatpush1.bf16.msra.mxu0 0
    %356 = vmatprep.subr.bf16.mxu0 0
    %357 = vmatpush1.bf16.msra.mxu0 %v341
    %358 = vmatprep.subr.bf16.mxu0 0
    %359 = vmatpush1.bf16.msra.mxu0 %v340
    %360 = vmatprep.subr.bf16.mxu0 0
    %361 = vmatpush2.bf16.msra.mxu0 0
    %362 = vmatprep.subr.bf16.mxu0 0
    %363 = vmatpush2.bf16.msra.mxu0 0
    %364 = vmatprep.subr.bf16.mxu0 0
    %365 = vmatpush2.bf16.msra.mxu0 0
    %366 = vmatprep.subr.bf16.mxu0 0
    %367 = vmatpush2.bf16.msra.mxu0 0
    %368 = vmatprep.subr.bf16.mxu0 0
    %369 = vmatpush2.bf16.msra.mxu0 0
    %370 = vmatprep.subr.bf16.mxu0 0
    %371 = vmatpush2.bf16.msra.mxu0 0
    %372 = vmatprep.subr.bf16.mxu0 0
    %373 = vmatpush2.bf16.msra.mxu0 0
    %374 = vmatprep.subr.bf16.mxu0 0
    %375 = vmatpush2.bf16.msra.mxu0 0
    %376 = vmatprep.mubr.bf16.mxu0 0
    %377 = vmatmul.mubr.bf16.gmra.mxu0 %v238
    %v378 = vpop.f32.mrf.mxu0
    %v379 = vadd.f32 %v215, %v378
    %v380 = vpop.f32.mrf.mxu0
    %v381 = vpop.f32.mrf.mxu0
    %v382 = vpop.f32.mrf.mxu0
    %383 = vdwg.mxu0
    %v388 = vunpack.c.l.b16 %v159
    %v389 = vunpack.c.l.b16 %v160
    %v390 = vunpack.c.l.b16 %v161
    %v391 = vunpack.c.l.b16 %v162
    %v392 = vpack.c.b16 %v389, %v388
    %v393 = vpack.c.b16 %v391, %v390
    %396 = vmatprep.subr.bf16.mxu0 0
    %397 = vmatpush1.bf16.msra.mxu0 0
    %398 = vmatprep.subr.bf16.mxu0 0
    %399 = vmatpush1.bf16.msra.mxu0 0
    %400 = vmatprep.subr.bf16.mxu0 0
    %401 = vmatpush1.bf16.msra.mxu0 0
    %402 = vmatprep.subr.bf16.mxu0 0
    %403 = vmatpush1.bf16.msra.mxu0 0
    %404 = vmatprep.subr.bf16.mxu0 0
    %405 = vmatpush1.bf16.msra.mxu0 0
    %406 = vmatprep.subr.bf16.mxu0 0
    %407 = vmatpush1.bf16.msra.mxu0 0
    %408 = vmatprep.subr.bf16.mxu0 0
    %409 = vmatpush1.bf16.msra.mxu0 %v393
    %410 = vmatprep.subr.bf16.mxu0 0
    %411 = vmatpush1.bf16.msra.mxu0 %v392
    %412 = vmatprep.subr.bf16.mxu0 0
    %413 = vmatpush2.bf16.msra.mxu0 0
    %414 = vmatprep.subr.bf16.mxu0 0
    %415 = vmatpush2.bf16.msra.mxu0 0
    %416 = vmatprep.subr.bf16.mxu0 0
    %417 = vmatpush2.bf16.msra.mxu0 0
    %418 = vmatprep.subr.bf16.mxu0 0
    %419 = vmatpush2.bf16.msra.mxu0 0
    %420 = vmatprep.subr.bf16.mxu0 0
    %421 = vmatpush2.bf16.msra.mxu0 0
    %422 = vmatprep.subr.bf16.mxu0 0
    %423 = vmatpush2.bf16.msra.mxu0 0
    %424 = vmatprep.subr.bf16.mxu0 0
    %425 = vmatpush2.bf16.msra.mxu0 0
    %426 = vmatprep.subr.bf16.mxu0 0
    %427 = vmatpush2.bf16.msra.mxu0 0
    %428 = vmatprep.mubr.bf16.mxu0 0
    %429 = vmatmul.mubr.bf16.gmra.mxu0 %v238
    %v430 = vpop.f32.mrf.mxu0
    %v431 = vadd.f32 %v219, %v430
    %v432 = vpop.f32.mrf.mxu0
    %v433 = vpop.f32.mrf.mxu0
    %v434 = vpop.f32.mrf.mxu0
    %435 = vdwg.mxu0
    %v436 = vmul.f32 %v275, %v139
    %v437 = vmul.f32 %v327, %v140
    %v438 = vmul.f32 %v379, %v141
    %v439 = vmul.f32 %v431, %v142
    %444 = vrot.lane.b32.xlu0 %v143, 8
    %v445 = vpop.permute.xlu0 %444
    %446 = vrot.lane.b32.xlu0 %v144, 8
    %v447 = vpop.permute.xlu0 %446
    %448 = vrot.lane.b32.xlu0 %v145, 8
    %v449 = vpop.permute.xlu0 %448
    %450 = vrot.lane.b32.xlu0 %v146, 8
    %v451 = vpop.permute.xlu0 %450
    %v456 = vmul.f32 %v275, %v445
    %v457 = vmul.f32 %v327, %v447
    %v458 = vmul.f32 %v379, %v449
    %v459 = vmul.f32 %v431, %v451
    %464 = vrot.lane.b32.xlu0 %v456, 120
    %v465 = vpop.permute.xlu0 %464
    %466 = vrot.lane.b32.xlu0 %v457, 120
    %v467 = vpop.permute.xlu0 %466
    %468 = vrot.lane.b32.xlu0 %v458, 120
    %v469 = vpop.permute.xlu0 %468
    %470 = vrot.lane.b32.xlu0 %v459, 120
    %v471 = vpop.permute.xlu0 %470
    %v476 = vadd.f32 %v436, %v465
    %v477 = vadd.f32 %v437, %v467
    %v478 = vadd.f32 %v438, %v469
    %v479 = vadd.f32 %v439, %v471
    %484 = vrot.lane.b32.xlu0 %v139, 16
    %v485 = vpop.permute.xlu0 %484
    %486 = vrot.lane.b32.xlu0 %v140, 16
    %v487 = vpop.permute.xlu0 %486
    %488 = vrot.lane.b32.xlu0 %v141, 16
    %v489 = vpop.permute.xlu0 %488
    %490 = vrot.lane.b32.xlu0 %v142, 16
    %v491 = vpop.permute.xlu0 %490
    %v496 = vmul.f32 %v275, %v485
    %v497 = vmul.f32 %v327, %v487
    %v498 = vmul.f32 %v379, %v489
    %v499 = vmul.f32 %v431, %v491
    %500 = vrot.lane.b32.xlu0 %v143, 24
    %v501 = vpop.permute.xlu0 %500
    %502 = vrot.lane.b32.xlu0 %v144, 24
    %v503 = vpop.permute.xlu0 %502
    %504 = vrot.lane.b32.xlu0 %v145, 24
    %v505 = vpop.permute.xlu0 %504
    %506 = vrot.lane.b32.xlu0 %v146, 24
    %v507 = vpop.permute.xlu0 %506
    %v512 = vmul.f32 %v275, %v501
    %v513 = vmul.f32 %v327, %v503
    %v514 = vmul.f32 %v379, %v505
    %v515 = vmul.f32 %v431, %v507
    %520 = vrot.lane.b32.xlu0 %v512, 120
    %v521 = vpop.permute.xlu0 %520
    %522 = vrot.lane.b32.xlu0 %v513, 120
    %v523 = vpop.permute.xlu0 %522
    %524 = vrot.lane.b32.xlu0 %v514, 120
    %v525 = vpop.permute.xlu0 %524
    %526 = vrot.lane.b32.xlu0 %v515, 120
    %v527 = vpop.permute.xlu0 %526
    %v532 = vadd.f32 %v496, %v521
    %v533 = vadd.f32 %v497, %v523
    %v534 = vadd.f32 %v498, %v525
    %v535 = vadd.f32 %v499, %v527
    %v536 = vpack.c.bf16 %v476, %v476
    %v537 = vpack.c.bf16 %v477, %v477
    %v538 = vpack.c.bf16 %v478, %v478
    %v539 = vpack.c.bf16 %v479, %v479
    %v540 = vpack.c.bf16 %v532, %v532
    %v541 = vpack.c.bf16 %v533, %v533
    %v542 = vpack.c.bf16 %v534, %v534
    %v543 = vpack.c.bf16 %v535, %v535
    %545 = vrot.lane.b32.xlu0 %v540, 112
    %v546 = vpop.permute.xlu0 %545
    %vm547 = vcmask 64512
    %v549 = vsel %vm547, %v536, 0
    %v552 = vsel %vm547, %v546, 0
    %554 = vmatprep.subr.bf16.mxu0 0
    %555 = vmatpush1.bf16.xpose.msra.mxu0 0
    %556 = vmatprep.subr.bf16.mxu0 0
    %557 = vmatpush1.bf16.xpose.msra.mxu0 0
    %558 = vmatprep.subr.bf16.mxu0 0
    %559 = vmatpush1.bf16.xpose.msra.mxu0 0
    %560 = vmatprep.subr.bf16.mxu0 0
    %561 = vmatpush1.bf16.xpose.msra.mxu0 0
    %562 = vmatprep.subr.bf16.mxu0 0
    %563 = vmatpush1.bf16.xpose.msra.mxu0 0
    %564 = vmatprep.subr.bf16.mxu0 0
    %565 = vmatpush1.bf16.xpose.msra.mxu0 0
    %566 = vmatprep.subr.bf16.mxu0 0
    %567 = vmatpush1.bf16.xpose.msra.mxu0 0
    %568 = vmatprep.subr.bf16.mxu0 0
    %569 = vmatpush1.bf16.xpose.msra.mxu0 %v552
    %570 = vmatprep.subr.bf16.mxu0 0
    %571 = vmatpush2.bf16.xpose.msra.mxu0 0
    %572 = vmatprep.subr.bf16.mxu0 0
    %573 = vmatpush2.bf16.xpose.msra.mxu0 0
    %574 = vmatprep.subr.bf16.mxu0 0
    %575 = vmatpush2.bf16.xpose.msra.mxu0 0
    %576 = vmatprep.subr.bf16.mxu0 0
    %577 = vmatpush2.bf16.xpose.msra.mxu0 0
    %578 = vmatprep.subr.bf16.mxu0 0
    %579 = vmatpush2.bf16.xpose.msra.mxu0 0
    %580 = vmatprep.subr.bf16.mxu0 0
    %581 = vmatpush2.bf16.xpose.msra.mxu0 0
    %582 = vmatprep.subr.bf16.mxu0 0
    %583 = vmatpush2.bf16.xpose.msra.mxu0 0
    %584 = vmatprep.subr.bf16.mxu0 0
    %585 = vmatpush2.bf16.xpose.msra.mxu0 0
    %586 = vmatprep.mubr.bf16.mxu0 0
    %587 = vmatmul.mubr.bf16.gmra.mxu0 %v549
    %v588 = vpop.f32.mrf.mxu0
    %v589 = vadd.f32 %v197, %v588
    %v590 = vpop.f32.mrf.mxu0
    %v591 = vpop.f32.mrf.mxu0
    %v592 = vpop.f32.mrf.mxu0
    %593 = vdwg.mxu0
    %595 = vrot.lane.b32.xlu0 %v541, 112
    %v596 = vpop.permute.xlu0 %595
    %v598 = vsel %vm547, %v537, 0
    %v601 = vsel %vm547, %v596, 0
    %603 = vmatprep.subr.bf16.mxu0 0
    %604 = vmatpush1.bf16.xpose.msra.mxu0 0
    %605 = vmatprep.subr.bf16.mxu0 0
    %606 = vmatpush1.bf16.xpose.msra.mxu0 0
    %607 = vmatprep.subr.bf16.mxu0 0
    %608 = vmatpush1.bf16.xpose.msra.mxu0 0
    %609 = vmatprep.subr.bf16.mxu0 0
    %610 = vmatpush1.bf16.xpose.msra.mxu0 0
    %611 = vmatprep.subr.bf16.mxu0 0
    %612 = vmatpush1.bf16.xpose.msra.mxu0 0
    %613 = vmatprep.subr.bf16.mxu0 0
    %614 = vmatpush1.bf16.xpose.msra.mxu0 0
    %615 = vmatprep.subr.bf16.mxu0 0
    %616 = vmatpush1.bf16.xpose.msra.mxu0 0
    %617 = vmatprep.subr.bf16.mxu0 0
    %618 = vmatpush1.bf16.xpose.msra.mxu0 %v601
    %619 = vmatprep.subr.bf16.mxu0 0
    %620 = vmatpush2.bf16.xpose.msra.mxu0 0
    %621 = vmatprep.subr.bf16.mxu0 0
    %622 = vmatpush2.bf16.xpose.msra.mxu0 0
    %623 = vmatprep.subr.bf16.mxu0 0
    %624 = vmatpush2.bf16.xpose.msra.mxu0 0
    %625 = vmatprep.subr.bf16.mxu0 0
    %626 = vmatpush2.bf16.xpose.msra.mxu0 0
    %627 = vmatprep.subr.bf16.mxu0 0
    %628 = vmatpush2.bf16.xpose.msra.mxu0 0
    %629 = vmatprep.subr.bf16.mxu0 0
    %630 = vmatpush2.bf16.xpose.msra.mxu0 0
    %631 = vmatprep.subr.bf16.mxu0 0
    %632 = vmatpush2.bf16.xpose.msra.mxu0 0
    %633 = vmatprep.subr.bf16.mxu0 0
    %634 = vmatpush2.bf16.xpose.msra.mxu0 0
    %635 = vmatprep.mubr.bf16.mxu0 0
    %636 = vmatmul.mubr.bf16.gmra.mxu0 %v598
    %v637 = vpop.f32.mrf.mxu0
    %v638 = vadd.f32 %v197, %v637
    %v639 = vpop.f32.mrf.mxu0
    %v640 = vpop.f32.mrf.mxu0
    %v641 = vpop.f32.mrf.mxu0
    %642 = vdwg.mxu0
    %644 = vrot.lane.b32.xlu0 %v542, 112
    %v645 = vpop.permute.xlu0 %644
    %v647 = vsel %vm547, %v538, 0
    %v650 = vsel %vm547, %v645, 0
    %652 = vmatprep.subr.bf16.mxu0 0
    %653 = vmatpush1.bf16.xpose.msra.mxu0 0
    %654 = vmatprep.subr.bf16.mxu0 0
    %655 = vmatpush1.bf16.xpose.msra.mxu0 0
    %656 = vmatprep.subr.bf16.mxu0 0
    %657 = vmatpush1.bf16.xpose.msra.mxu0 0
    %658 = vmatprep.subr.bf16.mxu0 0
    %659 = vmatpush1.bf16.xpose.msra.mxu0 0
    %660 = vmatprep.subr.bf16.mxu0 0
    %661 = vmatpush1.bf16.xpose.msra.mxu0 0
    %662 = vmatprep.subr.bf16.mxu0 0
    %663 = vmatpush1.bf16.xpose.msra.mxu0 0
    %664 = vmatprep.subr.bf16.mxu0 0
    %665 = vmatpush1.bf16.xpose.msra.mxu0 0
    %666 = vmatprep.subr.bf16.mxu0 0
    %667 = vmatpush1.bf16.xpose.msra.mxu0 %v650
    %668 = vmatprep.subr.bf16.mxu0 0
    %669 = vmatpush2.bf16.xpose.msra.mxu0 0
    %670 = vmatprep.subr.bf16.mxu0 0
    %671 = vmatpush2.bf16.xpose.msra.mxu0 0
    %672 = vmatprep.subr.bf16.mxu0 0
    %673 = vmatpush2.bf16.xpose.msra.mxu0 0
    %674 = vmatprep.subr.bf16.mxu0 0
    %675 = vmatpush2.bf16.xpose.msra.mxu0 0
    %676 = vmatprep.subr.bf16.mxu0 0
    %677 = vmatpush2.bf16.xpose.msra.mxu0 0
    %678 = vmatprep.subr.bf16.mxu0 0
    %679 = vmatpush2.bf16.xpose.msra.mxu0 0
    %680 = vmatprep.subr.bf16.mxu0 0
    %681 = vmatpush2.bf16.xpose.msra.mxu0 0
    %682 = vmatprep.subr.bf16.mxu0 0
    %683 = vmatpush2.bf16.xpose.msra.mxu0 0
    %684 = vmatprep.mubr.bf16.mxu0 0
    %685 = vmatmul.mubr.bf16.gmra.mxu0 %v647
    %v686 = vpop.f32.mrf.mxu0
    %v687 = vadd.f32 %v197, %v686
    %v688 = vpop.f32.mrf.mxu0
    %v689 = vpop.f32.mrf.mxu0
    %v690 = vpop.f32.mrf.mxu0
    %691 = vdwg.mxu0
    %693 = vrot.lane.b32.xlu0 %v543, 112
    %v694 = vpop.permute.xlu0 %693
    %v696 = vsel %vm547, %v539, 0
    %v699 = vsel %vm547, %v694, 0
    %701 = vmatprep.subr.bf16.mxu0 0
    %702 = vmatpush1.bf16.xpose.msra.mxu0 0
    %703 = vmatprep.subr.bf16.mxu0 0
    %704 = vmatpush1.bf16.xpose.msra.mxu0 0
    %705 = vmatprep.subr.bf16.mxu0 0
    %706 = vmatpush1.bf16.xpose.msra.mxu0 0
    %707 = vmatprep.subr.bf16.mxu0 0
    %708 = vmatpush1.bf16.xpose.msra.mxu0 0
    %709 = vmatprep.subr.bf16.mxu0 0
    %710 = vmatpush1.bf16.xpose.msra.mxu0 0
    %711 = vmatprep.subr.bf16.mxu0 0
    %712 = vmatpush1.bf16.xpose.msra.mxu0 0
    %713 = vmatprep.subr.bf16.mxu0 0
    %714 = vmatpush1.bf16.xpose.msra.mxu0 0
    %715 = vmatprep.subr.bf16.mxu0 0
    %716 = vmatpush1.bf16.xpose.msra.mxu0 %v699
    %717 = vmatprep.subr.bf16.mxu0 0
    %718 = vmatpush2.bf16.xpose.msra.mxu0 0
    %719 = vmatprep.subr.bf16.mxu0 0
    %720 = vmatpush2.bf16.xpose.msra.mxu0 0
    %721 = vmatprep.subr.bf16.mxu0 0
    %722 = vmatpush2.bf16.xpose.msra.mxu0 0
    %723 = vmatprep.subr.bf16.mxu0 0
    %724 = vmatpush2.bf16.xpose.msra.mxu0 0
    %725 = vmatprep.subr.bf16.mxu0 0
    %726 = vmatpush2.bf16.xpose.msra.mxu0 0
    %727 = vmatprep.subr.bf16.mxu0 0
    %728 = vmatpush2.bf16.xpose.msra.mxu0 0
    %729 = vmatprep.subr.bf16.mxu0 0
    %730 = vmatpush2.bf16.xpose.msra.mxu0 0
    %731 = vmatprep.subr.bf16.mxu0 0
    %732 = vmatpush2.bf16.xpose.msra.mxu0 0
    %733 = vmatprep.mubr.bf16.mxu0 0
    %734 = vmatmul.mubr.bf16.gmra.mxu0 %v696
    %v735 = vpop.f32.mrf.mxu0
    %v736 = vadd.f32 %v197, %v735
    %v737 = vpop.f32.mrf.mxu0
    %v738 = vpop.f32.mrf.mxu0
    %v739 = vpop.f32.mrf.mxu0
    %740 = vdwg.mxu0
    %v741 = vsel %vm547, %v589, -inf
    %742 = vmax.xlane.f32.xlu0 %v741
    %v743 = vpop.xlane.xlu0 %742
    %v744 = vsel %vm547, %v638, -inf
    %745 = vmax.xlane.f32.xlu0 %v744
    %v746 = vpop.xlane.xlu0 %745
    %v747 = vsel %vm547, %v687, -inf
    %748 = vmax.xlane.f32.xlu0 %v747
    %v749 = vpop.xlane.xlu0 %748
    %v750 = vsel %vm547, %v736, -inf
    %751 = vmax.xlane.f32.xlu0 %v750
    %v752 = vpop.xlane.xlu0 %751
    %v753 = vsub.f32 %v589, %v743
    %v754 = vsub.f32 %v638, %v746
    %v755 = vsub.f32 %v687, %v749
    %v756 = vsub.f32 %v736, %v752
    %v757 = vmul.f32 %v753, 1.442695
    %v758 = vpow.pop %v757
    %v759 = vmul.f32 %v754, 1.442695
    %v760 = vpow.pop %v759
    %v761 = vmul.f32 %v755, 1.442695
    %v762 = vpow.pop %v761
    %v763 = vmul.f32 %v756, 1.442695
    %v764 = vpow.pop %v763
    %v765 = vsel %vm547, %v758, 0.0
    %766 = vadd.xlane.f32.xlu0 %v765
    %v767 = vpop.xlane.xlu0 %766
    %v768 = vsel %vm547, %v760, 0.0
    %769 = vadd.xlane.f32.xlu0 %v768
    %v770 = vpop.xlane.xlu0 %769
    %v771 = vsel %vm547, %v762, 0.0
    %772 = vadd.xlane.f32.xlu0 %v771
    %v773 = vpop.xlane.xlu0 %772
    %v774 = vsel %vm547, %v764, 0.0
    %775 = vadd.xlane.f32.xlu0 %v774
    %v776 = vpop.xlane.xlu0 %775
    %v777 = vrcp.pop %v767
    %v778 = vrcp.pop %v770
    %v779 = vrcp.pop %v773
    %v780 = vrcp.pop %v776
    %v781 = vmul.f32 %v758, %v777
    %v782 = vmul.f32 %v760, %v778
    %v783 = vmul.f32 %v762, %v779
    %v784 = vmul.f32 %v764, %v780
    %v785 = vpack.c.bf16 %v781, %v781
    %v786 = vpack.c.bf16 %v782, %v782
    %v787 = vpack.c.bf16 %v783, %v783
    %v788 = vpack.c.bf16 %v784, %v784
    %v789 = vpack.c.bf16 %v275, %v275
    %v790 = vpack.c.bf16 %v327, %v327
    %v791 = vpack.c.bf16 %v379, %v379
    %v792 = vpack.c.bf16 %v431, %v431
    %794 = vrot.lane.b32.xlu0 %v789, 96
    %v795 = vpop.permute.xlu0 %794
    %v797 = vsel %vm547, %v785, 0
    %vm799 = vcmask 1043456
    %v801 = vsel %vm799, %v795, 0
    %803 = vmatprep.subr.bf16.mxu0 0
    %804 = vmatpush1.bf16.msra.mxu0 0
    %805 = vmatprep.subr.bf16.mxu0 0
    %806 = vmatpush1.bf16.msra.mxu0 0
    %807 = vmatprep.subr.bf16.mxu0 0
    %808 = vmatpush1.bf16.msra.mxu0 0
    %809 = vmatprep.subr.bf16.mxu0 0
    %810 = vmatpush1.bf16.msra.mxu0 0
    %811 = vmatprep.subr.bf16.mxu0 0
    %812 = vmatpush1.bf16.msra.mxu0 0
    %813 = vmatprep.subr.bf16.mxu0 0
    %814 = vmatpush1.bf16.msra.mxu0 0
    %815 = vmatprep.subr.bf16.mxu0 0
    %816 = vmatpush1.bf16.msra.mxu0 0
    %817 = vmatprep.subr.bf16.mxu0 0
    %818 = vmatpush1.bf16.msra.mxu0 %v801
    %819 = vmatprep.subr.bf16.mxu0 0
    %820 = vmatpush2.bf16.msra.mxu0 0
    %821 = vmatprep.subr.bf16.mxu0 0
    %822 = vmatpush2.bf16.msra.mxu0 0
    %823 = vmatprep.subr.bf16.mxu0 0
    %824 = vmatpush2.bf16.msra.mxu0 0
    %825 = vmatprep.subr.bf16.mxu0 0
    %826 = vmatpush2.bf16.msra.mxu0 0
    %827 = vmatprep.subr.bf16.mxu0 0
    %828 = vmatpush2.bf16.msra.mxu0 0
    %829 = vmatprep.subr.bf16.mxu0 0
    %830 = vmatpush2.bf16.msra.mxu0 0
    %831 = vmatprep.subr.bf16.mxu0 0
    %832 = vmatpush2.bf16.msra.mxu0 0
    %833 = vmatprep.subr.bf16.mxu0 0
    %834 = vmatpush2.bf16.msra.mxu0 0
    %835 = vmatprep.mubr.bf16.mxu0 0
    %836 = vmatmul.mubr.bf16.gmra.mxu0 %v797
    %v837 = vpop.f32.mrf.mxu0
    %v838 = vadd.f32 0.0, %v837
    %v839 = vpop.f32.mrf.mxu0
    %v840 = vpop.f32.mrf.mxu0
    %v841 = vpop.f32.mrf.mxu0
    %842 = vdwg.mxu0
    %844 = vrot.lane.b32.xlu0 %v790, 96
    %v845 = vpop.permute.xlu0 %844
    %v847 = vsel %vm547, %v786, 0
    %v850 = vsel %vm799, %v845, 0
    %852 = vmatprep.subr.bf16.mxu0 0
    %853 = vmatpush1.bf16.msra.mxu0 0
    %854 = vmatprep.subr.bf16.mxu0 0
    %855 = vmatpush1.bf16.msra.mxu0 0
    %856 = vmatprep.subr.bf16.mxu0 0
    %857 = vmatpush1.bf16.msra.mxu0 0
    %858 = vmatprep.subr.bf16.mxu0 0
    %859 = vmatpush1.bf16.msra.mxu0 0
    %860 = vmatprep.subr.bf16.mxu0 0
    %861 = vmatpush1.bf16.msra.mxu0 0
    %862 = vmatprep.subr.bf16.mxu0 0
    %863 = vmatpush1.bf16.msra.mxu0 0
    %864 = vmatprep.subr.bf16.mxu0 0
    %865 = vmatpush1.bf16.msra.mxu0 0
    %866 = vmatprep.subr.bf16.mxu0 0
    %867 = vmatpush1.bf16.msra.mxu0 %v850
    %868 = vmatprep.subr.bf16.mxu0 0
    %869 = vmatpush2.bf16.msra.mxu0 0
    %870 = vmatprep.subr.bf16.mxu0 0
    %871 = vmatpush2.bf16.msra.mxu0 0
    %872 = vmatprep.subr.bf16.mxu0 0
    %873 = vmatpush2.bf16.msra.mxu0 0
    %874 = vmatprep.subr.bf16.mxu0 0
    %875 = vmatpush2.bf16.msra.mxu0 0
    %876 = vmatprep.subr.bf16.mxu0 0
    %877 = vmatpush2.bf16.msra.mxu0 0
    %878 = vmatprep.subr.bf16.mxu0 0
    %879 = vmatpush2.bf16.msra.mxu0 0
    %880 = vmatprep.subr.bf16.mxu0 0
    %881 = vmatpush2.bf16.msra.mxu0 0
    %882 = vmatprep.subr.bf16.mxu0 0
    %883 = vmatpush2.bf16.msra.mxu0 0
    %884 = vmatprep.mubr.bf16.mxu0 0
    %885 = vmatmul.mubr.bf16.gmra.mxu0 %v847
    %v886 = vpop.f32.mrf.mxu0
    %v887 = vadd.f32 0.0, %v886
    %v888 = vpop.f32.mrf.mxu0
    %v889 = vpop.f32.mrf.mxu0
    %v890 = vpop.f32.mrf.mxu0
    %891 = vdwg.mxu0
    %893 = vrot.lane.b32.xlu0 %v791, 96
    %v894 = vpop.permute.xlu0 %893
    %v896 = vsel %vm547, %v787, 0
    %v899 = vsel %vm799, %v894, 0
    %901 = vmatprep.subr.bf16.mxu0 0
    %902 = vmatpush1.bf16.msra.mxu0 0
    %903 = vmatprep.subr.bf16.mxu0 0
    %904 = vmatpush1.bf16.msra.mxu0 0
    %905 = vmatprep.subr.bf16.mxu0 0
    %906 = vmatpush1.bf16.msra.mxu0 0
    %907 = vmatprep.subr.bf16.mxu0 0
    %908 = vmatpush1.bf16.msra.mxu0 0
    %909 = vmatprep.subr.bf16.mxu0 0
    %910 = vmatpush1.bf16.msra.mxu0 0
    %911 = vmatprep.subr.bf16.mxu0 0
    %912 = vmatpush1.bf16.msra.mxu0 0
    %913 = vmatprep.subr.bf16.mxu0 0
    %914 = vmatpush1.bf16.msra.mxu0 0
    %915 = vmatprep.subr.bf16.mxu0 0
    %916 = vmatpush1.bf16.msra.mxu0 %v899
    %917 = vmatprep.subr.bf16.mxu0 0
    %918 = vmatpush2.bf16.msra.mxu0 0
    %919 = vmatprep.subr.bf16.mxu0 0
    %920 = vmatpush2.bf16.msra.mxu0 0
    %921 = vmatprep.subr.bf16.mxu0 0
    %922 = vmatpush2.bf16.msra.mxu0 0
    %923 = vmatprep.subr.bf16.mxu0 0
    %924 = vmatpush2.bf16.msra.mxu0 0
    %925 = vmatprep.subr.bf16.mxu0 0
    %926 = vmatpush2.bf16.msra.mxu0 0
    %927 = vmatprep.subr.bf16.mxu0 0
    %928 = vmatpush2.bf16.msra.mxu0 0
    %929 = vmatprep.subr.bf16.mxu0 0
    %930 = vmatpush2.bf16.msra.mxu0 0
    %931 = vmatprep.subr.bf16.mxu0 0
    %932 = vmatpush2.bf16.msra.mxu0 0
    %933 = vmatprep.mubr.bf16.mxu0 0
    %934 = vmatmul.mubr.bf16.gmra.mxu0 %v896
    %v935 = vpop.f32.mrf.mxu0
    %v936 = vadd.f32 0.0, %v935
    %v937 = vpop.f32.mrf.mxu0
    %v938 = vpop.f32.mrf.mxu0
    %v939 = vpop.f32.mrf.mxu0
    %940 = vdwg.mxu0
    %942 = vrot.lane.b32.xlu0 %v792, 96
    %v943 = vpop.permute.xlu0 %942
    %v945 = vsel %vm547, %v788, 0
    %v948 = vsel %vm799, %v943, 0
    %950 = vmatprep.subr.bf16.mxu0 0
    %951 = vmatpush1.bf16.msra.mxu0 0
    %952 = vmatprep.subr.bf16.mxu0 0
    %953 = vmatpush1.bf16.msra.mxu0 0
    %954 = vmatprep.subr.bf16.mxu0 0
    %955 = vmatpush1.bf16.msra.mxu0 0
    %956 = vmatprep.subr.bf16.mxu0 0
    %957 = vmatpush1.bf16.msra.mxu0 0
    %958 = vmatprep.subr.bf16.mxu0 0
    %959 = vmatpush1.bf16.msra.mxu0 0
    %960 = vmatprep.subr.bf16.mxu0 0
    %961 = vmatpush1.bf16.msra.mxu0 0
    %962 = vmatprep.subr.bf16.mxu0 0
    %963 = vmatpush1.bf16.msra.mxu0 0
    %964 = vmatprep.subr.bf16.mxu0 0
    %965 = vmatpush1.bf16.msra.mxu0 %v948
    %966 = vmatprep.subr.bf16.mxu0 0
    %967 = vmatpush2.bf16.msra.mxu0 0
    %968 = vmatprep.subr.bf16.mxu0 0
    %969 = vmatpush2.bf16.msra.mxu0 0
    %970 = vmatprep.subr.bf16.mxu0 0
    %971 = vmatpush2.bf16.msra.mxu0 0
    %972 = vmatprep.subr.bf16.mxu0 0
    %973 = vmatpush2.bf16.msra.mxu0 0
    %974 = vmatprep.subr.bf16.mxu0 0
    %975 = vmatpush2.bf16.msra.mxu0 0
    %976 = vmatprep.subr.bf16.mxu0 0
    %977 = vmatpush2.bf16.msra.mxu0 0
    %978 = vmatprep.subr.bf16.mxu0 0
    %979 = vmatpush2.bf16.msra.mxu0 0
    %980 = vmatprep.subr.bf16.mxu0 0
    %981 = vmatpush2.bf16.msra.mxu0 0
    %982 = vmatprep.mubr.bf16.mxu0 0
    %983 = vmatmul.mubr.bf16.gmra.mxu0 %v945
    %v984 = vpop.f32.mrf.mxu0
    %v985 = vadd.f32 0.0, %v984
    %v986 = vpop.f32.mrf.mxu0
    %v987 = vpop.f32.mrf.mxu0
    %v988 = vpop.f32.mrf.mxu0
    %989 = vdwg.mxu0
    %v990 = vpack.c.bf16 %v838, %v838
    %v991 = vpack.c.bf16 %v887, %v887
    %v992 = vpack.c.bf16 %v936, %v936
    %v993 = vpack.c.bf16 %v985, %v985
    %v995 = vsel %vm547, %v990, 0
    %v998 = vsel %vm799, %v167, 0
    %1000 = vmatprep.subr.bf16.mxu0 0
    %1001 = vmatpush1.bf16.msra.mxu0 0
    %1002 = vmatprep.subr.bf16.mxu0 0
    %1003 = vmatpush1.bf16.msra.mxu0 0
    %1004 = vmatprep.subr.bf16.mxu0 0
    %1005 = vmatpush1.bf16.msra.mxu0 0
    %1006 = vmatprep.subr.bf16.mxu0 0
    %1007 = vmatpush1.bf16.msra.mxu0 0
    %1008 = vmatprep.subr.bf16.mxu0 0
    %1009 = vmatpush1.bf16.msra.mxu0 0
    %1010 = vmatprep.subr.bf16.mxu0 0
    %1011 = vmatpush1.bf16.msra.mxu0 0
    %1012 = vmatprep.subr.bf16.mxu0 0
    %1013 = vmatpush1.bf16.msra.mxu0 0
    %1014 = vmatprep.subr.bf16.mxu0 0
    %1015 = vmatpush1.bf16.msra.mxu0 %v998
    %1016 = vmatprep.subr.bf16.mxu0 0
    %1017 = vmatpush2.bf16.msra.mxu0 0
    %1018 = vmatprep.subr.bf16.mxu0 0
    %1019 = vmatpush2.bf16.msra.mxu0 0
    %1020 = vmatprep.subr.bf16.mxu0 0
    %1021 = vmatpush2.bf16.msra.mxu0 0
    %1022 = vmatprep.subr.bf16.mxu0 0
    %1023 = vmatpush2.bf16.msra.mxu0 0
    %1024 = vmatprep.subr.bf16.mxu0 0
    %1025 = vmatpush2.bf16.msra.mxu0 0
    %1026 = vmatprep.subr.bf16.mxu0 0
    %1027 = vmatpush2.bf16.msra.mxu0 0
    %1028 = vmatprep.subr.bf16.mxu0 0
    %1029 = vmatpush2.bf16.msra.mxu0 0
    %1030 = vmatprep.subr.bf16.mxu0 0
    %1031 = vmatpush2.bf16.msra.mxu0 0
    %1032 = vmatprep.mubr.bf16.mxu0 0
    %1033 = vmatmul.mubr.bf16.gmra.mxu0 %v995
    %v1034 = vpop.f32.mrf.mxu0
    %v1035 = vadd.f32 0.0, %v1034
    %v1036 = vpop.f32.mrf.mxu0
    %v1037 = vpop.f32.mrf.mxu0
    %v1038 = vpop.f32.mrf.mxu0
    %1039 = vdwg.mxu0
    %v1041 = vsel %vm547, %v991, 0
    %v1044 = vsel %vm799, %v168, 0
    %1046 = vmatprep.subr.bf16.mxu0 0
    %1047 = vmatpush1.bf16.msra.mxu0 0
    %1048 = vmatprep.subr.bf16.mxu0 0
    %1049 = vmatpush1.bf16.msra.mxu0 0
    %1050 = vmatprep.subr.bf16.mxu0 0
    %1051 = vmatpush1.bf16.msra.mxu0 0
    %1052 = vmatprep.subr.bf16.mxu0 0
    %1053 = vmatpush1.bf16.msra.mxu0 0
    %1054 = vmatprep.subr.bf16.mxu0 0
    %1055 = vmatpush1.bf16.msra.mxu0 0
    %1056 = vmatprep.subr.bf16.mxu0 0
    %1057 = vmatpush1.bf16.msra.mxu0 0
    %1058 = vmatprep.subr.bf16.mxu0 0
    %1059 = vmatpush1.bf16.msra.mxu0 0
    %1060 = vmatprep.subr.bf16.mxu0 0
    %1061 = vmatpush1.bf16.msra.mxu0 %v1044
    %1062 = vmatprep.subr.bf16.mxu0 0
    %1063 = vmatpush2.bf16.msra.mxu0 0
    %1064 = vmatprep.subr.bf16.mxu0 0
    %1065 = vmatpush2.bf16.msra.mxu0 0
    %1066 = vmatprep.subr.bf16.mxu0 0
    %1067 = vmatpush2.bf16.msra.mxu0 0
    %1068 = vmatprep.subr.bf16.mxu0 0
    %1069 = vmatpush2.bf16.msra.mxu0 0
    %1070 = vmatprep.subr.bf16.mxu0 0
    %1071 = vmatpush2.bf16.msra.mxu0 0
    %1072 = vmatprep.subr.bf16.mxu0 0
    %1073 = vmatpush2.bf16.msra.mxu0 0
    %1074 = vmatprep.subr.bf16.mxu0 0
    %1075 = vmatpush2.bf16.msra.mxu0 0
    %1076 = vmatprep.subr.bf16.mxu0 0
    %1077 = vmatpush2.bf16.msra.mxu0 0
    %1078 = vmatprep.mubr.bf16.mxu0 0
    %1079 = vmatmul.mubr.bf16.gmra.mxu0 %v1041
    %v1080 = vpop.f32.mrf.mxu0
    %v1081 = vadd.f32 0.0, %v1080
    %v1082 = vpop.f32.mrf.mxu0
    %v1083 = vpop.f32.mrf.mxu0
    %v1084 = vpop.f32.mrf.mxu0
    %1085 = vdwg.mxu0
    %v1087 = vsel %vm547, %v992, 0
    %v1090 = vsel %vm799, %v169, 0
    %1092 = vmatprep.subr.bf16.mxu0 0
    %1093 = vmatpush1.bf16.msra.mxu0 0
    %1094 = vmatprep.subr.bf16.mxu0 0
    %1095 = vmatpush1.bf16.msra.mxu0 0
    %1096 = vmatprep.subr.bf16.mxu0 0
    %1097 = vmatpush1.bf16.msra.mxu0 0
    %1098 = vmatprep.subr.bf16.mxu0 0
    %1099 = vmatpush1.bf16.msra.mxu0 0
    %1100 = vmatprep.subr.bf16.mxu0 0
    %1101 = vmatpush1.bf16.msra.mxu0 0
    %1102 = vmatprep.subr.bf16.mxu0 0
    %1103 = vmatpush1.bf16.msra.mxu0 0
    %1104 = vmatprep.subr.bf16.mxu0 0
    %1105 = vmatpush1.bf16.msra.mxu0 0
    %1106 = vmatprep.subr.bf16.mxu0 0
    %1107 = vmatpush1.bf16.msra.mxu0 %v1090
    %1108 = vmatprep.subr.bf16.mxu0 0
    %1109 = vmatpush2.bf16.msra.mxu0 0
    %1110 = vmatprep.subr.bf16.mxu0 0
    %1111 = vmatpush2.bf16.msra.mxu0 0
    %1112 = vmatprep.subr.bf16.mxu0 0
    %1113 = vmatpush2.bf16.msra.mxu0 0
    %1114 = vmatprep.subr.bf16.mxu0 0
    %1115 = vmatpush2.bf16.msra.mxu0 0
    %1116 = vmatprep.subr.bf16.mxu0 0
    %1117 = vmatpush2.bf16.msra.mxu0 0
    %1118 = vmatprep.subr.bf16.mxu0 0
    %1119 = vmatpush2.bf16.msra.mxu0 0
    %1120 = vmatprep.subr.bf16.mxu0 0
    %1121 = vmatpush2.bf16.msra.mxu0 0
    %1122 = vmatprep.subr.bf16.mxu0 0
    %1123 = vmatpush2.bf16.msra.mxu0 0
    %1124 = vmatprep.mubr.bf16.mxu0 0
    %1125 = vmatmul.mubr.bf16.gmra.mxu0 %v1087
    %v1126 = vpop.f32.mrf.mxu0
    %v1127 = vadd.f32 0.0, %v1126
    %v1128 = vpop.f32.mrf.mxu0
    %v1129 = vpop.f32.mrf.mxu0
    %v1130 = vpop.f32.mrf.mxu0
    %1131 = vdwg.mxu0
    %v1133 = vsel %vm547, %v993, 0
    %v1136 = vsel %vm799, %v170, 0
    %1138 = vmatprep.subr.bf16.mxu0 0
    %1139 = vmatpush1.bf16.msra.mxu0 0
    %1140 = vmatprep.subr.bf16.mxu0 0
    %1141 = vmatpush1.bf16.msra.mxu0 0
    %1142 = vmatprep.subr.bf16.mxu0 0
    %1143 = vmatpush1.bf16.msra.mxu0 0
    %1144 = vmatprep.subr.bf16.mxu0 0
    %1145 = vmatpush1.bf16.msra.mxu0 0
    %1146 = vmatprep.subr.bf16.mxu0 0
    %1147 = vmatpush1.bf16.msra.mxu0 0
    %1148 = vmatprep.subr.bf16.mxu0 0
    %1149 = vmatpush1.bf16.msra.mxu0 0
    %1150 = vmatprep.subr.bf16.mxu0 0
    %1151 = vmatpush1.bf16.msra.mxu0 0
    %1152 = vmatprep.subr.bf16.mxu0 0
    %1153 = vmatpush1.bf16.msra.mxu0 %v1136
    %1154 = vmatprep.subr.bf16.mxu0 0
    %1155 = vmatpush2.bf16.msra.mxu0 0
    %1156 = vmatprep.subr.bf16.mxu0 0
    %1157 = vmatpush2.bf16.msra.mxu0 0
    %1158 = vmatprep.subr.bf16.mxu0 0
    %1159 = vmatpush2.bf16.msra.mxu0 0
    %1160 = vmatprep.subr.bf16.mxu0 0
    %1161 = vmatpush2.bf16.msra.mxu0 0
    %1162 = vmatprep.subr.bf16.mxu0 0
    %1163 = vmatpush2.bf16.msra.mxu0 0
    %1164 = vmatprep.subr.bf16.mxu0 0
    %1165 = vmatpush2.bf16.msra.mxu0 0
    %1166 = vmatprep.subr.bf16.mxu0 0
    %1167 = vmatpush2.bf16.msra.mxu0 0
    %1168 = vmatprep.subr.bf16.mxu0 0
    %1169 = vmatpush2.bf16.msra.mxu0 0
    %1170 = vmatprep.mubr.bf16.mxu0 0
    %1171 = vmatmul.mubr.bf16.gmra.mxu0 %v1133
    %v1172 = vpop.f32.mrf.mxu0
    %v1173 = vadd.f32 0.0, %v1172
    %v1174 = vpop.f32.mrf.mxu0
    %v1175 = vpop.f32.mrf.mxu0
    %v1176 = vpop.f32.mrf.mxu0
    %1177 = vdwg.mxu0
    %v1178 = vsel %vm236, %v1035, 0.0
    %v1179 = vsel %vm236, %v1081, 0.0
    %v1180 = vadd.f32 %v1178, %v1179
    %v1181 = vsel %vm236, %v1127, 0.0
    %v1182 = vadd.f32 %v1180, %v1181
    %v1183 = vsel %vm236, %v1173, 0.0
    %v1184 = vadd.f32 %v1182, %v1183
    %v1186 = vlaneseq
    %v1187 = vshrl.u32 %v1186, 7
    %v1188 = vsub.s32 0, %v1187
    %v1189 = vrot.slane %v171, %v1188
    %v1191 = vadd.f32 %v1184, %v1189
    %v1192 = vadd.f32 %v198, %v1191
    %v1193 = vsel %vm236, %v1192, 0.0
    %1194 = vadd.xlane.f32.xlu0 %v1193
    %v1195 = vpop.xlane.xlu0 %1194
    %v1196 = vrcp.pop 32.0
    %v1197 = vmul.f32 %v1195, %v1196
    %v1198 = vsub.f32 %v1192, %v1197
    %v1199 = vmul.f32 %v1198, %v1198
    %v1200 = vsel %vm236, %v1199, 0.0
    %1201 = vadd.xlane.f32.xlu0 %v1200
    %v1202 = vpop.xlane.xlu0 %1201
    %v1203 = vmul.f32 %v1202, %v1196
    %v1204 = vadd.f32 %v1203, 1e-05
    %v1205 = vrsqrt.pop %v1204
    %v1206 = vmul.f32 %v1198, %v1205
    %v1208 = vlaneseq
    %v1209 = vshrl.u32 %v1208, 7
    %v1210 = vsub.s32 0, %v1209
    %v1211 = vrot.slane %v172, %v1210
    %v1213 = vmul.f32 %v1206, %v1211
    %v1215 = vlaneseq
    %v1216 = vshrl.u32 %v1215, 7
    %v1217 = vsub.s32 0, %v1216
    %v1218 = vrot.slane %v173, %v1217
    %v1220 = vadd.f32 %v1213, %v1218
    %v1221 = vpack.c.bf16 %v1220, %v1220
    %v1223 = vlaneseq
    %v1224 = vshrl.u32 %v1223, 7
    %v1225 = vsub.s32 0, %v1224
    %v1226 = vrot.slane %v180, %v1225
    %v1232 = vunpack.c.l.b16 %v176
    %v1233 = vunpack.c.l.b16 %v177
    %v1234 = vunpack.c.l.b16 %v178
    %v1235 = vunpack.c.l.b16 %v179
    %v1236 = vpack.c.b16 %v1233, %v1232
    %v1237 = vpack.c.b16 %v1235, %v1234
    %v1241 = vsel %vm236, %v1221, 0
    %1243 = vmatprep.subr.bf16.mxu0 0
    %1244 = vmatpush1.bf16.msra.mxu0 0
    %1245 = vmatprep.subr.bf16.mxu0 0
    %1246 = vmatpush1.bf16.msra.mxu0 0
    %1247 = vmatprep.subr.bf16.mxu0 0
    %1248 = vmatpush1.bf16.msra.mxu0 0
    %1249 = vmatprep.subr.bf16.mxu0 0
    %1250 = vmatpush1.bf16.msra.mxu0 0
    %1251 = vmatprep.subr.bf16.mxu0 0
    %1252 = vmatpush1.bf16.msra.mxu0 0
    %1253 = vmatprep.subr.bf16.mxu0 0
    %1254 = vmatpush1.bf16.msra.mxu0 0
    %1255 = vmatprep.subr.bf16.mxu0 0
    %1256 = vmatpush1.bf16.msra.mxu0 %v1237
    %1257 = vmatprep.subr.bf16.mxu0 0
    %1258 = vmatpush1.bf16.msra.mxu0 %v1236
    %1259 = vmatprep.subr.bf16.mxu0 0
    %1260 = vmatpush2.bf16.msra.mxu0 0
    %1261 = vmatprep.subr.bf16.mxu0 0
    %1262 = vmatpush2.bf16.msra.mxu0 0
    %1263 = vmatprep.subr.bf16.mxu0 0
    %1264 = vmatpush2.bf16.msra.mxu0 0
    %1265 = vmatprep.subr.bf16.mxu0 0
    %1266 = vmatpush2.bf16.msra.mxu0 0
    %1267 = vmatprep.subr.bf16.mxu0 0
    %1268 = vmatpush2.bf16.msra.mxu0 0
    %1269 = vmatprep.subr.bf16.mxu0 0
    %1270 = vmatpush2.bf16.msra.mxu0 0
    %1271 = vmatprep.subr.bf16.mxu0 0
    %1272 = vmatpush2.bf16.msra.mxu0 0
    %1273 = vmatprep.subr.bf16.mxu0 0
    %1274 = vmatpush2.bf16.msra.mxu0 0
    %1275 = vmatprep.mubr.bf16.mxu0 0
    %1276 = vmatmul.mubr.bf16.gmra.mxu0 %v1241
    %v1277 = vpop.f32.mrf.mxu0
    %v1278 = vadd.f32 %v1226, %v1277
    %v1279 = vpop.f32.mrf.mxu0
    %v1280 = vpop.f32.mrf.mxu0
    %v1281 = vpop.f32.mrf.mxu0
    %1282 = vdwg.mxu0
    %v1283 = vmax.f32 %v1278, 0.0
    %v1284 = vpack.c.bf16 %v1283, %v1283
    %v1286 = vlaneseq
    %v1287 = vshrl.u32 %v1286, 7
    %v1288 = vsub.s32 0, %v1287
    %v1289 = vrot.slane %v189, %v1288
    %v1299 = vunpack.c.l.b16 %v181
    %v1300 = vunpack.c.l.b16 %v182
    %v1301 = vunpack.c.l.b16 %v183
    %v1302 = vunpack.c.l.b16 %v184
    %v1303 = vunpack.c.l.b16 %v185
    %v1304 = vunpack.c.l.b16 %v186
    %v1305 = vunpack.c.l.b16 %v187
    %v1306 = vunpack.c.l.b16 %v188
    %v1307 = vpack.c.b16 %v1300, %v1299
    %v1308 = vpack.c.b16 %v1302, %v1301
    %v1309 = vpack.c.b16 %v1304, %v1303
    %v1310 = vpack.c.b16 %v1306, %v1305
    %vm1315 = vcmask 523264
    %v1317 = vsel %vm1315, %v1284, 0
    %1319 = vmatprep.subr.bf16.mxu0 0
    %1320 = vmatpush1.bf16.msra.mxu0 0
    %1321 = vmatprep.subr.bf16.mxu0 0
    %1322 = vmatpush1.bf16.msra.mxu0 0
    %1323 = vmatprep.subr.bf16.mxu0 0
    %1324 = vmatpush1.bf16.msra.mxu0 0
    %1325 = vmatprep.subr.bf16.mxu0 0
    %1326 = vmatpush1.bf16.msra.mxu0 0
    %1327 = vmatprep.subr.bf16.mxu0 0
    %1328 = vmatpush1.bf16.msra.mxu0 %v1310
    %1329 = vmatprep.subr.bf16.mxu0 0
    %1330 = vmatpush1.bf16.msra.mxu0 %v1309
    %1331 = vmatprep.subr.bf16.mxu0 0
    %1332 = vmatpush1.bf16.msra.mxu0 %v1308
    %1333 = vmatprep.subr.bf16.mxu0 0
    %1334 = vmatpush1.bf16.msra.mxu0 %v1307
    %1335 = vmatprep.subr.bf16.mxu0 0
    %1336 = vmatpush2.bf16.msra.mxu0 0
    %1337 = vmatprep.subr.bf16.mxu0 0
    %1338 = vmatpush2.bf16.msra.mxu0 0
    %1339 = vmatprep.subr.bf16.mxu0 0
    %1340 = vmatpush2.bf16.msra.mxu0 0
    %1341 = vmatprep.subr.bf16.mxu0 0
    %1342 = vmatpush2.bf16.msra.mxu0 0
    %1343 = vmatprep.subr.bf16.mxu0 0
    %1344 = vmatpush2.bf16.msra.mxu0 0
    %1345 = vmatprep.subr.bf16.mxu0 0
    %1346 = vmatpush2.bf16.msra.mxu0 0
    %1347 = vmatprep.subr.bf16.mxu0 0
    %1348 = vmatpush2.bf16.msra.mxu0 0
    %1349 = vmatprep.subr.bf16.mxu0 0
    %1350 = vmatpush2.bf16.msra.mxu0 0
    %1351 = vmatprep.mubr.bf16.mxu0 0
    %1352 = vmatmul.mubr.bf16.gmra.mxu0 %v1317
    %v1353 = vpop.f32.mrf.mxu0
    %v1354 = vadd.f32 %v1289, %v1353
    %v1355 = vpop.f32.mrf.mxu0
    %v1356 = vpop.f32.mrf.mxu0
    %v1357 = vpop.f32.mrf.mxu0
    %1358 = vdwg.mxu0
    %v1359 = vadd.f32 %v1220, %v1354
    %v1360 = vsel %vm236, %v1359, 0.0
    %1361 = vadd.xlane.f32.xlu0 %v1360
    %v1362 = vpop.xlane.xlu0 %1361
    %v1363 = vmul.f32 %v1362, %v1196
    %v1364 = vsub.f32 %v1359, %v1363
    %v1365 = vmul.f32 %v1364, %v1364
    %v1366 = vsel %vm236, %v1365, 0.0
    %1367 = vadd.xlane.f32.xlu0 %v1366
    %v1368 = vpop.xlane.xlu0 %1367
    %v1369 = vmul.f32 %v1368, %v1196
    %v1370 = vadd.f32 %v1369, 1e-05
    %v1371 = vrsqrt.pop %v1370
    %v1372 = vmul.f32 %v1364, %v1371
    %v1374 = vlaneseq
    %v1375 = vshrl.u32 %v1374, 7
    %v1376 = vsub.s32 0, %v1375
    %v1377 = vrot.slane %v174, %v1376
    %v1379 = vmul.f32 %v1372, %v1377
    %v1381 = vlaneseq
    %v1382 = vshrl.u32 %v1381, 7
    %v1383 = vsub.s32 0, %v1382
    %v1384 = vrot.slane %v175, %v1383
    %v1386 = vadd.f32 %v1379, %v1384
    %v1387 = vpack.c.bf16 %v1386, %v1386
    %v1389 = vsel %vm236, %v1387, 0
    %1391 = vmatprep.subr.bf16.mxu0 0
    %1392 = vmatpush1.bf16.msra.mxu0 0
    %1393 = vmatprep.subr.bf16.mxu0 0
    %1394 = vmatpush1.bf16.msra.mxu0 0
    %1395 = vmatprep.subr.bf16.mxu0 0
    %1396 = vmatpush1.bf16.msra.mxu0 0
    %1397 = vmatprep.subr.bf16.mxu0 0
    %1398 = vmatpush1.bf16.msra.mxu0 0
    %1399 = vmatprep.subr.bf16.mxu0 0
    %1400 = vmatpush1.bf16.msra.mxu0 0
    %1401 = vmatprep.subr.bf16.mxu0 0
    %1402 = vmatpush1.bf16.msra.mxu0 0
    %1403 = vmatprep.subr.bf16.mxu0 0
    %1404 = vmatpush1.bf16.msra.mxu0 %v233
    %1405 = vmatprep.subr.bf16.mxu0 0
    %1406 = vmatpush1.bf16.msra.mxu0 %v232
    %1407 = vmatprep.subr.bf16.mxu0 0
    %1408 = vmatpush2.bf16.msra.mxu0 0
    %1409 = vmatprep.subr.bf16.mxu0 0
    %1410 = vmatpush2.bf16.msra.mxu0 0
    %1411 = vmatprep.subr.bf16.mxu0 0
    %1412 = vmatpush2.bf16.msra.mxu0 0
    %1413 = vmatprep.subr.bf16.mxu0 0
    %1414 = vmatpush2.bf16.msra.mxu0 0
    %1415 = vmatprep.subr.bf16.mxu0 0
    %1416 = vmatpush2.bf16.msra.mxu0 0
    %1417 = vmatprep.subr.bf16.mxu0 0
    %1418 = vmatpush2.bf16.msra.mxu0 0
    %1419 = vmatprep.subr.bf16.mxu0 0
    %1420 = vmatpush2.bf16.msra.mxu0 0
    %1421 = vmatprep.subr.bf16.mxu0 0
    %1422 = vmatpush2.bf16.msra.mxu0 0
    %1423 = vmatprep.mubr.bf16.mxu0 0
    %1424 = vmatmul.mubr.bf16.gmra.mxu0 %v1389
    %v1425 = vpop.f32.mrf.mxu0
    %v1426 = vadd.f32 %v207, %v1425
    %v1427 = vpop.f32.mrf.mxu0
    %v1428 = vpop.f32.mrf.mxu0
    %v1429 = vpop.f32.mrf.mxu0
    %1430 = vdwg.mxu0
    %1431 = vmatprep.subr.bf16.mxu0 0
    %1432 = vmatpush1.bf16.msra.mxu0 0
    %1433 = vmatprep.subr.bf16.mxu0 0
    %1434 = vmatpush1.bf16.msra.mxu0 0
    %1435 = vmatprep.subr.bf16.mxu0 0
    %1436 = vmatpush1.bf16.msra.mxu0 0
    %1437 = vmatprep.subr.bf16.mxu0 0
    %1438 = vmatpush1.bf16.msra.mxu0 0
    %1439 = vmatprep.subr.bf16.mxu0 0
    %1440 = vmatpush1.bf16.msra.mxu0 0
    %1441 = vmatprep.subr.bf16.mxu0 0
    %1442 = vmatpush1.bf16.msra.mxu0 0
    %1443 = vmatprep.subr.bf16.mxu0 0
    %1444 = vmatpush1.bf16.msra.mxu0 %v289
    %1445 = vmatprep.subr.bf16.mxu0 0
    %1446 = vmatpush1.bf16.msra.mxu0 %v288
    %1447 = vmatprep.subr.bf16.mxu0 0
    %1448 = vmatpush2.bf16.msra.mxu0 0
    %1449 = vmatprep.subr.bf16.mxu0 0
    %1450 = vmatpush2.bf16.msra.mxu0 0
    %1451 = vmatprep.subr.bf16.mxu0 0
    %1452 = vmatpush2.bf16.msra.mxu0 0
    %1453 = vmatprep.subr.bf16.mxu0 0
    %1454 = vmatpush2.bf16.msra.mxu0 0
    %1455 = vmatprep.subr.bf16.mxu0 0
    %1456 = vmatpush2.bf16.msra.mxu0 0
    %1457 = vmatprep.subr.bf16.mxu0 0
    %1458 = vmatpush2.bf16.msra.mxu0 0
    %1459 = vmatprep.subr.bf16.mxu0 0
    %1460 = vmatpush2.bf16.msra.mxu0 0
    %1461 = vmatprep.subr.bf16.mxu0 0
    %1462 = vmatpush2.bf16.msra.mxu0 0
    %1463 = vmatprep.mubr.bf16.mxu0 0
    %1464 = vmatmul.mubr.bf16.gmra.mxu0 %v1389
    %v1465 = vpop.f32.mrf.mxu0
    %v1466 = vadd.f32 %v211, %v1465
    %v1467 = vpop.f32.mrf.mxu0
    %v1468 = vpop.f32.mrf.mxu0
    %v1469 = vpop.f32.mrf.mxu0
    %1470 = vdwg.mxu0
    %1471 = vmatprep.subr.bf16.mxu0 0
    %1472 = vmatpush1.bf16.msra.mxu0 0
    %1473 = vmatprep.subr.bf16.mxu0 0
    %1474 = vmatpush1.bf16.msra.mxu0 0
    %1475 = vmatprep.subr.bf16.mxu0 0
    %1476 = vmatpush1.bf16.msra.mxu0 0
    %1477 = vmatprep.subr.bf16.mxu0 0
    %1478 = vmatpush1.bf16.msra.mxu0 0
    %1479 = vmatprep.subr.bf16.mxu0 0
    %1480 = vmatpush1.bf16.msra.mxu0 0
    %1481 = vmatprep.subr.bf16.mxu0 0
    %1482 = vmatpush1.bf16.msra.mxu0 0
    %1483 = vmatprep.subr.bf16.mxu0 0
    %1484 = vmatpush1.bf16.msra.mxu0 %v341
    %1485 = vmatprep.subr.bf16.mxu0 0
    %1486 = vmatpush1.bf16.msra.mxu0 %v340
    %1487 = vmatprep.subr.bf16.mxu0 0
    %1488 = vmatpush2.bf16.msra.mxu0 0
    %1489 = vmatprep.subr.bf16.mxu0 0
    %1490 = vmatpush2.bf16.msra.mxu0 0
    %1491 = vmatprep.subr.bf16.mxu0 0
    %1492 = vmatpush2.bf16.msra.mxu0 0
    %1493 = vmatprep.subr.bf16.mxu0 0
    %1494 = vmatpush2.bf16.msra.mxu0 0
    %1495 = vmatprep.subr.bf16.mxu0 0
    %1496 = vmatpush2.bf16.msra.mxu0 0
    %1497 = vmatprep.subr.bf16.mxu0 0
    %1498 = vmatpush2.bf16.msra.mxu0 0
    %1499 = vmatprep.subr.bf16.mxu0 0
    %1500 = vmatpush2.bf16.msra.mxu0 0
    %1501 = vmatprep.subr.bf16.mxu0 0
    %1502 = vmatpush2.bf16.msra.mxu0 0
    %1503 = vmatprep.mubr.bf16.mxu0 0
    %1504 = vmatmul.mubr.bf16.gmra.mxu0 %v1389
    %v1505 = vpop.f32.mrf.mxu0
    %v1506 = vadd.f32 %v215, %v1505
    %v1507 = vpop.f32.mrf.mxu0
    %v1508 = vpop.f32.mrf.mxu0
    %v1509 = vpop.f32.mrf.mxu0
    %1510 = vdwg.mxu0
    %1511 = vmatprep.subr.bf16.mxu0 0
    %1512 = vmatpush1.bf16.msra.mxu0 0
    %1513 = vmatprep.subr.bf16.mxu0 0
    %1514 = vmatpush1.bf16.msra.mxu0 0
    %1515 = vmatprep.subr.bf16.mxu0 0
    %1516 = vmatpush1.bf16.msra.mxu0 0
    %1517 = vmatprep.subr.bf16.mxu0 0
    %1518 = vmatpush1.bf16.msra.mxu0 0
    %1519 = vmatprep.subr.bf16.mxu0 0
    %1520 = vmatpush1.bf16.msra.mxu0 0
    %1521 = vmatprep.subr.bf16.mxu0 0
    %1522 = vmatpush1.bf16.msra.mxu0 0
    %1523 = vmatprep.subr.bf16.mxu0 0
    %1524 = vmatpush1.bf16.msra.mxu0 %v393
    %1525 = vmatprep.subr.bf16.mxu0 0
    %1526 = vmatpush1.bf16.msra.mxu0 %v392
    %1527 = vmatprep.subr.bf16.mxu0 0
    %1528 = vmatpush2.bf16.msra.mxu0 0
    %1529 = vmatprep.subr.bf16.mxu0 0
    %1530 = vmatpush2.bf16.msra.mxu0 0
    %1531 = vmatprep.subr.bf16.mxu0 0
    %1532 = vmatpush2.bf16.msra.mxu0 0
    %1533 = vmatprep.subr.bf16.mxu0 0
    %1534 = vmatpush2.bf16.msra.mxu0 0
    %1535 = vmatprep.subr.bf16.mxu0 0
    %1536 = vmatpush2.bf16.msra.mxu0 0
    %1537 = vmatprep.subr.bf16.mxu0 0
    %1538 = vmatpush2.bf16.msra.mxu0 0
    %1539 = vmatprep.subr.bf16.mxu0 0
    %1540 = vmatpush2.bf16.msra.mxu0 0
    %1541 = vmatprep.subr.bf16.mxu0 0
    %1542 = vmatpush2.bf16.msra.mxu0 0
    %1543 = vmatprep.mubr.bf16.mxu0 0
    %1544 = vmatmul.mubr.bf16.gmra.mxu0 %v1389
    %v1545 = vpop.f32.mrf.mxu0
    %v1546 = vadd.f32 %v219, %v1545
    %v1547 = vpop.f32.mrf.mxu0
    %v1548 = vpop.f32.mrf.mxu0
    %v1549 = vpop.f32.mrf.mxu0
    %1550 = vdwg.mxu0
    %v1551 = vmul.f32 %v1426, %v139
    %v1552 = vmul.f32 %v1466, %v140
    %v1553 = vmul.f32 %v1506, %v141
    %v1554 = vmul.f32 %v1546, %v142
    %v1555 = vmul.f32 %v1426, %v445
    %v1556 = vmul.f32 %v1466, %v447
    %v1557 = vmul.f32 %v1506, %v449
    %v1558 = vmul.f32 %v1546, %v451
    %1563 = vrot.lane.b32.xlu0 %v1555, 120
    %v1564 = vpop.permute.xlu0 %1563
    %1565 = vrot.lane.b32.xlu0 %v1556, 120
    %v1566 = vpop.permute.xlu0 %1565
    %1567 = vrot.lane.b32.xlu0 %v1557, 120
    %v1568 = vpop.permute.xlu0 %1567
    %1569 = vrot.lane.b32.xlu0 %v1558, 120
    %v1570 = vpop.permute.xlu0 %1569
    %v1575 = vadd.f32 %v1551, %v1564
    %v1576 = vadd.f32 %v1552, %v1566
    %v1577 = vadd.f32 %v1553, %v1568
    %v1578 = vadd.f32 %v1554, %v1570
    %v1579 = vmul.f32 %v1426, %v485
    %v1580 = vmul.f32 %v1466, %v487
    %v1581 = vmul.f32 %v1506, %v489
    %v1582 = vmul.f32 %v1546, %v491
    %v1583 = vmul.f32 %v1426, %v501
    %v1584 = vmul.f32 %v1466, %v503
    %v1585 = vmul.f32 %v1506, %v505
    %v1586 = vmul.f32 %v1546, %v507
    %1591 = vrot.lane.b32.xlu0 %v1583, 120
    %v1592 = vpop.permute.xlu0 %1591
    %1593 = vrot.lane.b32.xlu0 %v1584, 120
    %v1594 = vpop.permute.xlu0 %1593
    %1595 = vrot.lane.b32.xlu0 %v1585, 120
    %v1596 = vpop.permute.xlu0 %1595
    %1597 = vrot.lane.b32.xlu0 %v1586, 120
    %v1598 = vpop.permute.xlu0 %1597
    %v1603 = vadd.f32 %v1579, %v1592
    %v1604 = vadd.f32 %v1580, %v1594
    %v1605 = vadd.f32 %v1581, %v1596
    %v1606 = vadd.f32 %v1582, %v1598
    %v1607 = vpack.c.bf16 %v1575, %v1575
    %v1608 = vpack.c.bf16 %v1576, %v1576
    %v1609 = vpack.c.bf16 %v1577, %v1577
    %v1610 = vpack.c.bf16 %v1578, %v1578
    %v1611 = vpack.c.bf16 %v1603, %v1603
    %v1612 = vpack.c.bf16 %v1604, %v1604
    %v1613 = vpack.c.bf16 %v1605, %v1605
    %v1614 = vpack.c.bf16 %v1606, %v1606
    %1616 = vrot.lane.b32.xlu0 %v1611, 112
    %v1617 = vpop.permute.xlu0 %1616
    %v1619 = vsel %vm547, %v1607, 0
    %v1622 = vsel %vm547, %v1617, 0
    %1624 = vmatprep.subr.bf16.mxu0 0
    %1625 = vmatpush1.bf16.xpose.msra.mxu0 0
    %1626 = vmatprep.subr.bf16.mxu0 0
    %1627 = vmatpush1.bf16.xpose.msra.mxu0 0
    %1628 = vmatprep.subr.bf16.mxu0 0
    %1629 = vmatpush1.bf16.xpose.msra.mxu0 0
    %1630 = vmatprep.subr.bf16.mxu0 0
    %1631 = vmatpush1.bf16.xpose.msra.mxu0 0
    %1632 = vmatprep.subr.bf16.mxu0 0
    %1633 = vmatpush1.bf16.xpose.msra.mxu0 0
    %1634 = vmatprep.subr.bf16.mxu0 0
    %1635 = vmatpush1.bf16.xpose.msra.mxu0 0
    %1636 = vmatprep.subr.bf16.mxu0 0
    %1637 = vmatpush1.bf16.xpose.msra.mxu0 0
    %1638 = vmatprep.subr.bf16.mxu0 0
    %1639 = vmatpush1.bf16.xpose.msra.mxu0 %v1622
    %1640 = vmatprep.subr.bf16.mxu0 0
    %1641 = vmatpush2.bf16.xpose.msra.mxu0 0
    %1642 = vmatprep.subr.bf16.mxu0 0
    %1643 = vmatpush2.bf16.xpose.msra.mxu0 0
    %1644 = vmatprep.subr.bf16.mxu0 0
    %1645 = vmatpush2.bf16.xpose.msra.mxu0 0
    %1646 = vmatprep.subr.bf16.mxu0 0
    %1647 = vmatpush2.bf16.xpose.msra.mxu0 0
    %1648 = vmatprep.subr.bf16.mxu0 0
    %1649 = vmatpush2.bf16.xpose.msra.mxu0 0
    %1650 = vmatprep.subr.bf16.mxu0 0
    %1651 = vmatpush2.bf16.xpose.msra.mxu0 0
    %1652 = vmatprep.subr.bf16.mxu0 0
    %1653 = vmatpush2.bf16.xpose.msra.mxu0 0
    %1654 = vmatprep.subr.bf16.mxu0 0
    %1655 = vmatpush2.bf16.xpose.msra.mxu0 0
    %1656 = vmatprep.mubr.bf16.mxu0 0
    %1657 = vmatmul.mubr.bf16.gmra.mxu0 %v1619
    %v1658 = vpop.f32.mrf.mxu0
    %v1659 = vadd.f32 %v197, %v1658
    %v1660 = vpop.f32.mrf.mxu0
    %v1661 = vpop.f32.mrf.mxu0
    %v1662 = vpop.f32.mrf.mxu0
    %1663 = vdwg.mxu0
    %1665 = vrot.lane.b32.xlu0 %v1612, 112
    %v1666 = vpop.permute.xlu0 %1665
    %v1668 = vsel %vm547, %v1608, 0
    %v1671 = vsel %vm547, %v1666, 0
    %1673 = vmatprep.subr.bf16.mxu0 0
    %1674 = vmatpush1.bf16.xpose.msra.mxu0 0
    %1675 = vmatprep.subr.bf16.mxu0 0
    %1676 = vmatpush1.bf16.xpose.msra.mxu0 0
    %1677 = vmatprep.subr.bf16.mxu0 0
    %1678 = vmatpush1.bf16.xpose.msra.mxu0 0
    %1679 = vmatprep.subr.bf16.mxu0 0
    %1680 = vmatpush1.bf16.xpose.msra.mxu0 0
    %1681 = vmatprep.subr.bf16.mxu0 0
    %1682 = vmatpush1.bf16.xpose.msra.mxu0 0
    %1683 = vmatprep.subr.bf16.mxu0 0
    %1684 = vmatpush1.bf16.xpose.msra.mxu0 0
    %1685 = vmatprep.subr.bf16.mxu0 0
    %1686 = vmatpush1.bf16.xpose.msra.mxu0 0
    %1687 = vmatprep.subr.bf16.mxu0 0
    %1688 = vmatpush1.bf16.xpose.msra.mxu0 %v1671
    %1689 = vmatprep.subr.bf16.mxu0 0
    %1690 = vmatpush2.bf16.xpose.msra.mxu0 0
    %1691 = vmatprep.subr.bf16.mxu0 0
    %1692 = vmatpush2.bf16.xpose.msra.mxu0 0
    %1693 = vmatprep.subr.bf16.mxu0 0
    %1694 = vmatpush2.bf16.xpose.msra.mxu0 0
    %1695 = vmatprep.subr.bf16.mxu0 0
    %1696 = vmatpush2.bf16.xpose.msra.mxu0 0
    %1697 = vmatprep.subr.bf16.mxu0 0
    %1698 = vmatpush2.bf16.xpose.msra.mxu0 0
    %1699 = vmatprep.subr.bf16.mxu0 0
    %1700 = vmatpush2.bf16.xpose.msra.mxu0 0
    %1701 = vmatprep.subr.bf16.mxu0 0
    %1702 = vmatpush2.bf16.xpose.msra.mxu0 0
    %1703 = vmatprep.subr.bf16.mxu0 0
    %1704 = vmatpush2.bf16.xpose.msra.mxu0 0
    %1705 = vmatprep.mubr.bf16.mxu0 0
    %1706 = vmatmul.mubr.bf16.gmra.mxu0 %v1668
    %v1707 = vpop.f32.mrf.mxu0
    %v1708 = vadd.f32 %v197, %v1707
    %v1709 = vpop.f32.mrf.mxu0
    %v1710 = vpop.f32.mrf.mxu0
    %v1711 = vpop.f32.mrf.mxu0
    %1712 = vdwg.mxu0
    %1714 = vrot.lane.b32.xlu0 %v1613, 112
    %v1715 = vpop.permute.xlu0 %1714
    %v1717 = vsel %vm547, %v1609, 0
    %v1720 = vsel %vm547, %v1715, 0
    %1722 = vmatprep.subr.bf16.mxu0 0
    %1723 = vmatpush1.bf16.xpose.msra.mxu0 0
    %1724 = vmatprep.subr.bf16.mxu0 0
    %1725 = vmatpush1.bf16.xpose.msra.mxu0 0
    %1726 = vmatprep.subr.bf16.mxu0 0
    %1727 = vmatpush1.bf16.xpose.msra.mxu0 0
    %1728 = vmatprep.subr.bf16.mxu0 0
    %1729 = vmatpush1.bf16.xpose.msra.mxu0 0
    %1730 = vmatprep.subr.bf16.mxu0 0
    %1731 = vmatpush1.bf16.xpose.msra.mxu0 0
    %1732 = vmatprep.subr.bf16.mxu0 0
    %1733 = vmatpush1.bf16.xpose.msra.mxu0 0
    %1734 = vmatprep.subr.bf16.mxu0 0
    %1735 = vmatpush1.bf16.xpose.msra.mxu0 0
    %1736 = vmatprep.subr.bf16.mxu0 0
    %1737 = vmatpush1.bf16.xpose.msra.mxu0 %v1720
    %1738 = vmatprep.subr.bf16.mxu0 0
    %1739 = vmatpush2.bf16.xpose.msra.mxu0 0
    %1740 = vmatprep.subr.bf16.mxu0 0
    %1741 = vmatpush2.bf16.xpose.msra.mxu0 0
    %1742 = vmatprep.subr.bf16.mxu0 0
    %1743 = vmatpush2.bf16.xpose.msra.mxu0 0
    %1744 = vmatprep.subr.bf16.mxu0 0
    %1745 = vmatpush2.bf16.xpose.msra.mxu0 0
    %1746 = vmatprep.subr.bf16.mxu0 0
    %1747 = vmatpush2.bf16.xpose.msra.mxu0 0
    %1748 = vmatprep.subr.bf16.mxu0 0
    %1749 = vmatpush2.bf16.xpose.msra.mxu0 0
    %1750 = vmatprep.subr.bf16.mxu0 0
    %1751 = vmatpush2.bf16.xpose.msra.mxu0 0
    %1752 = vmatprep.subr.bf16.mxu0 0
    %1753 = vmatpush2.bf16.xpose.msra.mxu0 0
    %1754 = vmatprep.mubr.bf16.mxu0 0
    %1755 = vmatmul.mubr.bf16.gmra.mxu0 %v1717
    %v1756 = vpop.f32.mrf.mxu0
    %v1757 = vadd.f32 %v197, %v1756
    %v1758 = vpop.f32.mrf.mxu0
    %v1759 = vpop.f32.mrf.mxu0
    %v1760 = vpop.f32.mrf.mxu0
    %1761 = vdwg.mxu0
    %1763 = vrot.lane.b32.xlu0 %v1614, 112
    %v1764 = vpop.permute.xlu0 %1763
    %v1766 = vsel %vm547, %v1610, 0
    %v1769 = vsel %vm547, %v1764, 0
    %1771 = vmatprep.subr.bf16.mxu0 0
    %1772 = vmatpush1.bf16.xpose.msra.mxu0 0
    %1773 = vmatprep.subr.bf16.mxu0 0
    %1774 = vmatpush1.bf16.xpose.msra.mxu0 0
    %1775 = vmatprep.subr.bf16.mxu0 0
    %1776 = vmatpush1.bf16.xpose.msra.mxu0 0
    %1777 = vmatprep.subr.bf16.mxu0 0
    %1778 = vmatpush1.bf16.xpose.msra.mxu0 0
    %1779 = vmatprep.subr.bf16.mxu0 0
    %1780 = vmatpush1.bf16.xpose.msra.mxu0 0
    %1781 = vmatprep.subr.bf16.mxu0 0
    %1782 = vmatpush1.bf16.xpose.msra.mxu0 0
    %1783 = vmatprep.subr.bf16.mxu0 0
    %1784 = vmatpush1.bf16.xpose.msra.mxu0 0
    %1785 = vmatprep.subr.bf16.mxu0 0
    %1786 = vmatpush1.bf16.xpose.msra.mxu0 %v1769
    %1787 = vmatprep.subr.bf16.mxu0 0
    %1788 = vmatpush2.bf16.xpose.msra.mxu0 0
    %1789 = vmatprep.subr.bf16.mxu0 0
    %1790 = vmatpush2.bf16.xpose.msra.mxu0 0
    %1791 = vmatprep.subr.bf16.mxu0 0
    %1792 = vmatpush2.bf16.xpose.msra.mxu0 0
    %1793 = vmatprep.subr.bf16.mxu0 0
    %1794 = vmatpush2.bf16.xpose.msra.mxu0 0
    %1795 = vmatprep.subr.bf16.mxu0 0
    %1796 = vmatpush2.bf16.xpose.msra.mxu0 0
    %1797 = vmatprep.subr.bf16.mxu0 0
    %1798 = vmatpush2.bf16.xpose.msra.mxu0 0
    %1799 = vmatprep.subr.bf16.mxu0 0
    %1800 = vmatpush2.bf16.xpose.msra.mxu0 0
    %1801 = vmatprep.subr.bf16.mxu0 0
    %1802 = vmatpush2.bf16.xpose.msra.mxu0 0
    %1803 = vmatprep.mubr.bf16.mxu0 0
    %1804 = vmatmul.mubr.bf16.gmra.mxu0 %v1766
    %v1805 = vpop.f32.mrf.mxu0
    %v1806 = vadd.f32 %v197, %v1805
    %v1807 = vpop.f32.mrf.mxu0
    %v1808 = vpop.f32.mrf.mxu0
    %v1809 = vpop.f32.mrf.mxu0
    %1810 = vdwg.mxu0
    %v1811 = vsel %vm547, %v1659, -inf
    %1812 = vmax.xlane.f32.xlu0 %v1811
    %v1813 = vpop.xlane.xlu0 %1812
    %v1814 = vsel %vm547, %v1708, -inf
    %1815 = vmax.xlane.f32.xlu0 %v1814
    %v1816 = vpop.xlane.xlu0 %1815
    %v1817 = vsel %vm547, %v1757, -inf
    %1818 = vmax.xlane.f32.xlu0 %v1817
    %v1819 = vpop.xlane.xlu0 %1818
    %v1820 = vsel %vm547, %v1806, -inf
    %1821 = vmax.xlane.f32.xlu0 %v1820
    %v1822 = vpop.xlane.xlu0 %1821
    %v1823 = vsub.f32 %v1659, %v1813
    %v1824 = vsub.f32 %v1708, %v1816
    %v1825 = vsub.f32 %v1757, %v1819
    %v1826 = vsub.f32 %v1806, %v1822
    %v1827 = vmul.f32 %v1823, 1.442695
    %v1828 = vpow.pop %v1827
    %v1829 = vmul.f32 %v1824, 1.442695
    %v1830 = vpow.pop %v1829
    %v1831 = vmul.f32 %v1825, 1.442695
    %v1832 = vpow.pop %v1831
    %v1833 = vmul.f32 %v1826, 1.442695
    %v1834 = vpow.pop %v1833
    %v1835 = vsel %vm547, %v1828, 0.0
    %1836 = vadd.xlane.f32.xlu0 %v1835
    %v1837 = vpop.xlane.xlu0 %1836
    %v1838 = vsel %vm547, %v1830, 0.0
    %1839 = vadd.xlane.f32.xlu0 %v1838
    %v1840 = vpop.xlane.xlu0 %1839
    %v1841 = vsel %vm547, %v1832, 0.0
    %1842 = vadd.xlane.f32.xlu0 %v1841
    %v1843 = vpop.xlane.xlu0 %1842
    %v1844 = vsel %vm547, %v1834, 0.0
    %1845 = vadd.xlane.f32.xlu0 %v1844
    %v1846 = vpop.xlane.xlu0 %1845
    %v1847 = vrcp.pop %v1837
    %v1848 = vrcp.pop %v1840
    %v1849 = vrcp.pop %v1843
    %v1850 = vrcp.pop %v1846
    %v1851 = vmul.f32 %v1828, %v1847
    %v1852 = vmul.f32 %v1830, %v1848
    %v1853 = vmul.f32 %v1832, %v1849
    %v1854 = vmul.f32 %v1834, %v1850
    %v1855 = vpack.c.bf16 %v1851, %v1851
    %v1856 = vpack.c.bf16 %v1852, %v1852
    %v1857 = vpack.c.bf16 %v1853, %v1853
    %v1858 = vpack.c.bf16 %v1854, %v1854
    %v1859 = vpack.c.bf16 %v1426, %v1426
    %v1860 = vpack.c.bf16 %v1466, %v1466
    %v1861 = vpack.c.bf16 %v1506, %v1506
    %v1862 = vpack.c.bf16 %v1546, %v1546
    %1864 = vrot.lane.b32.xlu0 %v1859, 96
    %v1865 = vpop.permute.xlu0 %1864
    %v1867 = vsel %vm547, %v1855, 0
    %v1870 = vsel %vm799, %v1865, 0
    %1872 = vmatprep.subr.bf16.mxu0 0
    %1873 = vmatpush1.bf16.msra.mxu0 0
    %1874 = vmatprep.subr.bf16.mxu0 0
    %1875 = vmatpush1.bf16.msra.mxu0 0
    %1876 = vmatprep.subr.bf16.mxu0 0
    %1877 = vmatpush1.bf16.msra.mxu0 0
    %1878 = vmatprep.subr.bf16.mxu0 0
    %1879 = vmatpush1.bf16.msra.mxu0 0
    %1880 = vmatprep.subr.bf16.mxu0 0
    %1881 = vmatpush1.bf16.msra.mxu0 0
    %1882 = vmatprep.subr.bf16.mxu0 0
    %1883 = vmatpush1.bf16.msra.mxu0 0
    %1884 = vmatprep.subr.bf16.mxu0 0
    %1885 = vmatpush1.bf16.msra.mxu0 0
    %1886 = vmatprep.subr.bf16.mxu0 0
    %1887 = vmatpush1.bf16.msra.mxu0 %v1870
    %1888 = vmatprep.subr.bf16.mxu0 0
    %1889 = vmatpush2.bf16.msra.mxu0 0
    %1890 = vmatprep.subr.bf16.mxu0 0
    %1891 = vmatpush2.bf16.msra.mxu0 0
    %1892 = vmatprep.subr.bf16.mxu0 0
    %1893 = vmatpush2.bf16.msra.mxu0 0
    %1894 = vmatprep.subr.bf16.mxu0 0
    %1895 = vmatpush2.bf16.msra.mxu0 0
    %1896 = vmatprep.subr.bf16.mxu0 0
    %1897 = vmatpush2.bf16.msra.mxu0 0
    %1898 = vmatprep.subr.bf16.mxu0 0
    %1899 = vmatpush2.bf16.msra.mxu0 0
    %1900 = vmatprep.subr.bf16.mxu0 0
    %1901 = vmatpush2.bf16.msra.mxu0 0
    %1902 = vmatprep.subr.bf16.mxu0 0
    %1903 = vmatpush2.bf16.msra.mxu0 0
    %1904 = vmatprep.mubr.bf16.mxu0 0
    %1905 = vmatmul.mubr.bf16.gmra.mxu0 %v1867
    %v1906 = vpop.f32.mrf.mxu0
    %v1907 = vadd.f32 0.0, %v1906
    %v1908 = vpop.f32.mrf.mxu0
    %v1909 = vpop.f32.mrf.mxu0
    %v1910 = vpop.f32.mrf.mxu0
    %1911 = vdwg.mxu0
    %1913 = vrot.lane.b32.xlu0 %v1860, 96
    %v1914 = vpop.permute.xlu0 %1913
    %v1916 = vsel %vm547, %v1856, 0
    %v1919 = vsel %vm799, %v1914, 0
    %1921 = vmatprep.subr.bf16.mxu0 0
    %1922 = vmatpush1.bf16.msra.mxu0 0
    %1923 = vmatprep.subr.bf16.mxu0 0
    %1924 = vmatpush1.bf16.msra.mxu0 0
    %1925 = vmatprep.subr.bf16.mxu0 0
    %1926 = vmatpush1.bf16.msra.mxu0 0
    %1927 = vmatprep.subr.bf16.mxu0 0
    %1928 = vmatpush1.bf16.msra.mxu0 0
    %1929 = vmatprep.subr.bf16.mxu0 0
    %1930 = vmatpush1.bf16.msra.mxu0 0
    %1931 = vmatprep.subr.bf16.mxu0 0
    %1932 = vmatpush1.bf16.msra.mxu0 0
    %1933 = vmatprep.subr.bf16.mxu0 0
    %1934 = vmatpush1.bf16.msra.mxu0 0
    %1935 = vmatprep.subr.bf16.mxu0 0
    %1936 = vmatpush1.bf16.msra.mxu0 %v1919
    %1937 = vmatprep.subr.bf16.mxu0 0
    %1938 = vmatpush2.bf16.msra.mxu0 0
    %1939 = vmatprep.subr.bf16.mxu0 0
    %1940 = vmatpush2.bf16.msra.mxu0 0
    %1941 = vmatprep.subr.bf16.mxu0 0
    %1942 = vmatpush2.bf16.msra.mxu0 0
    %1943 = vmatprep.subr.bf16.mxu0 0
    %1944 = vmatpush2.bf16.msra.mxu0 0
    %1945 = vmatprep.subr.bf16.mxu0 0
    %1946 = vmatpush2.bf16.msra.mxu0 0
    %1947 = vmatprep.subr.bf16.mxu0 0
    %1948 = vmatpush2.bf16.msra.mxu0 0
    %1949 = vmatprep.subr.bf16.mxu0 0
    %1950 = vmatpush2.bf16.msra.mxu0 0
    %1951 = vmatprep.subr.bf16.mxu0 0
    %1952 = vmatpush2.bf16.msra.mxu0 0
    %1953 = vmatprep.mubr.bf16.mxu0 0
    %1954 = vmatmul.mubr.bf16.gmra.mxu0 %v1916
    %v1955 = vpop.f32.mrf.mxu0
    %v1956 = vadd.f32 0.0, %v1955
    %v1957 = vpop.f32.mrf.mxu0
    %v1958 = vpop.f32.mrf.mxu0
    %v1959 = vpop.f32.mrf.mxu0
    %1960 = vdwg.mxu0
    %1962 = vrot.lane.b32.xlu0 %v1861, 96
    %v1963 = vpop.permute.xlu0 %1962
    %v1965 = vsel %vm547, %v1857, 0
    %v1968 = vsel %vm799, %v1963, 0
    %1970 = vmatprep.subr.bf16.mxu0 0
    %1971 = vmatpush1.bf16.msra.mxu0 0
    %1972 = vmatprep.subr.bf16.mxu0 0
    %1973 = vmatpush1.bf16.msra.mxu0 0
    %1974 = vmatprep.subr.bf16.mxu0 0
    %1975 = vmatpush1.bf16.msra.mxu0 0
    %1976 = vmatprep.subr.bf16.mxu0 0
    %1977 = vmatpush1.bf16.msra.mxu0 0
    %1978 = vmatprep.subr.bf16.mxu0 0
    %1979 = vmatpush1.bf16.msra.mxu0 0
    %1980 = vmatprep.subr.bf16.mxu0 0
    %1981 = vmatpush1.bf16.msra.mxu0 0
    %1982 = vmatprep.subr.bf16.mxu0 0
    %1983 = vmatpush1.bf16.msra.mxu0 0
    %1984 = vmatprep.subr.bf16.mxu0 0
    %1985 = vmatpush1.bf16.msra.mxu0 %v1968
    %1986 = vmatprep.subr.bf16.mxu0 0
    %1987 = vmatpush2.bf16.msra.mxu0 0
    %1988 = vmatprep.subr.bf16.mxu0 0
    %1989 = vmatpush2.bf16.msra.mxu0 0
    %1990 = vmatprep.subr.bf16.mxu0 0
    %1991 = vmatpush2.bf16.msra.mxu0 0
    %1992 = vmatprep.subr.bf16.mxu0 0
    %1993 = vmatpush2.bf16.msra.mxu0 0
    %1994 = vmatprep.subr.bf16.mxu0 0
    %1995 = vmatpush2.bf16.msra.mxu0 0
    %1996 = vmatprep.subr.bf16.mxu0 0
    %1997 = vmatpush2.bf16.msra.mxu0 0
    %1998 = vmatprep.subr.bf16.mxu0 0
    %1999 = vmatpush2.bf16.msra.mxu0 0
    %2000 = vmatprep.subr.bf16.mxu0 0
    %2001 = vmatpush2.bf16.msra.mxu0 0
    %2002 = vmatprep.mubr.bf16.mxu0 0
    %2003 = vmatmul.mubr.bf16.gmra.mxu0 %v1965
    %v2004 = vpop.f32.mrf.mxu0
    %v2005 = vadd.f32 0.0, %v2004
    %v2006 = vpop.f32.mrf.mxu0
    %v2007 = vpop.f32.mrf.mxu0
    %v2008 = vpop.f32.mrf.mxu0
    %2009 = vdwg.mxu0
    %2011 = vrot.lane.b32.xlu0 %v1862, 96
    %v2012 = vpop.permute.xlu0 %2011
    %v2014 = vsel %vm547, %v1858, 0
    %v2017 = vsel %vm799, %v2012, 0
    %2019 = vmatprep.subr.bf16.mxu0 0
    %2020 = vmatpush1.bf16.msra.mxu0 0
    %2021 = vmatprep.subr.bf16.mxu0 0
    %2022 = vmatpush1.bf16.msra.mxu0 0
    %2023 = vmatprep.subr.bf16.mxu0 0
    %2024 = vmatpush1.bf16.msra.mxu0 0
    %2025 = vmatprep.subr.bf16.mxu0 0
    %2026 = vmatpush1.bf16.msra.mxu0 0
    %2027 = vmatprep.subr.bf16.mxu0 0
    %2028 = vmatpush1.bf16.msra.mxu0 0
    %2029 = vmatprep.subr.bf16.mxu0 0
    %2030 = vmatpush1.bf16.msra.mxu0 0
    %2031 = vmatprep.subr.bf16.mxu0 0
    %2032 = vmatpush1.bf16.msra.mxu0 0
    %2033 = vmatprep.subr.bf16.mxu0 0
    %2034 = vmatpush1.bf16.msra.mxu0 %v2017
    %2035 = vmatprep.subr.bf16.mxu0 0
    %2036 = vmatpush2.bf16.msra.mxu0 0
    %2037 = vmatprep.subr.bf16.mxu0 0
    %2038 = vmatpush2.bf16.msra.mxu0 0
    %2039 = vmatprep.subr.bf16.mxu0 0
    %2040 = vmatpush2.bf16.msra.mxu0 0
    %2041 = vmatprep.subr.bf16.mxu0 0
    %2042 = vmatpush2.bf16.msra.mxu0 0
    %2043 = vmatprep.subr.bf16.mxu0 0
    %2044 = vmatpush2.bf16.msra.mxu0 0
    %2045 = vmatprep.subr.bf16.mxu0 0
    %2046 = vmatpush2.bf16.msra.mxu0 0
    %2047 = vmatprep.subr.bf16.mxu0 0
    %2048 = vmatpush2.bf16.msra.mxu0 0
    %2049 = vmatprep.subr.bf16.mxu0 0
    %2050 = vmatpush2.bf16.msra.mxu0 0
    %2051 = vmatprep.mubr.bf16.mxu0 0
    %2052 = vmatmul.mubr.bf16.gmra.mxu0 %v2014
    %v2053 = vpop.f32.mrf.mxu0
    %v2054 = vadd.f32 0.0, %v2053
    %v2055 = vpop.f32.mrf.mxu0
    %v2056 = vpop.f32.mrf.mxu0
    %v2057 = vpop.f32.mrf.mxu0
    %2058 = vdwg.mxu0
    %v2059 = vpack.c.bf16 %v1907, %v1907
    %v2060 = vpack.c.bf16 %v1956, %v1956
    %v2061 = vpack.c.bf16 %v2005, %v2005
    %v2062 = vpack.c.bf16 %v2054, %v2054
    %v2064 = vsel %vm547, %v2059, 0
    %2066 = vmatprep.subr.bf16.mxu0 0
    %2067 = vmatpush1.bf16.msra.mxu0 0
    %2068 = vmatprep.subr.bf16.mxu0 0
    %2069 = vmatpush1.bf16.msra.mxu0 0
    %2070 = vmatprep.subr.bf16.mxu0 0
    %2071 = vmatpush1.bf16.msra.mxu0 0
    %2072 = vmatprep.subr.bf16.mxu0 0
    %2073 = vmatpush1.bf16.msra.mxu0 0
    %2074 = vmatprep.subr.bf16.mxu0 0
    %2075 = vmatpush1.bf16.msra.mxu0 0
    %2076 = vmatprep.subr.bf16.mxu0 0
    %2077 = vmatpush1.bf16.msra.mxu0 0
    %2078 = vmatprep.subr.bf16.mxu0 0
    %2079 = vmatpush1.bf16.msra.mxu0 0
    %2080 = vmatprep.subr.bf16.mxu0 0
    %2081 = vmatpush1.bf16.msra.mxu0 %v998
    %2082 = vmatprep.subr.bf16.mxu0 0
    %2083 = vmatpush2.bf16.msra.mxu0 0
    %2084 = vmatprep.subr.bf16.mxu0 0
    %2085 = vmatpush2.bf16.msra.mxu0 0
    %2086 = vmatprep.subr.bf16.mxu0 0
    %2087 = vmatpush2.bf16.msra.mxu0 0
    %2088 = vmatprep.subr.bf16.mxu0 0
    %2089 = vmatpush2.bf16.msra.mxu0 0
    %2090 = vmatprep.subr.bf16.mxu0 0
    %2091 = vmatpush2.bf16.msra.mxu0 0
    %2092 = vmatprep.subr.bf16.mxu0 0
    %2093 = vmatpush2.bf16.msra.mxu0 0
    %2094 = vmatprep.subr.bf16.mxu0 0
    %2095 = vmatpush2.bf16.msra.mxu0 0
    %2096 = vmatprep.subr.bf16.mxu0 0
    %2097 = vmatpush2.bf16.msra.mxu0 0
    %2098 = vmatprep.mubr.bf16.mxu0 0
    %2099 = vmatmul.mubr.bf16.gmra.mxu0 %v2064
    %v2100 = vpop.f32.mrf.mxu0
    %v2101 = vadd.f32 0.0, %v2100
    %v2102 = vpop.f32.mrf.mxu0
    %v2103 = vpop.f32.mrf.mxu0
    %v2104 = vpop.f32.mrf.mxu0
    %2105 = vdwg.mxu0
    %v2107 = vsel %vm547, %v2060, 0
    %2109 = vmatprep.subr.bf16.mxu0 0
    %2110 = vmatpush1.bf16.msra.mxu0 0
    %2111 = vmatprep.subr.bf16.mxu0 0
    %2112 = vmatpush1.bf16.msra.mxu0 0
    %2113 = vmatprep.subr.bf16.mxu0 0
    %2114 = vmatpush1.bf16.msra.mxu0 0
    %2115 = vmatprep.subr.bf16.mxu0 0
    %2116 = vmatpush1.bf16.msra.mxu0 0
    %2117 = vmatprep.subr.bf16.mxu0 0
    %2118 = vmatpush1.bf16.msra.mxu0 0
    %2119 = vmatprep.subr.bf16.mxu0 0
    %2120 = vmatpush1.bf16.msra.mxu0 0
    %2121 = vmatprep.subr.bf16.mxu0 0
    %2122 = vmatpush1.bf16.msra.mxu0 0
    %2123 = vmatprep.subr.bf16.mxu0 0
    %2124 = vmatpush1.bf16.msra.mxu0 %v1044
    %2125 = vmatprep.subr.bf16.mxu0 0
    %2126 = vmatpush2.bf16.msra.mxu0 0
    %2127 = vmatprep.subr.bf16.mxu0 0
    %2128 = vmatpush2.bf16.msra.mxu0 0
    %2129 = vmatprep.subr.bf16.mxu0 0
    %2130 = vmatpush2.bf16.msra.mxu0 0
    %2131 = vmatprep.subr.bf16.mxu0 0
    %2132 = vmatpush2.bf16.msra.mxu0 0
    %2133 = vmatprep.subr.bf16.mxu0 0
    %2134 = vmatpush2.bf16.msra.mxu0 0
    %2135 = vmatprep.subr.bf16.mxu0 0
    %2136 = vmatpush2.bf16.msra.mxu0 0
    %2137 = vmatprep.subr.bf16.mxu0 0
    %2138 = vmatpush2.bf16.msra.mxu0 0
    %2139 = vmatprep.subr.bf16.mxu0 0
    %2140 = vmatpush2.bf16.msra.mxu0 0
    %2141 = vmatprep.mubr.bf16.mxu0 0
    %2142 = vmatmul.mubr.bf16.gmra.mxu0 %v2107
    %v2143 = vpop.f32.mrf.mxu0
    %v2144 = vadd.f32 0.0, %v2143
    %v2145 = vpop.f32.mrf.mxu0
    %v2146 = vpop.f32.mrf.mxu0
    %v2147 = vpop.f32.mrf.mxu0
    %2148 = vdwg.mxu0
    %v2150 = vsel %vm547, %v2061, 0
    %2152 = vmatprep.subr.bf16.mxu0 0
    %2153 = vmatpush1.bf16.msra.mxu0 0
    %2154 = vmatprep.subr.bf16.mxu0 0
    %2155 = vmatpush1.bf16.msra.mxu0 0
    %2156 = vmatprep.subr.bf16.mxu0 0
    %2157 = vmatpush1.bf16.msra.mxu0 0
    %2158 = vmatprep.subr.bf16.mxu0 0
    %2159 = vmatpush1.bf16.msra.mxu0 0
    %2160 = vmatprep.subr.bf16.mxu0 0
    %2161 = vmatpush1.bf16.msra.mxu0 0
    %2162 = vmatprep.subr.bf16.mxu0 0
    %2163 = vmatpush1.bf16.msra.mxu0 0
    %2164 = vmatprep.subr.bf16.mxu0 0
    %2165 = vmatpush1.bf16.msra.mxu0 0
    %2166 = vmatprep.subr.bf16.mxu0 0
    %2167 = vmatpush1.bf16.msra.mxu0 %v1090
    %2168 = vmatprep.subr.bf16.mxu0 0
    %2169 = vmatpush2.bf16.msra.mxu0 0
    %2170 = vmatprep.subr.bf16.mxu0 0
    %2171 = vmatpush2.bf16.msra.mxu0 0
    %2172 = vmatprep.subr.bf16.mxu0 0
    %2173 = vmatpush2.bf16.msra.mxu0 0
    %2174 = vmatprep.subr.bf16.mxu0 0
    %2175 = vmatpush2.bf16.msra.mxu0 0
    %2176 = vmatprep.subr.bf16.mxu0 0
    %2177 = vmatpush2.bf16.msra.mxu0 0
    %2178 = vmatprep.subr.bf16.mxu0 0
    %2179 = vmatpush2.bf16.msra.mxu0 0
    %2180 = vmatprep.subr.bf16.mxu0 0
    %2181 = vmatpush2.bf16.msra.mxu0 0
    %2182 = vmatprep.subr.bf16.mxu0 0
    %2183 = vmatpush2.bf16.msra.mxu0 0
    %2184 = vmatprep.mubr.bf16.mxu0 0
    %2185 = vmatmul.mubr.bf16.gmra.mxu0 %v2150
    %v2186 = vpop.f32.mrf.mxu0
    %v2187 = vadd.f32 0.0, %v2186
    %v2188 = vpop.f32.mrf.mxu0
    %v2189 = vpop.f32.mrf.mxu0
    %v2190 = vpop.f32.mrf.mxu0
    %2191 = vdwg.mxu0
    %v2193 = vsel %vm547, %v2062, 0
    %2195 = vmatprep.subr.bf16.mxu0 0
    %2196 = vmatpush1.bf16.msra.mxu0 0
    %2197 = vmatprep.subr.bf16.mxu0 0
    %2198 = vmatpush1.bf16.msra.mxu0 0
    %2199 = vmatprep.subr.bf16.mxu0 0
    %2200 = vmatpush1.bf16.msra.mxu0 0
    %2201 = vmatprep.subr.bf16.mxu0 0
    %2202 = vmatpush1.bf16.msra.mxu0 0
    %2203 = vmatprep.subr.bf16.mxu0 0
    %2204 = vmatpush1.bf16.msra.mxu0 0
    %2205 = vmatprep.subr.bf16.mxu0 0
    %2206 = vmatpush1.bf16.msra.mxu0 0
    %2207 = vmatprep.subr.bf16.mxu0 0
    %2208 = vmatpush1.bf16.msra.mxu0 0
    %2209 = vmatprep.subr.bf16.mxu0 0
    %2210 = vmatpush1.bf16.msra.mxu0 %v1136
    %2211 = vmatprep.subr.bf16.mxu0 0
    %2212 = vmatpush2.bf16.msra.mxu0 0
    %2213 = vmatprep.subr.bf16.mxu0 0
    %2214 = vmatpush2.bf16.msra.mxu0 0
    %2215 = vmatprep.subr.bf16.mxu0 0
    %2216 = vmatpush2.bf16.msra.mxu0 0
    %2217 = vmatprep.subr.bf16.mxu0 0
    %2218 = vmatpush2.bf16.msra.mxu0 0
    %2219 = vmatprep.subr.bf16.mxu0 0
    %2220 = vmatpush2.bf16.msra.mxu0 0
    %2221 = vmatprep.subr.bf16.mxu0 0
    %2222 = vmatpush2.bf16.msra.mxu0 0
    %2223 = vmatprep.subr.bf16.mxu0 0
    %2224 = vmatpush2.bf16.msra.mxu0 0
    %2225 = vmatprep.subr.bf16.mxu0 0
    %2226 = vmatpush2.bf16.msra.mxu0 0
    %2227 = vmatprep.mubr.bf16.mxu0 0
    %2228 = vmatmul.mubr.bf16.gmra.mxu0 %v2193
    %v2229 = vpop.f32.mrf.mxu0
    %v2230 = vadd.f32 0.0, %v2229
    %v2231 = vpop.f32.mrf.mxu0
    %v2232 = vpop.f32.mrf.mxu0
    %v2233 = vpop.f32.mrf.mxu0
    %2234 = vdwg.mxu0
    %v2235 = vsel %vm236, %v2101, 0.0
    %v2236 = vsel %vm236, %v2144, 0.0
    %v2237 = vadd.f32 %v2235, %v2236
    %v2238 = vsel %vm236, %v2187, 0.0
    %v2239 = vadd.f32 %v2237, %v2238
    %v2240 = vsel %vm236, %v2230, 0.0
    %v2241 = vadd.f32 %v2239, %v2240
    %v2242 = vadd.f32 %v2241, %v1189
    %v2243 = vadd.f32 %v1386, %v2242
    %v2244 = vsel %vm236, %v2243, 0.0
    %2245 = vadd.xlane.f32.xlu0 %v2244
    %v2246 = vpop.xlane.xlu0 %2245
    %v2247 = vmul.f32 %v2246, %v1196
    %v2248 = vsub.f32 %v2243, %v2247
    %v2249 = vmul.f32 %v2248, %v2248
    %v2250 = vsel %vm236, %v2249, 0.0
    %2251 = vadd.xlane.f32.xlu0 %v2250
    %v2252 = vpop.xlane.xlu0 %2251
    %v2253 = vmul.f32 %v2252, %v1196
    %v2254 = vadd.f32 %v2253, 1e-05
    %v2255 = vrsqrt.pop %v2254
    %v2256 = vmul.f32 %v2248, %v2255
    %v2257 = vmul.f32 %v2256, %v1211
    %v2258 = vadd.f32 %v2257, %v1218
    %v2259 = vpack.c.bf16 %v2258, %v2258
    %v2261 = vsel %vm236, %v2259, 0
    %2263 = vmatprep.subr.bf16.mxu0 0
    %2264 = vmatpush1.bf16.msra.mxu0 0
    %2265 = vmatprep.subr.bf16.mxu0 0
    %2266 = vmatpush1.bf16.msra.mxu0 0
    %2267 = vmatprep.subr.bf16.mxu0 0
    %2268 = vmatpush1.bf16.msra.mxu0 0
    %2269 = vmatprep.subr.bf16.mxu0 0
    %2270 = vmatpush1.bf16.msra.mxu0 0
    %2271 = vmatprep.subr.bf16.mxu0 0
    %2272 = vmatpush1.bf16.msra.mxu0 0
    %2273 = vmatprep.subr.bf16.mxu0 0
    %2274 = vmatpush1.bf16.msra.mxu0 0
    %2275 = vmatprep.subr.bf16.mxu0 0
    %2276 = vmatpush1.bf16.msra.mxu0 %v1237
    %2277 = vmatprep.subr.bf16.mxu0 0
    %2278 = vmatpush1.bf16.msra.mxu0 %v1236
    %2279 = vmatprep.subr.bf16.mxu0 0
    %2280 = vmatpush2.bf16.msra.mxu0 0
    %2281 = vmatprep.subr.bf16.mxu0 0
    %2282 = vmatpush2.bf16.msra.mxu0 0
    %2283 = vmatprep.subr.bf16.mxu0 0
    %2284 = vmatpush2.bf16.msra.mxu0 0
    %2285 = vmatprep.subr.bf16.mxu0 0
    %2286 = vmatpush2.bf16.msra.mxu0 0
    %2287 = vmatprep.subr.bf16.mxu0 0
    %2288 = vmatpush2.bf16.msra.mxu0 0
    %2289 = vmatprep.subr.bf16.mxu0 0
    %2290 = vmatpush2.bf16.msra.mxu0 0
    %2291 = vmatprep.subr.bf16.mxu0 0
    %2292 = vmatpush2.bf16.msra.mxu0 0
    %2293 = vmatprep.subr.bf16.mxu0 0
    %2294 = vmatpush2.bf16.msra.mxu0 0
    %2295 = vmatprep.mubr.bf16.mxu0 0
    %2296 = vmatmul.mubr.bf16.gmra.mxu0 %v2261
    %v2297 = vpop.f32.mrf.mxu0
    %v2298 = vadd.f32 %v1226, %v2297
    %v2299 = vpop.f32.mrf.mxu0
    %v2300 = vpop.f32.mrf.mxu0
    %v2301 = vpop.f32.mrf.mxu0
    %2302 = vdwg.mxu0
    %v2303 = vmax.f32 %v2298, 0.0
    %v2304 = vpack.c.bf16 %v2303, %v2303
    %v2306 = vsel %vm1315, %v2304, 0
    %2308 = vmatprep.subr.bf16.mxu0 0
    %2309 = vmatpush1.bf16.msra.mxu0 0
    %2310 = vmatprep.subr.bf16.mxu0 0
    %2311 = vmatpush1.bf16.msra.mxu0 0
    %2312 = vmatprep.subr.bf16.mxu0 0
    %2313 = vmatpush1.bf16.msra.mxu0 0
    %2314 = vmatprep.subr.bf16.mxu0 0
    %2315 = vmatpush1.bf16.msra.mxu0 0
    %2316 = vmatprep.subr.bf16.mxu0 0
    %2317 = vmatpush1.bf16.msra.mxu0 %v1310
    %2318 = vmatprep.subr.bf16.mxu0 0
    %2319 = vmatpush1.bf16.msra.mxu0 %v1309
    %2320 = vmatprep.subr.bf16.mxu0 0
    %2321 = vmatpush1.bf16.msra.mxu0 %v1308
    %2322 = vmatprep.subr.bf16.mxu0 0
    %2323 = vmatpush1.bf16.msra.mxu0 %v1307
    %2324 = vmatprep.subr.bf16.mxu0 0
    %2325 = vmatpush2.bf16.msra.mxu0 0
    %2326 = vmatprep.subr.bf16.mxu0 0
    %2327 = vmatpush2.bf16.msra.mxu0 0
    %2328 = vmatprep.subr.bf16.mxu0 0
    %2329 = vmatpush2.bf16.msra.mxu0 0
    %2330 = vmatprep.subr.bf16.mxu0 0
    %2331 = vmatpush2.bf16.msra.mxu0 0
    %2332 = vmatprep.subr.bf16.mxu0 0
    %2333 = vmatpush2.bf16.msra.mxu0 0
    %2334 = vmatprep.subr.bf16.mxu0 0
    %2335 = vmatpush2.bf16.msra.mxu0 0
    %2336 = vmatprep.subr.bf16.mxu0 0
    %2337 = vmatpush2.bf16.msra.mxu0 0
    %2338 = vmatprep.subr.bf16.mxu0 0
    %2339 = vmatpush2.bf16.msra.mxu0 0
    %2340 = vmatprep.mubr.bf16.mxu0 0
    %2341 = vmatmul.mubr.bf16.gmra.mxu0 %v2306
    %v2342 = vpop.f32.mrf.mxu0
    %v2343 = vadd.f32 %v1289, %v2342
    %v2344 = vpop.f32.mrf.mxu0
    %v2345 = vpop.f32.mrf.mxu0
    %v2346 = vpop.f32.mrf.mxu0
    %2347 = vdwg.mxu0
    %v2348 = vadd.f32 %v2258, %v2343
    %v2349 = vsel %vm236, %v2348, 0.0
    %2350 = vadd.xlane.f32.xlu0 %v2349
    %v2351 = vpop.xlane.xlu0 %2350
    %v2352 = vmul.f32 %v2351, %v1196
    %v2353 = vsub.f32 %v2348, %v2352
    %v2354 = vmul.f32 %v2353, %v2353
    %v2355 = vsel %vm236, %v2354, 0.0
    %2356 = vadd.xlane.f32.xlu0 %v2355
    %v2357 = vpop.xlane.xlu0 %2356
    %v2358 = vmul.f32 %v2357, %v1196
    %v2359 = vadd.f32 %v2358, 1e-05
    %v2360 = vrsqrt.pop %v2359
    %v2361 = vmul.f32 %v2353, %v2360
    %v2362 = vmul.f32 %v2361, %v1377
    %v2363 = vadd.f32 %v2362, %v1384
    %2364 = vst.msk [vmem:[#allocation13] sm:$0xff] %vm236, %v2363
    %s2365 = scalar_lea.vmem [#allocation2], 1
    %v2366 = vld [vmem:[%s2365] sm:$0x1]
    %v2368 = vlaneseq
    %v2369 = vshrl.u32 %v2368, 7
    %v2370 = vsub.s32 0, %v2369
    %v2371 = vrot.slane %v2366, %v2370
    %v2373 = vadd.f32 %v138, %v2371
    %s2374 = scalar_lea.vmem %s0, 8
    %v2375 = vld [vmem:[%s2374] sm:$0xff]
    %v2376 = vpack.c.bf16 %v2375, %v2375
    %v2378 = vsel %vm236, %v2376, 0
    %2380 = vmatprep.subr.bf16.mxu0 0
    %2381 = vmatpush1.bf16.msra.mxu0 0
    %2382 = vmatprep.subr.bf16.mxu0 0
    %2383 = vmatpush1.bf16.msra.mxu0 0
    %2384 = vmatprep.subr.bf16.mxu0 0
    %2385 = vmatpush1.bf16.msra.mxu0 0
    %2386 = vmatprep.subr.bf16.mxu0 0
    %2387 = vmatpush1.bf16.msra.mxu0 0
    %2388 = vmatprep.subr.bf16.mxu0 0
    %2389 = vmatpush1.bf16.msra.mxu0 0
    %2390 = vmatprep.subr.bf16.mxu0 0
    %2391 = vmatpush1.bf16.msra.mxu0 0
    %2392 = vmatprep.subr.bf16.mxu0 0
    %2393 = vmatpush1.bf16.msra.mxu0 %v233
    %2394 = vmatprep.subr.bf16.mxu0 0
    %2395 = vmatpush1.bf16.msra.mxu0 %v232
    %2396 = vmatprep.subr.bf16.mxu0 0
    %2397 = vmatpush2.bf16.msra.mxu0 0
    %2398 = vmatprep.subr.bf16.mxu0 0
    %2399 = vmatpush2.bf16.msra.mxu0 0
    %2400 = vmatprep.subr.bf16.mxu0 0
    %2401 = vmatpush2.bf16.msra.mxu0 0
    %2402 = vmatprep.subr.bf16.mxu0 0
    %2403 = vmatpush2.bf16.msra.mxu0 0
    %2404 = vmatprep.subr.bf16.mxu0 0
    %2405 = vmatpush2.bf16.msra.mxu0 0
    %2406 = vmatprep.subr.bf16.mxu0 0
    %2407 = vmatpush2.bf16.msra.mxu0 0
    %2408 = vmatprep.subr.bf16.mxu0 0
    %2409 = vmatpush2.bf16.msra.mxu0 0
    %2410 = vmatprep.subr.bf16.mxu0 0
    %2411 = vmatpush2.bf16.msra.mxu0 0
    %2412 = vmatprep.mubr.bf16.mxu0 0
    %2413 = vmatmul.mubr.bf16.gmra.mxu0 %v2378
    %v2414 = vpop.f32.mrf.mxu0
    %v2415 = vadd.f32 %v207, %v2414
    %v2416 = vpop.f32.mrf.mxu0
    %v2417 = vpop.f32.mrf.mxu0
    %v2418 = vpop.f32.mrf.mxu0
    %2419 = vdwg.mxu0
    %2420 = vmatprep.subr.bf16.mxu0 0
    %2421 = vmatpush1.bf16.msra.mxu0 0
    %2422 = vmatprep.subr.bf16.mxu0 0
    %2423 = vmatpush1.bf16.msra.mxu0 0
    %2424 = vmatprep.subr.bf16.mxu0 0
    %2425 = vmatpush1.bf16.msra.mxu0 0
    %2426 = vmatprep.subr.bf16.mxu0 0
    %2427 = vmatpush1.bf16.msra.mxu0 0
    %2428 = vmatprep.subr.bf16.mxu0 0
    %2429 = vmatpush1.bf16.msra.mxu0 0
    %2430 = vmatprep.subr.bf16.mxu0 0
    %2431 = vmatpush1.bf16.msra.mxu0 0
    %2432 = vmatprep.subr.bf16.mxu0 0
    %2433 = vmatpush1.bf16.msra.mxu0 %v289
    %2434 = vmatprep.subr.bf16.mxu0 0
    %2435 = vmatpush1.bf16.msra.mxu0 %v288
    %2436 = vmatprep.subr.bf16.mxu0 0
    %2437 = vmatpush2.bf16.msra.mxu0 0
    %2438 = vmatprep.subr.bf16.mxu0 0
    %2439 = vmatpush2.bf16.msra.mxu0 0
    %2440 = vmatprep.subr.bf16.mxu0 0
    %2441 = vmatpush2.bf16.msra.mxu0 0
    %2442 = vmatprep.subr.bf16.mxu0 0
    %2443 = vmatpush2.bf16.msra.mxu0 0
    %2444 = vmatprep.subr.bf16.mxu0 0
    %2445 = vmatpush2.bf16.msra.mxu0 0
    %2446 = vmatprep.subr.bf16.mxu0 0
    %2447 = vmatpush2.bf16.msra.mxu0 0
    %2448 = vmatprep.subr.bf16.mxu0 0
    %2449 = vmatpush2.bf16.msra.mxu0 0
    %2450 = vmatprep.subr.bf16.mxu0 0
    %2451 = vmatpush2.bf16.msra.mxu0 0
    %2452 = vmatprep.mubr.bf16.mxu0 0
    %2453 = vmatmul.mubr.bf16.gmra.mxu0 %v2378
    %v2454 = vpop.f32.mrf.mxu0
    %v2455 = vadd.f32 %v211, %v2454
    %v2456 = vpop.f32.mrf.mxu0
    %v2457 = vpop.f32.mrf.mxu0
    %v2458 = vpop.f32.mrf.mxu0
    %2459 = vdwg.mxu0
    %2460 = vmatprep.subr.bf16.mxu0 0
    %2461 = vmatpush1.bf16.msra.mxu0 0
    %2462 = vmatprep.subr.bf16.mxu0 0
    %2463 = vmatpush1.bf16.msra.mxu0 0
    %2464 = vmatprep.subr.bf16.mxu0 0
    %2465 = vmatpush1.bf16.msra.mxu0 0
    %2466 = vmatprep.subr.bf16.mxu0 0
    %2467 = vmatpush1.bf16.msra.mxu0 0
    %2468 = vmatprep.subr.bf16.mxu0 0
    %2469 = vmatpush1.bf16.msra.mxu0 0
    %2470 = vmatprep.subr.bf16.mxu0 0
    %2471 = vmatpush1.bf16.msra.mxu0 0
    %2472 = vmatprep.subr.bf16.mxu0 0
    %2473 = vmatpush1.bf16.msra.mxu0 %v341
    %2474 = vmatprep.subr.bf16.mxu0 0
    %2475 = vmatpush1.bf16.msra.mxu0 %v340
    %2476 = vmatprep.subr.bf16.mxu0 0
    %2477 = vmatpush2.bf16.msra.mxu0 0
    %2478 = vmatprep.subr.bf16.mxu0 0
    %2479 = vmatpush2.bf16.msra.mxu0 0
    %2480 = vmatprep.subr.bf16.mxu0 0
    %2481 = vmatpush2.bf16.msra.mxu0 0
    %2482 = vmatprep.subr.bf16.mxu0 0
    %2483 = vmatpush2.bf16.msra.mxu0 0
    %2484 = vmatprep.subr.bf16.mxu0 0
    %2485 = vmatpush2.bf16.msra.mxu0 0
    %2486 = vmatprep.subr.bf16.mxu0 0
    %2487 = vmatpush2.bf16.msra.mxu0 0
    %2488 = vmatprep.subr.bf16.mxu0 0
    %2489 = vmatpush2.bf16.msra.mxu0 0
    %2490 = vmatprep.subr.bf16.mxu0 0
    %2491 = vmatpush2.bf16.msra.mxu0 0
    %2492 = vmatprep.mubr.bf16.mxu0 0
    %2493 = vmatmul.mubr.bf16.gmra.mxu0 %v2378
    %v2494 = vpop.f32.mrf.mxu0
    %v2495 = vadd.f32 %v215, %v2494
    %v2496 = vpop.f32.mrf.mxu0
    %v2497 = vpop.f32.mrf.mxu0
    %v2498 = vpop.f32.mrf.mxu0
    %2499 = vdwg.mxu0
    %2500 = vmatprep.subr.bf16.mxu0 0
    %2501 = vmatpush1.bf16.msra.mxu0 0
    %2502 = vmatprep.subr.bf16.mxu0 0
    %2503 = vmatpush1.bf16.msra.mxu0 0
    %2504 = vmatprep.subr.bf16.mxu0 0
    %2505 = vmatpush1.bf16.msra.mxu0 0
    %2506 = vmatprep.subr.bf16.mxu0 0
    %2507 = vmatpush1.bf16.msra.mxu0 0
    %2508 = vmatprep.subr.bf16.mxu0 0
    %2509 = vmatpush1.bf16.msra.mxu0 0
    %2510 = vmatprep.subr.bf16.mxu0 0
    %2511 = vmatpush1.bf16.msra.mxu0 0
    %2512 = vmatprep.subr.bf16.mxu0 0
    %2513 = vmatpush1.bf16.msra.mxu0 %v393
    %2514 = vmatprep.subr.bf16.mxu0 0
    %2515 = vmatpush1.bf16.msra.mxu0 %v392
    %2516 = vmatprep.subr.bf16.mxu0 0
    %2517 = vmatpush2.bf16.msra.mxu0 0
    %2518 = vmatprep.subr.bf16.mxu0 0
    %2519 = vmatpush2.bf16.msra.mxu0 0
    %2520 = vmatprep.subr.bf16.mxu0 0
    %2521 = vmatpush2.bf16.msra.mxu0 0
    %2522 = vmatprep.subr.bf16.mxu0 0
    %2523 = vmatpush2.bf16.msra.mxu0 0
    %2524 = vmatprep.subr.bf16.mxu0 0
    %2525 = vmatpush2.bf16.msra.mxu0 0
    %2526 = vmatprep.subr.bf16.mxu0 0
    %2527 = vmatpush2.bf16.msra.mxu0 0
    %2528 = vmatprep.subr.bf16.mxu0 0
    %2529 = vmatpush2.bf16.msra.mxu0 0
    %2530 = vmatprep.subr.bf16.mxu0 0
    %2531 = vmatpush2.bf16.msra.mxu0 0
    %2532 = vmatprep.mubr.bf16.mxu0 0
    %2533 = vmatmul.mubr.bf16.gmra.mxu0 %v2378
    %v2534 = vpop.f32.mrf.mxu0
    %v2535 = vadd.f32 %v219, %v2534
    %v2536 = vpop.f32.mrf.mxu0
    %v2537 = vpop.f32.mrf.mxu0
    %v2538 = vpop.f32.mrf.mxu0
    %2539 = vdwg.mxu0
    %v2540 = vmul.f32 %v2415, %v139
    %v2541 = vmul.f32 %v2455, %v140
    %v2542 = vmul.f32 %v2495, %v141
    %v2543 = vmul.f32 %v2535, %v142
    %v2544 = vmul.f32 %v2415, %v445
    %v2545 = vmul.f32 %v2455, %v447
    %v2546 = vmul.f32 %v2495, %v449
    %v2547 = vmul.f32 %v2535, %v451
    %2552 = vrot.lane.b32.xlu0 %v2544, 120
    %v2553 = vpop.permute.xlu0 %2552
    %2554 = vrot.lane.b32.xlu0 %v2545, 120
    %v2555 = vpop.permute.xlu0 %2554
    %2556 = vrot.lane.b32.xlu0 %v2546, 120
    %v2557 = vpop.permute.xlu0 %2556
    %2558 = vrot.lane.b32.xlu0 %v2547, 120
    %v2559 = vpop.permute.xlu0 %2558
    %v2564 = vadd.f32 %v2540, %v2553
    %v2565 = vadd.f32 %v2541, %v2555
    %v2566 = vadd.f32 %v2542, %v2557
    %v2567 = vadd.f32 %v2543, %v2559
    %v2568 = vmul.f32 %v2415, %v485
    %v2569 = vmul.f32 %v2455, %v487
    %v2570 = vmul.f32 %v2495, %v489
    %v2571 = vmul.f32 %v2535, %v491
    %v2572 = vmul.f32 %v2415, %v501
    %v2573 = vmul.f32 %v2455, %v503
    %v2574 = vmul.f32 %v2495, %v505
    %v2575 = vmul.f32 %v2535, %v507
    %2580 = vrot.lane.b32.xlu0 %v2572, 120
    %v2581 = vpop.permute.xlu0 %2580
    %2582 = vrot.lane.b32.xlu0 %v2573, 120
    %v2583 = vpop.permute.xlu0 %2582
    %2584 = vrot.lane.b32.xlu0 %v2574, 120
    %v2585 = vpop.permute.xlu0 %2584
    %2586 = vrot.lane.b32.xlu0 %v2575, 120
    %v2587 = vpop.permute.xlu0 %2586
    %v2592 = vadd.f32 %v2568, %v2581
    %v2593 = vadd.f32 %v2569, %v2583
    %v2594 = vadd.f32 %v2570, %v2585
    %v2595 = vadd.f32 %v2571, %v2587
    %v2596 = vpack.c.bf16 %v2564, %v2564
    %v2597 = vpack.c.bf16 %v2565, %v2565
    %v2598 = vpack.c.bf16 %v2566, %v2566
    %v2599 = vpack.c.bf16 %v2567, %v2567
    %v2600 = vpack.c.bf16 %v2592, %v2592
    %v2601 = vpack.c.bf16 %v2593, %v2593
    %v2602 = vpack.c.bf16 %v2594, %v2594
    %v2603 = vpack.c.bf16 %v2595, %v2595
    %2605 = vrot.lane.b32.xlu0 %v2600, 112
    %v2606 = vpop.permute.xlu0 %2605
    %v2608 = vsel %vm547, %v2596, 0
    %v2611 = vsel %vm547, %v2606, 0
    %2613 = vmatprep.subr.bf16.mxu0 0
    %2614 = vmatpush1.bf16.xpose.msra.mxu0 0
    %2615 = vmatprep.subr.bf16.mxu0 0
    %2616 = vmatpush1.bf16.xpose.msra.mxu0 0
    %2617 = vmatprep.subr.bf16.mxu0 0
    %2618 = vmatpush1.bf16.xpose.msra.mxu0 0
    %2619 = vmatprep.subr.bf16.mxu0 0
    %2620 = vmatpush1.bf16.xpose.msra.mxu0 0
    %2621 = vmatprep.subr.bf16.mxu0 0
    %2622 = vmatpush1.bf16.xpose.msra.mxu0 0
    %2623 = vmatprep.subr.bf16.mxu0 0
    %2624 = vmatpush1.bf16.xpose.msra.mxu0 0
    %2625 = vmatprep.subr.bf16.mxu0 0
    %2626 = vmatpush1.bf16.xpose.msra.mxu0 0
    %2627 = vmatprep.subr.bf16.mxu0 0
    %2628 = vmatpush1.bf16.xpose.msra.mxu0 %v2611
    %2629 = vmatprep.subr.bf16.mxu0 0
    %2630 = vmatpush2.bf16.xpose.msra.mxu0 0
    %2631 = vmatprep.subr.bf16.mxu0 0
    %2632 = vmatpush2.bf16.xpose.msra.mxu0 0
    %2633 = vmatprep.subr.bf16.mxu0 0
    %2634 = vmatpush2.bf16.xpose.msra.mxu0 0
    %2635 = vmatprep.subr.bf16.mxu0 0
    %2636 = vmatpush2.bf16.xpose.msra.mxu0 0
    %2637 = vmatprep.subr.bf16.mxu0 0
    %2638 = vmatpush2.bf16.xpose.msra.mxu0 0
    %2639 = vmatprep.subr.bf16.mxu0 0
    %2640 = vmatpush2.bf16.xpose.msra.mxu0 0
    %2641 = vmatprep.subr.bf16.mxu0 0
    %2642 = vmatpush2.bf16.xpose.msra.mxu0 0
    %2643 = vmatprep.subr.bf16.mxu0 0
    %2644 = vmatpush2.bf16.xpose.msra.mxu0 0
    %2645 = vmatprep.mubr.bf16.mxu0 0
    %2646 = vmatmul.mubr.bf16.gmra.mxu0 %v2608
    %v2647 = vpop.f32.mrf.mxu0
    %v2648 = vadd.f32 %v2373, %v2647
    %v2649 = vpop.f32.mrf.mxu0
    %v2650 = vpop.f32.mrf.mxu0
    %v2651 = vpop.f32.mrf.mxu0
    %2652 = vdwg.mxu0
    %2654 = vrot.lane.b32.xlu0 %v2601, 112
    %v2655 = vpop.permute.xlu0 %2654
    %v2657 = vsel %vm547, %v2597, 0
    %v2660 = vsel %vm547, %v2655, 0
    %2662 = vmatprep.subr.bf16.mxu0 0
    %2663 = vmatpush1.bf16.xpose.msra.mxu0 0
    %2664 = vmatprep.subr.bf16.mxu0 0
    %2665 = vmatpush1.bf16.xpose.msra.mxu0 0
    %2666 = vmatprep.subr.bf16.mxu0 0
    %2667 = vmatpush1.bf16.xpose.msra.mxu0 0
    %2668 = vmatprep.subr.bf16.mxu0 0
    %2669 = vmatpush1.bf16.xpose.msra.mxu0 0
    %2670 = vmatprep.subr.bf16.mxu0 0
    %2671 = vmatpush1.bf16.xpose.msra.mxu0 0
    %2672 = vmatprep.subr.bf16.mxu0 0
    %2673 = vmatpush1.bf16.xpose.msra.mxu0 0
    %2674 = vmatprep.subr.bf16.mxu0 0
    %2675 = vmatpush1.bf16.xpose.msra.mxu0 0
    %2676 = vmatprep.subr.bf16.mxu0 0
    %2677 = vmatpush1.bf16.xpose.msra.mxu0 %v2660
    %2678 = vmatprep.subr.bf16.mxu0 0
    %2679 = vmatpush2.bf16.xpose.msra.mxu0 0
    %2680 = vmatprep.subr.bf16.mxu0 0
    %2681 = vmatpush2.bf16.xpose.msra.mxu0 0
    %2682 = vmatprep.subr.bf16.mxu0 0
    %2683 = vmatpush2.bf16.xpose.msra.mxu0 0
    %2684 = vmatprep.subr.bf16.mxu0 0
    %2685 = vmatpush2.bf16.xpose.msra.mxu0 0
    %2686 = vmatprep.subr.bf16.mxu0 0
    %2687 = vmatpush2.bf16.xpose.msra.mxu0 0
    %2688 = vmatprep.subr.bf16.mxu0 0
    %2689 = vmatpush2.bf16.xpose.msra.mxu0 0
    %2690 = vmatprep.subr.bf16.mxu0 0
    %2691 = vmatpush2.bf16.xpose.msra.mxu0 0
    %2692 = vmatprep.subr.bf16.mxu0 0
    %2693 = vmatpush2.bf16.xpose.msra.mxu0 0
    %2694 = vmatprep.mubr.bf16.mxu0 0
    %2695 = vmatmul.mubr.bf16.gmra.mxu0 %v2657
    %v2696 = vpop.f32.mrf.mxu0
    %v2697 = vadd.f32 %v2373, %v2696
    %v2698 = vpop.f32.mrf.mxu0
    %v2699 = vpop.f32.mrf.mxu0
    %v2700 = vpop.f32.mrf.mxu0
    %2701 = vdwg.mxu0
    %2703 = vrot.lane.b32.xlu0 %v2602, 112
    %v2704 = vpop.permute.xlu0 %2703
    %v2706 = vsel %vm547, %v2598, 0
    %v2709 = vsel %vm547, %v2704, 0
    %2711 = vmatprep.subr.bf16.mxu0 0
    %2712 = vmatpush1.bf16.xpose.msra.mxu0 0
    %2713 = vmatprep.subr.bf16.mxu0 0
    %2714 = vmatpush1.bf16.xpose.msra.mxu0 0
    %2715 = vmatprep.subr.bf16.mxu0 0
    %2716 = vmatpush1.bf16.xpose.msra.mxu0 0
    %2717 = vmatprep.subr.bf16.mxu0 0
    %2718 = vmatpush1.bf16.xpose.msra.mxu0 0
    %2719 = vmatprep.subr.bf16.mxu0 0
    %2720 = vmatpush1.bf16.xpose.msra.mxu0 0
    %2721 = vmatprep.subr.bf16.mxu0 0
    %2722 = vmatpush1.bf16.xpose.msra.mxu0 0
    %2723 = vmatprep.subr.bf16.mxu0 0
    %2724 = vmatpush1.bf16.xpose.msra.mxu0 0
    %2725 = vmatprep.subr.bf16.mxu0 0
    %2726 = vmatpush1.bf16.xpose.msra.mxu0 %v2709
    %2727 = vmatprep.subr.bf16.mxu0 0
    %2728 = vmatpush2.bf16.xpose.msra.mxu0 0
    %2729 = vmatprep.subr.bf16.mxu0 0
    %2730 = vmatpush2.bf16.xpose.msra.mxu0 0
    %2731 = vmatprep.subr.bf16.mxu0 0
    %2732 = vmatpush2.bf16.xpose.msra.mxu0 0
    %2733 = vmatprep.subr.bf16.mxu0 0
    %2734 = vmatpush2.bf16.xpose.msra.mxu0 0
    %2735 = vmatprep.subr.bf16.mxu0 0
    %2736 = vmatpush2.bf16.xpose.msra.mxu0 0
    %2737 = vmatprep.subr.bf16.mxu0 0
    %2738 = vmatpush2.bf16.xpose.msra.mxu0 0
    %2739 = vmatprep.subr.bf16.mxu0 0
    %2740 = vmatpush2.bf16.xpose.msra.mxu0 0
    %2741 = vmatprep.subr.bf16.mxu0 0
    %2742 = vmatpush2.bf16.xpose.msra.mxu0 0
    %2743 = vmatprep.mubr.bf16.mxu0 0
    %2744 = vmatmul.mubr.bf16.gmra.mxu0 %v2706
    %v2745 = vpop.f32.mrf.mxu0
    %v2746 = vadd.f32 %v2373, %v2745
    %v2747 = vpop.f32.mrf.mxu0
    %v2748 = vpop.f32.mrf.mxu0
    %v2749 = vpop.f32.mrf.mxu0
    %2750 = vdwg.mxu0
    %2752 = vrot.lane.b32.xlu0 %v2603, 112
    %v2753 = vpop.permute.xlu0 %2752
    %v2755 = vsel %vm547, %v2599, 0
    %v2758 = vsel %vm547, %v2753, 0
    %2760 = vmatprep.subr.bf16.mxu0 0
    %2761 = vmatpush1.bf16.xpose.msra.mxu0 0
    %2762 = vmatprep.subr.bf16.mxu0 0
    %2763 = vmatpush1.bf16.xpose.msra.mxu0 0
    %2764 = vmatprep.subr.bf16.mxu0 0
    %2765 = vmatpush1.bf16.xpose.msra.mxu0 0
    %2766 = vmatprep.subr.bf16.mxu0 0
    %2767 = vmatpush1.bf16.xpose.msra.mxu0 0
    %2768 = vmatprep.subr.bf16.mxu0 0
    %2769 = vmatpush1.bf16.xpose.msra.mxu0 0
    %2770 = vmatprep.subr.bf16.mxu0 0
    %2771 = vmatpush1.bf16.xpose.msra.mxu0 0
    %2772 = vmatprep.subr.bf16.mxu0 0
    %2773 = vmatpush1.bf16.xpose.msra.mxu0 0
    %2774 = vmatprep.subr.bf16.mxu0 0
    %2775 = vmatpush1.bf16.xpose.msra.mxu0 %v2758
    %2776 = vmatprep.subr.bf16.mxu0 0
    %2777 = vmatpush2.bf16.xpose.msra.mxu0 0
    %2778 = vmatprep.subr.bf16.mxu0 0
    %2779 = vmatpush2.bf16.xpose.msra.mxu0 0
    %2780 = vmatprep.subr.bf16.mxu0 0
    %2781 = vmatpush2.bf16.xpose.msra.mxu0 0
    %2782 = vmatprep.subr.bf16.mxu0 0
    %2783 = vmatpush2.bf16.xpose.msra.mxu0 0
    %2784 = vmatprep.subr.bf16.mxu0 0
    %2785 = vmatpush2.bf16.xpose.msra.mxu0 0
    %2786 = vmatprep.subr.bf16.mxu0 0
    %2787 = vmatpush2.bf16.xpose.msra.mxu0 0
    %2788 = vmatprep.subr.bf16.mxu0 0
    %2789 = vmatpush2.bf16.xpose.msra.mxu0 0
    %2790 = vmatprep.subr.bf16.mxu0 0
    %2791 = vmatpush2.bf16.xpose.msra.mxu0 0
    %2792 = vmatprep.mubr.bf16.mxu0 0
    %2793 = vmatmul.mubr.bf16.gmra.mxu0 %v2755
    %v2794 = vpop.f32.mrf.mxu0
    %v2795 = vadd.f32 %v2373, %v2794
    %v2796 = vpop.f32.mrf.mxu0
    %v2797 = vpop.f32.mrf.mxu0
    %v2798 = vpop.f32.mrf.mxu0
    %2799 = vdwg.mxu0
    %v2800 = vsel %vm547, %v2648, -inf
    %2801 = vmax.xlane.f32.xlu0 %v2800
    %v2802 = vpop.xlane.xlu0 %2801
    %v2803 = vsel %vm547, %v2697, -inf
    %2804 = vmax.xlane.f32.xlu0 %v2803
    %v2805 = vpop.xlane.xlu0 %2804
    %v2806 = vsel %vm547, %v2746, -inf
    %2807 = vmax.xlane.f32.xlu0 %v2806
    %v2808 = vpop.xlane.xlu0 %2807
    %v2809 = vsel %vm547, %v2795, -inf
    %2810 = vmax.xlane.f32.xlu0 %v2809
    %v2811 = vpop.xlane.xlu0 %2810
    %v2812 = vsub.f32 %v2648, %v2802
    %v2813 = vsub.f32 %v2697, %v2805
    %v2814 = vsub.f32 %v2746, %v2808
    %v2815 = vsub.f32 %v2795, %v2811
    %v2816 = vmul.f32 %v2812, 1.442695
    %v2817 = vpow.pop %v2816
    %v2818 = vmul.f32 %v2813, 1.442695
    %v2819 = vpow.pop %v2818
    %v2820 = vmul.f32 %v2814, 1.442695
    %v2821 = vpow.pop %v2820
    %v2822 = vmul.f32 %v2815, 1.442695
    %v2823 = vpow.pop %v2822
    %v2824 = vsel %vm547, %v2817, 0.0
    %2825 = vadd.xlane.f32.xlu0 %v2824
    %v2826 = vpop.xlane.xlu0 %2825
    %v2827 = vsel %vm547, %v2819, 0.0
    %2828 = vadd.xlane.f32.xlu0 %v2827
    %v2829 = vpop.xlane.xlu0 %2828
    %v2830 = vsel %vm547, %v2821, 0.0
    %2831 = vadd.xlane.f32.xlu0 %v2830
    %v2832 = vpop.xlane.xlu0 %2831
    %v2833 = vsel %vm547, %v2823, 0.0
    %2834 = vadd.xlane.f32.xlu0 %v2833
    %v2835 = vpop.xlane.xlu0 %2834
    %v2836 = vrcp.pop %v2826
    %v2837 = vrcp.pop %v2829
    %v2838 = vrcp.pop %v2832
    %v2839 = vrcp.pop %v2835
    %v2840 = vmul.f32 %v2817, %v2836
    %v2841 = vmul.f32 %v2819, %v2837
    %v2842 = vmul.f32 %v2821, %v2838
    %v2843 = vmul.f32 %v2823, %v2839
    %v2844 = vpack.c.bf16 %v2840, %v2840
    %v2845 = vpack.c.bf16 %v2841, %v2841
    %v2846 = vpack.c.bf16 %v2842, %v2842
    %v2847 = vpack.c.bf16 %v2843, %v2843
    %v2848 = vpack.c.bf16 %v2415, %v2415
    %v2849 = vpack.c.bf16 %v2455, %v2455
    %v2850 = vpack.c.bf16 %v2495, %v2495
    %v2851 = vpack.c.bf16 %v2535, %v2535
    %2853 = vrot.lane.b32.xlu0 %v2848, 96
    %v2854 = vpop.permute.xlu0 %2853
    %v2856 = vsel %vm547, %v2844, 0
    %v2859 = vsel %vm799, %v2854, 0
    %2861 = vmatprep.subr.bf16.mxu0 0
    %2862 = vmatpush1.bf16.msra.mxu0 0
    %2863 = vmatprep.subr.bf16.mxu0 0
    %2864 = vmatpush1.bf16.msra.mxu0 0
    %2865 = vmatprep.subr.bf16.mxu0 0
    %2866 = vmatpush1.bf16.msra.mxu0 0
    %2867 = vmatprep.subr.bf16.mxu0 0
    %2868 = vmatpush1.bf16.msra.mxu0 0
    %2869 = vmatprep.subr.bf16.mxu0 0
    %2870 = vmatpush1.bf16.msra.mxu0 0
    %2871 = vmatprep.subr.bf16.mxu0 0
    %2872 = vmatpush1.bf16.msra.mxu0 0
    %2873 = vmatprep.subr.bf16.mxu0 0
    %2874 = vmatpush1.bf16.msra.mxu0 0
    %2875 = vmatprep.subr.bf16.mxu0 0
    %2876 = vmatpush1.bf16.msra.mxu0 %v2859
    %2877 = vmatprep.subr.bf16.mxu0 0
    %2878 = vmatpush2.bf16.msra.mxu0 0
    %2879 = vmatprep.subr.bf16.mxu0 0
    %2880 = vmatpush2.bf16.msra.mxu0 0
    %2881 = vmatprep.subr.bf16.mxu0 0
    %2882 = vmatpush2.bf16.msra.mxu0 0
    %2883 = vmatprep.subr.bf16.mxu0 0
    %2884 = vmatpush2.bf16.msra.mxu0 0
    %2885 = vmatprep.subr.bf16.mxu0 0
    %2886 = vmatpush2.bf16.msra.mxu0 0
    %2887 = vmatprep.subr.bf16.mxu0 0
    %2888 = vmatpush2.bf16.msra.mxu0 0
    %2889 = vmatprep.subr.bf16.mxu0 0
    %2890 = vmatpush2.bf16.msra.mxu0 0
    %2891 = vmatprep.subr.bf16.mxu0 0
    %2892 = vmatpush2.bf16.msra.mxu0 0
    %2893 = vmatprep.mubr.bf16.mxu0 0
    %2894 = vmatmul.mubr.bf16.gmra.mxu0 %v2856
    %v2895 = vpop.f32.mrf.mxu0
    %v2896 = vadd.f32 0.0, %v2895
    %v2897 = vpop.f32.mrf.mxu0
    %v2898 = vpop.f32.mrf.mxu0
    %v2899 = vpop.f32.mrf.mxu0
    %2900 = vdwg.mxu0
    %2902 = vrot.lane.b32.xlu0 %v2849, 96
    %v2903 = vpop.permute.xlu0 %2902
    %v2905 = vsel %vm547, %v2845, 0
    %v2908 = vsel %vm799, %v2903, 0
    %2910 = vmatprep.subr.bf16.mxu0 0
    %2911 = vmatpush1.bf16.msra.mxu0 0
    %2912 = vmatprep.subr.bf16.mxu0 0
    %2913 = vmatpush1.bf16.msra.mxu0 0
    %2914 = vmatprep.subr.bf16.mxu0 0
    %2915 = vmatpush1.bf16.msra.mxu0 0
    %2916 = vmatprep.subr.bf16.mxu0 0
    %2917 = vmatpush1.bf16.msra.mxu0 0
    %2918 = vmatprep.subr.bf16.mxu0 0
    %2919 = vmatpush1.bf16.msra.mxu0 0
    %2920 = vmatprep.subr.bf16.mxu0 0
    %2921 = vmatpush1.bf16.msra.mxu0 0
    %2922 = vmatprep.subr.bf16.mxu0 0
    %2923 = vmatpush1.bf16.msra.mxu0 0
    %2924 = vmatprep.subr.bf16.mxu0 0
    %2925 = vmatpush1.bf16.msra.mxu0 %v2908
    %2926 = vmatprep.subr.bf16.mxu0 0
    %2927 = vmatpush2.bf16.msra.mxu0 0
    %2928 = vmatprep.subr.bf16.mxu0 0
    %2929 = vmatpush2.bf16.msra.mxu0 0
    %2930 = vmatprep.subr.bf16.mxu0 0
    %2931 = vmatpush2.bf16.msra.mxu0 0
    %2932 = vmatprep.subr.bf16.mxu0 0
    %2933 = vmatpush2.bf16.msra.mxu0 0
    %2934 = vmatprep.subr.bf16.mxu0 0
    %2935 = vmatpush2.bf16.msra.mxu0 0
    %2936 = vmatprep.subr.bf16.mxu0 0
    %2937 = vmatpush2.bf16.msra.mxu0 0
    %2938 = vmatprep.subr.bf16.mxu0 0
    %2939 = vmatpush2.bf16.msra.mxu0 0
    %2940 = vmatprep.subr.bf16.mxu0 0
    %2941 = vmatpush2.bf16.msra.mxu0 0
    %2942 = vmatprep.mubr.bf16.mxu0 0
    %2943 = vmatmul.mubr.bf16.gmra.mxu0 %v2905
    %v2944 = vpop.f32.mrf.mxu0
    %v2945 = vadd.f32 0.0, %v2944
    %v2946 = vpop.f32.mrf.mxu0
    %v2947 = vpop.f32.mrf.mxu0
    %v2948 = vpop.f32.mrf.mxu0
    %2949 = vdwg.mxu0
    %2951 = vrot.lane.b32.xlu0 %v2850, 96
    %v2952 = vpop.permute.xlu0 %2951
    %v2954 = vsel %vm547, %v2846, 0
    %v2957 = vsel %vm799, %v2952, 0
    %2959 = vmatprep.subr.bf16.mxu0 0
    %2960 = vmatpush1.bf16.msra.mxu0 0
    %2961 = vmatprep.subr.bf16.mxu0 0
    %2962 = vmatpush1.bf16.msra.mxu0 0
    %2963 = vmatprep.subr.bf16.mxu0 0
    %2964 = vmatpush1.bf16.msra.mxu0 0
    %2965 = vmatprep.subr.bf16.mxu0 0
    %2966 = vmatpush1.bf16.msra.mxu0 0
    %2967 = vmatprep.subr.bf16.mxu0 0
    %2968 = vmatpush1.bf16.msra.mxu0 0
    %2969 = vmatprep.subr.bf16.mxu0 0
    %2970 = vmatpush1.bf16.msra.mxu0 0
    %2971 = vmatprep.subr.bf16.mxu0 0
    %2972 = vmatpush1.bf16.msra.mxu0 0
    %2973 = vmatprep.subr.bf16.mxu0 0
    %2974 = vmatpush1.bf16.msra.mxu0 %v2957
    %2975 = vmatprep.subr.bf16.mxu0 0
    %2976 = vmatpush2.bf16.msra.mxu0 0
    %2977 = vmatprep.subr.bf16.mxu0 0
    %2978 = vmatpush2.bf16.msra.mxu0 0
    %2979 = vmatprep.subr.bf16.mxu0 0
    %2980 = vmatpush2.bf16.msra.mxu0 0
    %2981 = vmatprep.subr.bf16.mxu0 0
    %2982 = vmatpush2.bf16.msra.mxu0 0
    %2983 = vmatprep.subr.bf16.mxu0 0
    %2984 = vmatpush2.bf16.msra.mxu0 0
    %2985 = vmatprep.subr.bf16.mxu0 0
    %2986 = vmatpush2.bf16.msra.mxu0 0
    %2987 = vmatprep.subr.bf16.mxu0 0
    %2988 = vmatpush2.bf16.msra.mxu0 0
    %2989 = vmatprep.subr.bf16.mxu0 0
    %2990 = vmatpush2.bf16.msra.mxu0 0
    %2991 = vmatprep.mubr.bf16.mxu0 0
    %2992 = vmatmul.mubr.bf16.gmra.mxu0 %v2954
    %v2993 = vpop.f32.mrf.mxu0
    %v2994 = vadd.f32 0.0, %v2993
    %v2995 = vpop.f32.mrf.mxu0
    %v2996 = vpop.f32.mrf.mxu0
    %v2997 = vpop.f32.mrf.mxu0
    %2998 = vdwg.mxu0
    %3000 = vrot.lane.b32.xlu0 %v2851, 96
    %v3001 = vpop.permute.xlu0 %3000
    %v3003 = vsel %vm547, %v2847, 0
    %v3006 = vsel %vm799, %v3001, 0
    %3008 = vmatprep.subr.bf16.mxu0 0
    %3009 = vmatpush1.bf16.msra.mxu0 0
    %3010 = vmatprep.subr.bf16.mxu0 0
    %3011 = vmatpush1.bf16.msra.mxu0 0
    %3012 = vmatprep.subr.bf16.mxu0 0
    %3013 = vmatpush1.bf16.msra.mxu0 0
    %3014 = vmatprep.subr.bf16.mxu0 0
    %3015 = vmatpush1.bf16.msra.mxu0 0
    %3016 = vmatprep.subr.bf16.mxu0 0
    %3017 = vmatpush1.bf16.msra.mxu0 0
    %3018 = vmatprep.subr.bf16.mxu0 0
    %3019 = vmatpush1.bf16.msra.mxu0 0
    %3020 = vmatprep.subr.bf16.mxu0 0
    %3021 = vmatpush1.bf16.msra.mxu0 0
    %3022 = vmatprep.subr.bf16.mxu0 0
    %3023 = vmatpush1.bf16.msra.mxu0 %v3006
    %3024 = vmatprep.subr.bf16.mxu0 0
    %3025 = vmatpush2.bf16.msra.mxu0 0
    %3026 = vmatprep.subr.bf16.mxu0 0
    %3027 = vmatpush2.bf16.msra.mxu0 0
    %3028 = vmatprep.subr.bf16.mxu0 0
    %3029 = vmatpush2.bf16.msra.mxu0 0
    %3030 = vmatprep.subr.bf16.mxu0 0
    %3031 = vmatpush2.bf16.msra.mxu0 0
    %3032 = vmatprep.subr.bf16.mxu0 0
    %3033 = vmatpush2.bf16.msra.mxu0 0
    %3034 = vmatprep.subr.bf16.mxu0 0
    %3035 = vmatpush2.bf16.msra.mxu0 0
    %3036 = vmatprep.subr.bf16.mxu0 0
    %3037 = vmatpush2.bf16.msra.mxu0 0
    %3038 = vmatprep.subr.bf16.mxu0 0
    %3039 = vmatpush2.bf16.msra.mxu0 0
    %3040 = vmatprep.mubr.bf16.mxu0 0
    %3041 = vmatmul.mubr.bf16.gmra.mxu0 %v3003
    %v3042 = vpop.f32.mrf.mxu0
    %v3043 = vadd.f32 0.0, %v3042
    %v3044 = vpop.f32.mrf.mxu0
    %v3045 = vpop.f32.mrf.mxu0
    %v3046 = vpop.f32.mrf.mxu0
    %3047 = vdwg.mxu0
    %v3048 = vpack.c.bf16 %v2896, %v2896
    %v3049 = vpack.c.bf16 %v2945, %v2945
    %v3050 = vpack.c.bf16 %v2994, %v2994
    %v3051 = vpack.c.bf16 %v3043, %v3043
    %v3053 = vsel %vm547, %v3048, 0
    %3055 = vmatprep.subr.bf16.mxu0 0
    %3056 = vmatpush1.bf16.msra.mxu0 0
    %3057 = vmatprep.subr.bf16.mxu0 0
    %3058 = vmatpush1.bf16.msra.mxu0 0
    %3059 = vmatprep.subr.bf16.mxu0 0
    %3060 = vmatpush1.bf16.msra.mxu0 0
    %3061 = vmatprep.subr.bf16.mxu0 0
    %3062 = vmatpush1.bf16.msra.mxu0 0
    %3063 = vmatprep.subr.bf16.mxu0 0
    %3064 = vmatpush1.bf16.msra.mxu0 0
    %3065 = vmatprep.subr.bf16.mxu0 0
    %3066 = vmatpush1.bf16.msra.mxu0 0
    %3067 = vmatprep.subr.bf16.mxu0 0
    %3068 = vmatpush1.bf16.msra.mxu0 0
    %3069 = vmatprep.subr.bf16.mxu0 0
    %3070 = vmatpush1.bf16.msra.mxu0 %v998
    %3071 = vmatprep.subr.bf16.mxu0 0
    %3072 = vmatpush2.bf16.msra.mxu0 0
    %3073 = vmatprep.subr.bf16.mxu0 0
    %3074 = vmatpush2.bf16.msra.mxu0 0
    %3075 = vmatprep.subr.bf16.mxu0 0
    %3076 = vmatpush2.bf16.msra.mxu0 0
    %3077 = vmatprep.subr.bf16.mxu0 0
    %3078 = vmatpush2.bf16.msra.mxu0 0
    %3079 = vmatprep.subr.bf16.mxu0 0
    %3080 = vmatpush2.bf16.msra.mxu0 0
    %3081 = vmatprep.subr.bf16.mxu0 0
    %3082 = vmatpush2.bf16.msra.mxu0 0
    %3083 = vmatprep.subr.bf16.mxu0 0
    %3084 = vmatpush2.bf16.msra.mxu0 0
    %3085 = vmatprep.subr.bf16.mxu0 0
    %3086 = vmatpush2.bf16.msra.mxu0 0
    %3087 = vmatprep.mubr.bf16.mxu0 0
    %3088 = vmatmul.mubr.bf16.gmra.mxu0 %v3053
    %v3089 = vpop.f32.mrf.mxu0
    %v3090 = vadd.f32 0.0, %v3089
    %v3091 = vpop.f32.mrf.mxu0
    %v3092 = vpop.f32.mrf.mxu0
    %v3093 = vpop.f32.mrf.mxu0
    %3094 = vdwg.mxu0
    %v3096 = vsel %vm547, %v3049, 0
    %3098 = vmatprep.subr.bf16.mxu0 0
    %3099 = vmatpush1.bf16.msra.mxu0 0
    %3100 = vmatprep.subr.bf16.mxu0 0
    %3101 = vmatpush1.bf16.msra.mxu0 0
    %3102 = vmatprep.subr.bf16.mxu0 0
    %3103 = vmatpush1.bf16.msra.mxu0 0
    %3104 = vmatprep.subr.bf16.mxu0 0
    %3105 = vmatpush1.bf16.msra.mxu0 0
    %3106 = vmatprep.subr.bf16.mxu0 0
    %3107 = vmatpush1.bf16.msra.mxu0 0
    %3108 = vmatprep.subr.bf16.mxu0 0
    %3109 = vmatpush1.bf16.msra.mxu0 0
    %3110 = vmatprep.subr.bf16.mxu0 0
    %3111 = vmatpush1.bf16.msra.mxu0 0
    %3112 = vmatprep.subr.bf16.mxu0 0
    %3113 = vmatpush1.bf16.msra.mxu0 %v1044
    %3114 = vmatprep.subr.bf16.mxu0 0
    %3115 = vmatpush2.bf16.msra.mxu0 0
    %3116 = vmatprep.subr.bf16.mxu0 0
    %3117 = vmatpush2.bf16.msra.mxu0 0
    %3118 = vmatprep.subr.bf16.mxu0 0
    %3119 = vmatpush2.bf16.msra.mxu0 0
    %3120 = vmatprep.subr.bf16.mxu0 0
    %3121 = vmatpush2.bf16.msra.mxu0 0
    %3122 = vmatprep.subr.bf16.mxu0 0
    %3123 = vmatpush2.bf16.msra.mxu0 0
    %3124 = vmatprep.subr.bf16.mxu0 0
    %3125 = vmatpush2.bf16.msra.mxu0 0
    %3126 = vmatprep.subr.bf16.mxu0 0
    %3127 = vmatpush2.bf16.msra.mxu0 0
    %3128 = vmatprep.subr.bf16.mxu0 0
    %3129 = vmatpush2.bf16.msra.mxu0 0
    %3130 = vmatprep.mubr.bf16.mxu0 0
    %3131 = vmatmul.mubr.bf16.gmra.mxu0 %v3096
    %v3132 = vpop.f32.mrf.mxu0
    %v3133 = vadd.f32 0.0, %v3132
    %v3134 = vpop.f32.mrf.mxu0
    %v3135 = vpop.f32.mrf.mxu0
    %v3136 = vpop.f32.mrf.mxu0
    %3137 = vdwg.mxu0
    %v3139 = vsel %vm547, %v3050, 0
    %3141 = vmatprep.subr.bf16.mxu0 0
    %3142 = vmatpush1.bf16.msra.mxu0 0
    %3143 = vmatprep.subr.bf16.mxu0 0
    %3144 = vmatpush1.bf16.msra.mxu0 0
    %3145 = vmatprep.subr.bf16.mxu0 0
    %3146 = vmatpush1.bf16.msra.mxu0 0
    %3147 = vmatprep.subr.bf16.mxu0 0
    %3148 = vmatpush1.bf16.msra.mxu0 0
    %3149 = vmatprep.subr.bf16.mxu0 0
    %3150 = vmatpush1.bf16.msra.mxu0 0
    %3151 = vmatprep.subr.bf16.mxu0 0
    %3152 = vmatpush1.bf16.msra.mxu0 0
    %3153 = vmatprep.subr.bf16.mxu0 0
    %3154 = vmatpush1.bf16.msra.mxu0 0
    %3155 = vmatprep.subr.bf16.mxu0 0
    %3156 = vmatpush1.bf16.msra.mxu0 %v1090
    %3157 = vmatprep.subr.bf16.mxu0 0
    %3158 = vmatpush2.bf16.msra.mxu0 0
    %3159 = vmatprep.subr.bf16.mxu0 0
    %3160 = vmatpush2.bf16.msra.mxu0 0
    %3161 = vmatprep.subr.bf16.mxu0 0
    %3162 = vmatpush2.bf16.msra.mxu0 0
    %3163 = vmatprep.subr.bf16.mxu0 0
    %3164 = vmatpush2.bf16.msra.mxu0 0
    %3165 = vmatprep.subr.bf16.mxu0 0
    %3166 = vmatpush2.bf16.msra.mxu0 0
    %3167 = vmatprep.subr.bf16.mxu0 0
    %3168 = vmatpush2.bf16.msra.mxu0 0
    %3169 = vmatprep.subr.bf16.mxu0 0
    %3170 = vmatpush2.bf16.msra.mxu0 0
    %3171 = vmatprep.subr.bf16.mxu0 0
    %3172 = vmatpush2.bf16.msra.mxu0 0
    %3173 = vmatprep.mubr.bf16.mxu0 0
    %3174 = vmatmul.mubr.bf16.gmra.mxu0 %v3139
    %v3175 = vpop.f32.mrf.mxu0
    %v3176 = vadd.f32 0.0, %v3175
    %v3177 = vpop.f32.mrf.mxu0
    %v3178 = vpop.f32.mrf.mxu0
    %v3179 = vpop.f32.mrf.mxu0
    %3180 = vdwg.mxu0
    %v3182 = vsel %vm547, %v3051, 0
    %3184 = vmatprep.subr.bf16.mxu0 0
    %3185 = vmatpush1.bf16.msra.mxu0 0
    %3186 = vmatprep.subr.bf16.mxu0 0
    %3187 = vmatpush1.bf16.msra.mxu0 0
    %3188 = vmatprep.subr.bf16.mxu0 0
    %3189 = vmatpush1.bf16.msra.mxu0 0
    %3190 = vmatprep.subr.bf16.mxu0 0
    %3191 = vmatpush1.bf16.msra.mxu0 0
    %3192 = vmatprep.subr.bf16.mxu0 0
    %3193 = vmatpush1.bf16.msra.mxu0 0
    %3194 = vmatprep.subr.bf16.mxu0 0
    %3195 = vmatpush1.bf16.msra.mxu0 0
    %3196 = vmatprep.subr.bf16.mxu0 0
    %3197 = vmatpush1.bf16.msra.mxu0 0
    %3198 = vmatprep.subr.bf16.mxu0 0
    %3199 = vmatpush1.bf16.msra.mxu0 %v1136
    %3200 = vmatprep.subr.bf16.mxu0 0
    %3201 = vmatpush2.bf16.msra.mxu0 0
    %3202 = vmatprep.subr.bf16.mxu0 0
    %3203 = vmatpush2.bf16.msra.mxu0 0
    %3204 = vmatprep.subr.bf16.mxu0 0
    %3205 = vmatpush2.bf16.msra.mxu0 0
    %3206 = vmatprep.subr.bf16.mxu0 0
    %3207 = vmatpush2.bf16.msra.mxu0 0
    %3208 = vmatprep.subr.bf16.mxu0 0
    %3209 = vmatpush2.bf16.msra.mxu0 0
    %3210 = vmatprep.subr.bf16.mxu0 0
    %3211 = vmatpush2.bf16.msra.mxu0 0
    %3212 = vmatprep.subr.bf16.mxu0 0
    %3213 = vmatpush2.bf16.msra.mxu0 0
    %3214 = vmatprep.subr.bf16.mxu0 0
    %3215 = vmatpush2.bf16.msra.mxu0 0
    %3216 = vmatprep.mubr.bf16.mxu0 0
    %3217 = vmatmul.mubr.bf16.gmra.mxu0 %v3182
    %v3218 = vpop.f32.mrf.mxu0
    %v3219 = vadd.f32 0.0, %v3218
    %v3220 = vpop.f32.mrf.mxu0
    %v3221 = vpop.f32.mrf.mxu0
    %v3222 = vpop.f32.mrf.mxu0
    %3223 = vdwg.mxu0
    %v3224 = vsel %vm236, %v3090, 0.0
    %v3225 = vsel %vm236, %v3133, 0.0
    %v3226 = vadd.f32 %v3224, %v3225
    %v3227 = vsel %vm236, %v3176, 0.0
    %v3228 = vadd.f32 %v3226, %v3227
    %v3229 = vsel %vm236, %v3219, 0.0
    %v3230 = vadd.f32 %v3228, %v3229
    %v3231 = vadd.f32 %v3230, %v1189
    %v3232 = vadd.f32 %v2375, %v3231
    %v3233 = vsel %vm236, %v3232, 0.0
    %3234 = vadd.xlane.f32.xlu0 %v3233
    %v3235 = vpop.xlane.xlu0 %3234
    %v3236 = vmul.f32 %v3235, %v1196
    %v3237 = vsub.f32 %v3232, %v3236
    %v3238 = vmul.f32 %v3237, %v3237
    %v3239 = vsel %vm236, %v3238, 0.0
    %3240 = vadd.xlane.f32.xlu0 %v3239
    %v3241 = vpop.xlane.xlu0 %3240
    %v3242 = vmul.f32 %v3241, %v1196
    %v3243 = vadd.f32 %v3242, 1e-05
    %v3244 = vrsqrt.pop %v3243
    %v3245 = vmul.f32 %v3237, %v3244
    %v3246 = vmul.f32 %v3245, %v1211
    %v3247 = vadd.f32 %v3246, %v1218
    %v3248 = vpack.c.bf16 %v3247, %v3247
    %v3250 = vsel %vm236, %v3248, 0
    %3252 = vmatprep.subr.bf16.mxu0 0
    %3253 = vmatpush1.bf16.msra.mxu0 0
    %3254 = vmatprep.subr.bf16.mxu0 0
    %3255 = vmatpush1.bf16.msra.mxu0 0
    %3256 = vmatprep.subr.bf16.mxu0 0
    %3257 = vmatpush1.bf16.msra.mxu0 0
    %3258 = vmatprep.subr.bf16.mxu0 0
    %3259 = vmatpush1.bf16.msra.mxu0 0
    %3260 = vmatprep.subr.bf16.mxu0 0
    %3261 = vmatpush1.bf16.msra.mxu0 0
    %3262 = vmatprep.subr.bf16.mxu0 0
    %3263 = vmatpush1.bf16.msra.mxu0 0
    %3264 = vmatprep.subr.bf16.mxu0 0
    %3265 = vmatpush1.bf16.msra.mxu0 %v1237
    %3266 = vmatprep.subr.bf16.mxu0 0
    %3267 = vmatpush1.bf16.msra.mxu0 %v1236
    %3268 = vmatprep.subr.bf16.mxu0 0
    %3269 = vmatpush2.bf16.msra.mxu0 0
    %3270 = vmatprep.subr.bf16.mxu0 0
    %3271 = vmatpush2.bf16.msra.mxu0 0
    %3272 = vmatprep.subr.bf16.mxu0 0
    %3273 = vmatpush2.bf16.msra.mxu0 0
    %3274 = vmatprep.subr.bf16.mxu0 0
    %3275 = vmatpush2.bf16.msra.mxu0 0
    %3276 = vmatprep.subr.bf16.mxu0 0
    %3277 = vmatpush2.bf16.msra.mxu0 0
    %3278 = vmatprep.subr.bf16.mxu0 0
    %3279 = vmatpush2.bf16.msra.mxu0 0
    %3280 = vmatprep.subr.bf16.mxu0 0
    %3281 = vmatpush2.bf16.msra.mxu0 0
    %3282 = vmatprep.subr.bf16.mxu0 0
    %3283 = vmatpush2.bf16.msra.mxu0 0
    %3284 = vmatprep.mubr.bf16.mxu0 0
    %3285 = vmatmul.mubr.bf16.gmra.mxu0 %v3250
    %v3286 = vpop.f32.mrf.mxu0
    %v3287 = vadd.f32 %v1226, %v3286
    %v3288 = vpop.f32.mrf.mxu0
    %v3289 = vpop.f32.mrf.mxu0
    %v3290 = vpop.f32.mrf.mxu0
    %3291 = vdwg.mxu0
    %v3292 = vmax.f32 %v3287, 0.0
    %v3293 = vpack.c.bf16 %v3292, %v3292
    %v3295 = vsel %vm1315, %v3293, 0
    %3297 = vmatprep.subr.bf16.mxu0 0
    %3298 = vmatpush1.bf16.msra.mxu0 0
    %3299 = vmatprep.subr.bf16.mxu0 0
    %3300 = vmatpush1.bf16.msra.mxu0 0
    %3301 = vmatprep.subr.bf16.mxu0 0
    %3302 = vmatpush1.bf16.msra.mxu0 0
    %3303 = vmatprep.subr.bf16.mxu0 0
    %3304 = vmatpush1.bf16.msra.mxu0 0
    %3305 = vmatprep.subr.bf16.mxu0 0
    %3306 = vmatpush1.bf16.msra.mxu0 %v1310
    %3307 = vmatprep.subr.bf16.mxu0 0
    %3308 = vmatpush1.bf16.msra.mxu0 %v1309
    %3309 = vmatprep.subr.bf16.mxu0 0
    %3310 = vmatpush1.bf16.msra.mxu0 %v1308
    %3311 = vmatprep.subr.bf16.mxu0 0
    %3312 = vmatpush1.bf16.msra.mxu0 %v1307
    %3313 = vmatprep.subr.bf16.mxu0 0
    %3314 = vmatpush2.bf16.msra.mxu0 0
    %3315 = vmatprep.subr.bf16.mxu0 0
    %3316 = vmatpush2.bf16.msra.mxu0 0
    %3317 = vmatprep.subr.bf16.mxu0 0
    %3318 = vmatpush2.bf16.msra.mxu0 0
    %3319 = vmatprep.subr.bf16.mxu0 0
    %3320 = vmatpush2.bf16.msra.mxu0 0
    %3321 = vmatprep.subr.bf16.mxu0 0
    %3322 = vmatpush2.bf16.msra.mxu0 0
    %3323 = vmatprep.subr.bf16.mxu0 0
    %3324 = vmatpush2.bf16.msra.mxu0 0
    %3325 = vmatprep.subr.bf16.mxu0 0
    %3326 = vmatpush2.bf16.msra.mxu0 0
    %3327 = vmatprep.subr.bf16.mxu0 0
    %3328 = vmatpush2.bf16.msra.mxu0 0
    %3329 = vmatprep.mubr.bf16.mxu0 0
    %3330 = vmatmul.mubr.bf16.gmra.mxu0 %v3295
    %v3331 = vpop.f32.mrf.mxu0
    %v3332 = vadd.f32 %v1289, %v3331
    %v3333 = vpop.f32.mrf.mxu0
    %v3334 = vpop.f32.mrf.mxu0
    %v3335 = vpop.f32.mrf.mxu0
    %3336 = vdwg.mxu0
    %v3337 = vadd.f32 %v3247, %v3332
    %v3338 = vsel %vm236, %v3337, 0.0
    %3339 = vadd.xlane.f32.xlu0 %v3338
    %v3340 = vpop.xlane.xlu0 %3339
    %v3341 = vmul.f32 %v3340, %v1196
    %v3342 = vsub.f32 %v3337, %v3341
    %v3343 = vmul.f32 %v3342, %v3342
    %v3344 = vsel %vm236, %v3343, 0.0
    %3345 = vadd.xlane.f32.xlu0 %v3344
    %v3346 = vpop.xlane.xlu0 %3345
    %v3347 = vmul.f32 %v3346, %v1196
    %v3348 = vadd.f32 %v3347, 1e-05
    %v3349 = vrsqrt.pop %v3348
    %v3350 = vmul.f32 %v3342, %v3349
    %v3351 = vmul.f32 %v3350, %v1377
    %v3352 = vadd.f32 %v3351, %v1384
    %v3353 = vpack.c.bf16 %v3352, %v3352
    %v3355 = vsel %vm236, %v3353, 0
    %3357 = vmatprep.subr.bf16.mxu0 0
    %3358 = vmatpush1.bf16.msra.mxu0 0
    %3359 = vmatprep.subr.bf16.mxu0 0
    %3360 = vmatpush1.bf16.msra.mxu0 0
    %3361 = vmatprep.subr.bf16.mxu0 0
    %3362 = vmatpush1.bf16.msra.mxu0 0
    %3363 = vmatprep.subr.bf16.mxu0 0
    %3364 = vmatpush1.bf16.msra.mxu0 0
    %3365 = vmatprep.subr.bf16.mxu0 0
    %3366 = vmatpush1.bf16.msra.mxu0 0
    %3367 = vmatprep.subr.bf16.mxu0 0
    %3368 = vmatpush1.bf16.msra.mxu0 0
    %3369 = vmatprep.subr.bf16.mxu0 0
    %3370 = vmatpush1.bf16.msra.mxu0 %v233
    %3371 = vmatprep.subr.bf16.mxu0 0
    %3372 = vmatpush1.bf16.msra.mxu0 %v232
    %3373 = vmatprep.subr.bf16.mxu0 0
    %3374 = vmatpush2.bf16.msra.mxu0 0
    %3375 = vmatprep.subr.bf16.mxu0 0
    %3376 = vmatpush2.bf16.msra.mxu0 0
    %3377 = vmatprep.subr.bf16.mxu0 0
    %3378 = vmatpush2.bf16.msra.mxu0 0
    %3379 = vmatprep.subr.bf16.mxu0 0
    %3380 = vmatpush2.bf16.msra.mxu0 0
    %3381 = vmatprep.subr.bf16.mxu0 0
    %3382 = vmatpush2.bf16.msra.mxu0 0
    %3383 = vmatprep.subr.bf16.mxu0 0
    %3384 = vmatpush2.bf16.msra.mxu0 0
    %3385 = vmatprep.subr.bf16.mxu0 0
    %3386 = vmatpush2.bf16.msra.mxu0 0
    %3387 = vmatprep.subr.bf16.mxu0 0
    %3388 = vmatpush2.bf16.msra.mxu0 0
    %3389 = vmatprep.mubr.bf16.mxu0 0
    %3390 = vmatmul.mubr.bf16.gmra.mxu0 %v3355
    %v3391 = vpop.f32.mrf.mxu0
    %v3392 = vadd.f32 %v207, %v3391
    %v3393 = vpop.f32.mrf.mxu0
    %v3394 = vpop.f32.mrf.mxu0
    %v3395 = vpop.f32.mrf.mxu0
    %3396 = vdwg.mxu0
    %3397 = vmatprep.subr.bf16.mxu0 0
    %3398 = vmatpush1.bf16.msra.mxu0 0
    %3399 = vmatprep.subr.bf16.mxu0 0
    %3400 = vmatpush1.bf16.msra.mxu0 0
    %3401 = vmatprep.subr.bf16.mxu0 0
    %3402 = vmatpush1.bf16.msra.mxu0 0
    %3403 = vmatprep.subr.bf16.mxu0 0
    %3404 = vmatpush1.bf16.msra.mxu0 0
    %3405 = vmatprep.subr.bf16.mxu0 0
    %3406 = vmatpush1.bf16.msra.mxu0 0
    %3407 = vmatprep.subr.bf16.mxu0 0
    %3408 = vmatpush1.bf16.msra.mxu0 0
    %3409 = vmatprep.subr.bf16.mxu0 0
    %3410 = vmatpush1.bf16.msra.mxu0 %v289
    %3411 = vmatprep.subr.bf16.mxu0 0
    %3412 = vmatpush1.bf16.msra.mxu0 %v288
    %3413 = vmatprep.subr.bf16.mxu0 0
    %3414 = vmatpush2.bf16.msra.mxu0 0
    %3415 = vmatprep.subr.bf16.mxu0 0
    %3416 = vmatpush2.bf16.msra.mxu0 0
    %3417 = vmatprep.subr.bf16.mxu0 0
    %3418 = vmatpush2.bf16.msra.mxu0 0
    %3419 = vmatprep.subr.bf16.mxu0 0
    %3420 = vmatpush2.bf16.msra.mxu0 0
    %3421 = vmatprep.subr.bf16.mxu0 0
    %3422 = vmatpush2.bf16.msra.mxu0 0
    %3423 = vmatprep.subr.bf16.mxu0 0
    %3424 = vmatpush2.bf16.msra.mxu0 0
    %3425 = vmatprep.subr.bf16.mxu0 0
    %3426 = vmatpush2.bf16.msra.mxu0 0
    %3427 = vmatprep.subr.bf16.mxu0 0
    %3428 = vmatpush2.bf16.msra.mxu0 0
    %3429 = vmatprep.mubr.bf16.mxu0 0
    %3430 = vmatmul.mubr.bf16.gmra.mxu0 %v3355
    %v3431 = vpop.f32.mrf.mxu0
    %v3432 = vadd.f32 %v211, %v3431
    %v3433 = vpop.f32.mrf.mxu0
    %v3434 = vpop.f32.mrf.mxu0
    %v3435 = vpop.f32.mrf.mxu0
    %3436 = vdwg.mxu0
    %3437 = vmatprep.subr.bf16.mxu0 0
    %3438 = vmatpush1.bf16.msra.mxu0 0
    %3439 = vmatprep.subr.bf16.mxu0 0
    %3440 = vmatpush1.bf16.msra.mxu0 0
    %3441 = vmatprep.subr.bf16.mxu0 0
    %3442 = vmatpush1.bf16.msra.mxu0 0
    %3443 = vmatprep.subr.bf16.mxu0 0
    %3444 = vmatpush1.bf16.msra.mxu0 0
    %3445 = vmatprep.subr.bf16.mxu0 0
    %3446 = vmatpush1.bf16.msra.mxu0 0
    %3447 = vmatprep.subr.bf16.mxu0 0
    %3448 = vmatpush1.bf16.msra.mxu0 0
    %3449 = vmatprep.subr.bf16.mxu0 0
    %3450 = vmatpush1.bf16.msra.mxu0 %v341
    %3451 = vmatprep.subr.bf16.mxu0 0
    %3452 = vmatpush1.bf16.msra.mxu0 %v340
    %3453 = vmatprep.subr.bf16.mxu0 0
    %3454 = vmatpush2.bf16.msra.mxu0 0
    %3455 = vmatprep.subr.bf16.mxu0 0
    %3456 = vmatpush2.bf16.msra.mxu0 0
    %3457 = vmatprep.subr.bf16.mxu0 0
    %3458 = vmatpush2.bf16.msra.mxu0 0
    %3459 = vmatprep.subr.bf16.mxu0 0
    %3460 = vmatpush2.bf16.msra.mxu0 0
    %3461 = vmatprep.subr.bf16.mxu0 0
    %3462 = vmatpush2.bf16.msra.mxu0 0
    %3463 = vmatprep.subr.bf16.mxu0 0
    %3464 = vmatpush2.bf16.msra.mxu0 0
    %3465 = vmatprep.subr.bf16.mxu0 0
    %3466 = vmatpush2.bf16.msra.mxu0 0
    %3467 = vmatprep.subr.bf16.mxu0 0
    %3468 = vmatpush2.bf16.msra.mxu0 0
    %3469 = vmatprep.mubr.bf16.mxu0 0
    %3470 = vmatmul.mubr.bf16.gmra.mxu0 %v3355
    %v3471 = vpop.f32.mrf.mxu0
    %v3472 = vadd.f32 %v215, %v3471
    %v3473 = vpop.f32.mrf.mxu0
    %v3474 = vpop.f32.mrf.mxu0
    %v3475 = vpop.f32.mrf.mxu0
    %3476 = vdwg.mxu0
    %3477 = vmatprep.subr.bf16.mxu0 0
    %3478 = vmatpush1.bf16.msra.mxu0 0
    %3479 = vmatprep.subr.bf16.mxu0 0
    %3480 = vmatpush1.bf16.msra.mxu0 0
    %3481 = vmatprep.subr.bf16.mxu0 0
    %3482 = vmatpush1.bf16.msra.mxu0 0
    %3483 = vmatprep.subr.bf16.mxu0 0
    %3484 = vmatpush1.bf16.msra.mxu0 0
    %3485 = vmatprep.subr.bf16.mxu0 0
    %3486 = vmatpush1.bf16.msra.mxu0 0
    %3487 = vmatprep.subr.bf16.mxu0 0
    %3488 = vmatpush1.bf16.msra.mxu0 0
    %3489 = vmatprep.subr.bf16.mxu0 0
    %3490 = vmatpush1.bf16.msra.mxu0 %v393
    %3491 = vmatprep.subr.bf16.mxu0 0
    %3492 = vmatpush1.bf16.msra.mxu0 %v392
    %3493 = vmatprep.subr.bf16.mxu0 0
    %3494 = vmatpush2.bf16.msra.mxu0 0
    %3495 = vmatprep.subr.bf16.mxu0 0
    %3496 = vmatpush2.bf16.msra.mxu0 0
    %3497 = vmatprep.subr.bf16.mxu0 0
    %3498 = vmatpush2.bf16.msra.mxu0 0
    %3499 = vmatprep.subr.bf16.mxu0 0
    %3500 = vmatpush2.bf16.msra.mxu0 0
    %3501 = vmatprep.subr.bf16.mxu0 0
    %3502 = vmatpush2.bf16.msra.mxu0 0
    %3503 = vmatprep.subr.bf16.mxu0 0
    %3504 = vmatpush2.bf16.msra.mxu0 0
    %3505 = vmatprep.subr.bf16.mxu0 0
    %3506 = vmatpush2.bf16.msra.mxu0 0
    %3507 = vmatprep.subr.bf16.mxu0 0
    %3508 = vmatpush2.bf16.msra.mxu0 0
    %3509 = vmatprep.mubr.bf16.mxu0 0
    %3510 = vmatmul.mubr.bf16.gmra.mxu0 %v3355
    %v3511 = vpop.f32.mrf.mxu0
    %v3512 = vadd.f32 %v219, %v3511
    %v3513 = vpop.f32.mrf.mxu0
    %v3514 = vpop.f32.mrf.mxu0
    %v3515 = vpop.f32.mrf.mxu0
    %3516 = vdwg.mxu0
    %v3517 = vmul.f32 %v3392, %v139
    %v3518 = vmul.f32 %v3432, %v140
    %v3519 = vmul.f32 %v3472, %v141
    %v3520 = vmul.f32 %v3512, %v142
    %v3521 = vmul.f32 %v3392, %v445
    %v3522 = vmul.f32 %v3432, %v447
    %v3523 = vmul.f32 %v3472, %v449
    %v3524 = vmul.f32 %v3512, %v451
    %3529 = vrot.lane.b32.xlu0 %v3521, 120
    %v3530 = vpop.permute.xlu0 %3529
    %3531 = vrot.lane.b32.xlu0 %v3522, 120
    %v3532 = vpop.permute.xlu0 %3531
    %3533 = vrot.lane.b32.xlu0 %v3523, 120
    %v3534 = vpop.permute.xlu0 %3533
    %3535 = vrot.lane.b32.xlu0 %v3524, 120
    %v3536 = vpop.permute.xlu0 %3535
    %v3541 = vadd.f32 %v3517, %v3530
    %v3542 = vadd.f32 %v3518, %v3532
    %v3543 = vadd.f32 %v3519, %v3534
    %v3544 = vadd.f32 %v3520, %v3536
    %v3545 = vmul.f32 %v3392, %v485
    %v3546 = vmul.f32 %v3432, %v487
    %v3547 = vmul.f32 %v3472, %v489
    %v3548 = vmul.f32 %v3512, %v491
    %v3549 = vmul.f32 %v3392, %v501
    %v3550 = vmul.f32 %v3432, %v503
    %v3551 = vmul.f32 %v3472, %v505
    %v3552 = vmul.f32 %v3512, %v507
    %3557 = vrot.lane.b32.xlu0 %v3549, 120
    %v3558 = vpop.permute.xlu0 %3557
    %3559 = vrot.lane.b32.xlu0 %v3550, 120
    %v3560 = vpop.permute.xlu0 %3559
    %3561 = vrot.lane.b32.xlu0 %v3551, 120
    %v3562 = vpop.permute.xlu0 %3561
    %3563 = vrot.lane.b32.xlu0 %v3552, 120
    %v3564 = vpop.permute.xlu0 %3563
    %v3569 = vadd.f32 %v3545, %v3558
    %v3570 = vadd.f32 %v3546, %v3560
    %v3571 = vadd.f32 %v3547, %v3562
    %v3572 = vadd.f32 %v3548, %v3564
    %v3573 = vpack.c.bf16 %v3541, %v3541
    %v3574 = vpack.c.bf16 %v3542, %v3542
    %v3575 = vpack.c.bf16 %v3543, %v3543
    %v3576 = vpack.c.bf16 %v3544, %v3544
    %v3577 = vpack.c.bf16 %v3569, %v3569
    %v3578 = vpack.c.bf16 %v3570, %v3570
    %v3579 = vpack.c.bf16 %v3571, %v3571
    %v3580 = vpack.c.bf16 %v3572, %v3572
    %3582 = vrot.lane.b32.xlu0 %v3577, 112
    %v3583 = vpop.permute.xlu0 %3582
    %v3585 = vsel %vm547, %v3573, 0
    %v3588 = vsel %vm547, %v3583, 0
    %3590 = vmatprep.subr.bf16.mxu0 0
    %3591 = vmatpush1.bf16.xpose.msra.mxu0 0
    %3592 = vmatprep.subr.bf16.mxu0 0
    %3593 = vmatpush1.bf16.xpose.msra.mxu0 0
    %3594 = vmatprep.subr.bf16.mxu0 0
    %3595 = vmatpush1.bf16.xpose.msra.mxu0 0
    %3596 = vmatprep.subr.bf16.mxu0 0
    %3597 = vmatpush1.bf16.xpose.msra.mxu0 0
    %3598 = vmatprep.subr.bf16.mxu0 0
    %3599 = vmatpush1.bf16.xpose.msra.mxu0 0
    %3600 = vmatprep.subr.bf16.mxu0 0
    %3601 = vmatpush1.bf16.xpose.msra.mxu0 0
    %3602 = vmatprep.subr.bf16.mxu0 0
    %3603 = vmatpush1.bf16.xpose.msra.mxu0 0
    %3604 = vmatprep.subr.bf16.mxu0 0
    %3605 = vmatpush1.bf16.xpose.msra.mxu0 %v3588
    %3606 = vmatprep.subr.bf16.mxu0 0
    %3607 = vmatpush2.bf16.xpose.msra.mxu0 0
    %3608 = vmatprep.subr.bf16.mxu0 0
    %3609 = vmatpush2.bf16.xpose.msra.mxu0 0
    %3610 = vmatprep.subr.bf16.mxu0 0
    %3611 = vmatpush2.bf16.xpose.msra.mxu0 0
    %3612 = vmatprep.subr.bf16.mxu0 0
    %3613 = vmatpush2.bf16.xpose.msra.mxu0 0
    %3614 = vmatprep.subr.bf16.mxu0 0
    %3615 = vmatpush2.bf16.xpose.msra.mxu0 0
    %3616 = vmatprep.subr.bf16.mxu0 0
    %3617 = vmatpush2.bf16.xpose.msra.mxu0 0
    %3618 = vmatprep.subr.bf16.mxu0 0
    %3619 = vmatpush2.bf16.xpose.msra.mxu0 0
    %3620 = vmatprep.subr.bf16.mxu0 0
    %3621 = vmatpush2.bf16.xpose.msra.mxu0 0
    %3622 = vmatprep.mubr.bf16.mxu0 0
    %3623 = vmatmul.mubr.bf16.gmra.mxu0 %v3585
    %v3624 = vpop.f32.mrf.mxu0
    %v3625 = vadd.f32 %v2373, %v3624
    %v3626 = vpop.f32.mrf.mxu0
    %v3627 = vpop.f32.mrf.mxu0
    %v3628 = vpop.f32.mrf.mxu0
    %3629 = vdwg.mxu0
    %3631 = vrot.lane.b32.xlu0 %v3578, 112
    %v3632 = vpop.permute.xlu0 %3631
    %v3634 = vsel %vm547, %v3574, 0
    %v3637 = vsel %vm547, %v3632, 0
    %3639 = vmatprep.subr.bf16.mxu0 0
    %3640 = vmatpush1.bf16.xpose.msra.mxu0 0
    %3641 = vmatprep.subr.bf16.mxu0 0
    %3642 = vmatpush1.bf16.xpose.msra.mxu0 0
    %3643 = vmatprep.subr.bf16.mxu0 0
    %3644 = vmatpush1.bf16.xpose.msra.mxu0 0
    %3645 = vmatprep.subr.bf16.mxu0 0
    %3646 = vmatpush1.bf16.xpose.msra.mxu0 0
    %3647 = vmatprep.subr.bf16.mxu0 0
    %3648 = vmatpush1.bf16.xpose.msra.mxu0 0
    %3649 = vmatprep.subr.bf16.mxu0 0
    %3650 = vmatpush1.bf16.xpose.msra.mxu0 0
    %3651 = vmatprep.subr.bf16.mxu0 0
    %3652 = vmatpush1.bf16.xpose.msra.mxu0 0
    %3653 = vmatprep.subr.bf16.mxu0 0
    %3654 = vmatpush1.bf16.xpose.msra.mxu0 %v3637
    %3655 = vmatprep.subr.bf16.mxu0 0
    %3656 = vmatpush2.bf16.xpose.msra.mxu0 0
    %3657 = vmatprep.subr.bf16.mxu0 0
    %3658 = vmatpush2.bf16.xpose.msra.mxu0 0
    %3659 = vmatprep.subr.bf16.mxu0 0
    %3660 = vmatpush2.bf16.xpose.msra.mxu0 0
    %3661 = vmatprep.subr.bf16.mxu0 0
    %3662 = vmatpush2.bf16.xpose.msra.mxu0 0
    %3663 = vmatprep.subr.bf16.mxu0 0
    %3664 = vmatpush2.bf16.xpose.msra.mxu0 0
    %3665 = vmatprep.subr.bf16.mxu0 0
    %3666 = vmatpush2.bf16.xpose.msra.mxu0 0
    %3667 = vmatprep.subr.bf16.mxu0 0
    %3668 = vmatpush2.bf16.xpose.msra.mxu0 0
    %3669 = vmatprep.subr.bf16.mxu0 0
    %3670 = vmatpush2.bf16.xpose.msra.mxu0 0
    %3671 = vmatprep.mubr.bf16.mxu0 0
    %3672 = vmatmul.mubr.bf16.gmra.mxu0 %v3634
    %v3673 = vpop.f32.mrf.mxu0
    %v3674 = vadd.f32 %v2373, %v3673
    %v3675 = vpop.f32.mrf.mxu0
    %v3676 = vpop.f32.mrf.mxu0
    %v3677 = vpop.f32.mrf.mxu0
    %3678 = vdwg.mxu0
    %3680 = vrot.lane.b32.xlu0 %v3579, 112
    %v3681 = vpop.permute.xlu0 %3680
    %v3683 = vsel %vm547, %v3575, 0
    %v3686 = vsel %vm547, %v3681, 0
    %3688 = vmatprep.subr.bf16.mxu0 0
    %3689 = vmatpush1.bf16.xpose.msra.mxu0 0
    %3690 = vmatprep.subr.bf16.mxu0 0
    %3691 = vmatpush1.bf16.xpose.msra.mxu0 0
    %3692 = vmatprep.subr.bf16.mxu0 0
    %3693 = vmatpush1.bf16.xpose.msra.mxu0 0
    %3694 = vmatprep.subr.bf16.mxu0 0
    %3695 = vmatpush1.bf16.xpose.msra.mxu0 0
    %3696 = vmatprep.subr.bf16.mxu0 0
    %3697 = vmatpush1.bf16.xpose.msra.mxu0 0
    %3698 = vmatprep.subr.bf16.mxu0 0
    %3699 = vmatpush1.bf16.xpose.msra.mxu0 0
    %3700 = vmatprep.subr.bf16.mxu0 0
    %3701 = vmatpush1.bf16.xpose.msra.mxu0 0
    %3702 = vmatprep.subr.bf16.mxu0 0
    %3703 = vmatpush1.bf16.xpose.msra.mxu0 %v3686
    %3704 = vmatprep.subr.bf16.mxu0 0
    %3705 = vmatpush2.bf16.xpose.msra.mxu0 0
    %3706 = vmatprep.subr.bf16.mxu0 0
    %3707 = vmatpush2.bf16.xpose.msra.mxu0 0
    %3708 = vmatprep.subr.bf16.mxu0 0
    %3709 = vmatpush2.bf16.xpose.msra.mxu0 0
    %3710 = vmatprep.subr.bf16.mxu0 0
    %3711 = vmatpush2.bf16.xpose.msra.mxu0 0
    %3712 = vmatprep.subr.bf16.mxu0 0
    %3713 = vmatpush2.bf16.xpose.msra.mxu0 0
    %3714 = vmatprep.subr.bf16.mxu0 0
    %3715 = vmatpush2.bf16.xpose.msra.mxu0 0
    %3716 = vmatprep.subr.bf16.mxu0 0
    %3717 = vmatpush2.bf16.xpose.msra.mxu0 0
    %3718 = vmatprep.subr.bf16.mxu0 0
    %3719 = vmatpush2.bf16.xpose.msra.mxu0 0
    %3720 = vmatprep.mubr.bf16.mxu0 0
    %3721 = vmatmul.mubr.bf16.gmra.mxu0 %v3683
    %v3722 = vpop.f32.mrf.mxu0
    %v3723 = vadd.f32 %v2373, %v3722
    %v3724 = vpop.f32.mrf.mxu0
    %v3725 = vpop.f32.mrf.mxu0
    %v3726 = vpop.f32.mrf.mxu0
    %3727 = vdwg.mxu0
    %3729 = vrot.lane.b32.xlu0 %v3580, 112
    %v3730 = vpop.permute.xlu0 %3729
    %v3732 = vsel %vm547, %v3576, 0
    %v3735 = vsel %vm547, %v3730, 0
    %3737 = vmatprep.subr.bf16.mxu0 0
    %3738 = vmatpush1.bf16.xpose.msra.mxu0 0
    %3739 = vmatprep.subr.bf16.mxu0 0
    %3740 = vmatpush1.bf16.xpose.msra.mxu0 0
    %3741 = vmatprep.subr.bf16.mxu0 0
    %3742 = vmatpush1.bf16.xpose.msra.mxu0 0
    %3743 = vmatprep.subr.bf16.mxu0 0
    %3744 = vmatpush1.bf16.xpose.msra.mxu0 0
    %3745 = vmatprep.subr.bf16.mxu0 0
    %3746 = vmatpush1.bf16.xpose.msra.mxu0 0
    %3747 = vmatprep.subr.bf16.mxu0 0
    %3748 = vmatpush1.bf16.xpose.msra.mxu0 0
    %3749 = vmatprep.subr.bf16.mxu0 0
    %3750 = vmatpush1.bf16.xpose.msra.mxu0 0
    %3751 = vmatprep.subr.bf16.mxu0 0
    %3752 = vmatpush1.bf16.xpose.msra.mxu0 %v3735
    %3753 = vmatprep.subr.bf16.mxu0 0
    %3754 = vmatpush2.bf16.xpose.msra.mxu0 0
    %3755 = vmatprep.subr.bf16.mxu0 0
    %3756 = vmatpush2.bf16.xpose.msra.mxu0 0
    %3757 = vmatprep.subr.bf16.mxu0 0
    %3758 = vmatpush2.bf16.xpose.msra.mxu0 0
    %3759 = vmatprep.subr.bf16.mxu0 0
    %3760 = vmatpush2.bf16.xpose.msra.mxu0 0
    %3761 = vmatprep.subr.bf16.mxu0 0
    %3762 = vmatpush2.bf16.xpose.msra.mxu0 0
    %3763 = vmatprep.subr.bf16.mxu0 0
    %3764 = vmatpush2.bf16.xpose.msra.mxu0 0
    %3765 = vmatprep.subr.bf16.mxu0 0
    %3766 = vmatpush2.bf16.xpose.msra.mxu0 0
    %3767 = vmatprep.subr.bf16.mxu0 0
    %3768 = vmatpush2.bf16.xpose.msra.mxu0 0
    %3769 = vmatprep.mubr.bf16.mxu0 0
    %3770 = vmatmul.mubr.bf16.gmra.mxu0 %v3732
    %v3771 = vpop.f32.mrf.mxu0
    %v3772 = vadd.f32 %v2373, %v3771
    %v3773 = vpop.f32.mrf.mxu0
    %v3774 = vpop.f32.mrf.mxu0
    %v3775 = vpop.f32.mrf.mxu0
    %3776 = vdwg.mxu0
    %v3777 = vsel %vm547, %v3625, -inf
    %3778 = vmax.xlane.f32.xlu0 %v3777
    %v3779 = vpop.xlane.xlu0 %3778
    %v3780 = vsel %vm547, %v3674, -inf
    %3781 = vmax.xlane.f32.xlu0 %v3780
    %v3782 = vpop.xlane.xlu0 %3781
    %v3783 = vsel %vm547, %v3723, -inf
    %3784 = vmax.xlane.f32.xlu0 %v3783
    %v3785 = vpop.xlane.xlu0 %3784
    %v3786 = vsel %vm547, %v3772, -inf
    %3787 = vmax.xlane.f32.xlu0 %v3786
    %v3788 = vpop.xlane.xlu0 %3787
    %v3789 = vsub.f32 %v3625, %v3779
    %v3790 = vsub.f32 %v3674, %v3782
    %v3791 = vsub.f32 %v3723, %v3785
    %v3792 = vsub.f32 %v3772, %v3788
    %v3793 = vmul.f32 %v3789, 1.442695
    %v3794 = vpow.pop %v3793
    %v3795 = vmul.f32 %v3790, 1.442695
    %v3796 = vpow.pop %v3795
    %v3797 = vmul.f32 %v3791, 1.442695
    %v3798 = vpow.pop %v3797
    %v3799 = vmul.f32 %v3792, 1.442695
    %v3800 = vpow.pop %v3799
    %v3801 = vsel %vm547, %v3794, 0.0
    %3802 = vadd.xlane.f32.xlu0 %v3801
    %v3803 = vpop.xlane.xlu0 %3802
    %v3804 = vsel %vm547, %v3796, 0.0
    %3805 = vadd.xlane.f32.xlu0 %v3804
    %v3806 = vpop.xlane.xlu0 %3805
    %v3807 = vsel %vm547, %v3798, 0.0
    %3808 = vadd.xlane.f32.xlu0 %v3807
    %v3809 = vpop.xlane.xlu0 %3808
    %v3810 = vsel %vm547, %v3800, 0.0
    %3811 = vadd.xlane.f32.xlu0 %v3810
    %v3812 = vpop.xlane.xlu0 %3811
    %v3813 = vrcp.pop %v3803
    %v3814 = vrcp.pop %v3806
    %v3815 = vrcp.pop %v3809
    %v3816 = vrcp.pop %v3812
    %v3817 = vmul.f32 %v3794, %v3813
    %v3818 = vmul.f32 %v3796, %v3814
    %v3819 = vmul.f32 %v3798, %v3815
    %v3820 = vmul.f32 %v3800, %v3816
    %v3821 = vpack.c.bf16 %v3817, %v3817
    %v3822 = vpack.c.bf16 %v3818, %v3818
    %v3823 = vpack.c.bf16 %v3819, %v3819
    %v3824 = vpack.c.bf16 %v3820, %v3820
    %v3825 = vpack.c.bf16 %v3392, %v3392
    %v3826 = vpack.c.bf16 %v3432, %v3432
    %v3827 = vpack.c.bf16 %v3472, %v3472
    %v3828 = vpack.c.bf16 %v3512, %v3512
    %3830 = vrot.lane.b32.xlu0 %v3825, 96
    %v3831 = vpop.permute.xlu0 %3830
    %v3833 = vsel %vm547, %v3821, 0
    %v3836 = vsel %vm799, %v3831, 0
    %3838 = vmatprep.subr.bf16.mxu0 0
    %3839 = vmatpush1.bf16.msra.mxu0 0
    %3840 = vmatprep.subr.bf16.mxu0 0
    %3841 = vmatpush1.bf16.msra.mxu0 0
    %3842 = vmatprep.subr.bf16.mxu0 0
    %3843 = vmatpush1.bf16.msra.mxu0 0
    %3844 = vmatprep.subr.bf16.mxu0 0
    %3845 = vmatpush1.bf16.msra.mxu0 0
    %3846 = vmatprep.subr.bf16.mxu0 0
    %3847 = vmatpush1.bf16.msra.mxu0 0
    %3848 = vmatprep.subr.bf16.mxu0 0
    %3849 = vmatpush1.bf16.msra.mxu0 0
    %3850 = vmatprep.subr.bf16.mxu0 0
    %3851 = vmatpush1.bf16.msra.mxu0 0
    %3852 = vmatprep.subr.bf16.mxu0 0
    %3853 = vmatpush1.bf16.msra.mxu0 %v3836
    %3854 = vmatprep.subr.bf16.mxu0 0
    %3855 = vmatpush2.bf16.msra.mxu0 0
    %3856 = vmatprep.subr.bf16.mxu0 0
    %3857 = vmatpush2.bf16.msra.mxu0 0
    %3858 = vmatprep.subr.bf16.mxu0 0
    %3859 = vmatpush2.bf16.msra.mxu0 0
    %3860 = vmatprep.subr.bf16.mxu0 0
    %3861 = vmatpush2.bf16.msra.mxu0 0
    %3862 = vmatprep.subr.bf16.mxu0 0
    %3863 = vmatpush2.bf16.msra.mxu0 0
    %3864 = vmatprep.subr.bf16.mxu0 0
    %3865 = vmatpush2.bf16.msra.mxu0 0
    %3866 = vmatprep.subr.bf16.mxu0 0
    %3867 = vmatpush2.bf16.msra.mxu0 0
    %3868 = vmatprep.subr.bf16.mxu0 0
    %3869 = vmatpush2.bf16.msra.mxu0 0
    %3870 = vmatprep.mubr.bf16.mxu0 0
    %3871 = vmatmul.mubr.bf16.gmra.mxu0 %v3833
    %v3872 = vpop.f32.mrf.mxu0
    %v3873 = vadd.f32 0.0, %v3872
    %v3874 = vpop.f32.mrf.mxu0
    %v3875 = vpop.f32.mrf.mxu0
    %v3876 = vpop.f32.mrf.mxu0
    %3877 = vdwg.mxu0
    %3879 = vrot.lane.b32.xlu0 %v3826, 96
    %v3880 = vpop.permute.xlu0 %3879
    %v3882 = vsel %vm547, %v3822, 0
    %v3885 = vsel %vm799, %v3880, 0
    %3887 = vmatprep.subr.bf16.mxu0 0
    %3888 = vmatpush1.bf16.msra.mxu0 0
    %3889 = vmatprep.subr.bf16.mxu0 0
    %3890 = vmatpush1.bf16.msra.mxu0 0
    %3891 = vmatprep.subr.bf16.mxu0 0
    %3892 = vmatpush1.bf16.msra.mxu0 0
    %3893 = vmatprep.subr.bf16.mxu0 0
    %3894 = vmatpush1.bf16.msra.mxu0 0
    %3895 = vmatprep.subr.bf16.mxu0 0
    %3896 = vmatpush1.bf16.msra.mxu0 0
    %3897 = vmatprep.subr.bf16.mxu0 0
    %3898 = vmatpush1.bf16.msra.mxu0 0
    %3899 = vmatprep.subr.bf16.mxu0 0
    %3900 = vmatpush1.bf16.msra.mxu0 0
    %3901 = vmatprep.subr.bf16.mxu0 0
    %3902 = vmatpush1.bf16.msra.mxu0 %v3885
    %3903 = vmatprep.subr.bf16.mxu0 0
    %3904 = vmatpush2.bf16.msra.mxu0 0
    %3905 = vmatprep.subr.bf16.mxu0 0
    %3906 = vmatpush2.bf16.msra.mxu0 0
    %3907 = vmatprep.subr.bf16.mxu0 0
    %3908 = vmatpush2.bf16.msra.mxu0 0
    %3909 = vmatprep.subr.bf16.mxu0 0
    %3910 = vmatpush2.bf16.msra.mxu0 0
    %3911 = vmatprep.subr.bf16.mxu0 0
    %3912 = vmatpush2.bf16.msra.mxu0 0
    %3913 = vmatprep.subr.bf16.mxu0 0
    %3914 = vmatpush2.bf16.msra.mxu0 0
    %3915 = vmatprep.subr.bf16.mxu0 0
    %3916 = vmatpush2.bf16.msra.mxu0 0
    %3917 = vmatprep.subr.bf16.mxu0 0
    %3918 = vmatpush2.bf16.msra.mxu0 0
    %3919 = vmatprep.mubr.bf16.mxu0 0
    %3920 = vmatmul.mubr.bf16.gmra.mxu0 %v3882
    %v3921 = vpop.f32.mrf.mxu0
    %v3922 = vadd.f32 0.0, %v3921
    %v3923 = vpop.f32.mrf.mxu0
    %v3924 = vpop.f32.mrf.mxu0
    %v3925 = vpop.f32.mrf.mxu0
    %3926 = vdwg.mxu0
    %3928 = vrot.lane.b32.xlu0 %v3827, 96
    %v3929 = vpop.permute.xlu0 %3928
    %v3931 = vsel %vm547, %v3823, 0
    %v3934 = vsel %vm799, %v3929, 0
    %3936 = vmatprep.subr.bf16.mxu0 0
    %3937 = vmatpush1.bf16.msra.mxu0 0
    %3938 = vmatprep.subr.bf16.mxu0 0
    %3939 = vmatpush1.bf16.msra.mxu0 0
    %3940 = vmatprep.subr.bf16.mxu0 0
    %3941 = vmatpush1.bf16.msra.mxu0 0
    %3942 = vmatprep.subr.bf16.mxu0 0
    %3943 = vmatpush1.bf16.msra.mxu0 0
    %3944 = vmatprep.subr.bf16.mxu0 0
    %3945 = vmatpush1.bf16.msra.mxu0 0
    %3946 = vmatprep.subr.bf16.mxu0 0
    %3947 = vmatpush1.bf16.msra.mxu0 0
    %3948 = vmatprep.subr.bf16.mxu0 0
    %3949 = vmatpush1.bf16.msra.mxu0 0
    %3950 = vmatprep.subr.bf16.mxu0 0
    %3951 = vmatpush1.bf16.msra.mxu0 %v3934
    %3952 = vmatprep.subr.bf16.mxu0 0
    %3953 = vmatpush2.bf16.msra.mxu0 0
    %3954 = vmatprep.subr.bf16.mxu0 0
    %3955 = vmatpush2.bf16.msra.mxu0 0
    %3956 = vmatprep.subr.bf16.mxu0 0
    %3957 = vmatpush2.bf16.msra.mxu0 0
    %3958 = vmatprep.subr.bf16.mxu0 0
    %3959 = vmatpush2.bf16.msra.mxu0 0
    %3960 = vmatprep.subr.bf16.mxu0 0
    %3961 = vmatpush2.bf16.msra.mxu0 0
    %3962 = vmatprep.subr.bf16.mxu0 0
    %3963 = vmatpush2.bf16.msra.mxu0 0
    %3964 = vmatprep.subr.bf16.mxu0 0
    %3965 = vmatpush2.bf16.msra.mxu0 0
    %3966 = vmatprep.subr.bf16.mxu0 0
    %3967 = vmatpush2.bf16.msra.mxu0 0
    %3968 = vmatprep.mubr.bf16.mxu0 0
    %3969 = vmatmul.mubr.bf16.gmra.mxu0 %v3931
    %v3970 = vpop.f32.mrf.mxu0
    %v3971 = vadd.f32 0.0, %v3970
    %v3972 = vpop.f32.mrf.mxu0
    %v3973 = vpop.f32.mrf.mxu0
    %v3974 = vpop.f32.mrf.mxu0
    %3975 = vdwg.mxu0
    %3977 = vrot.lane.b32.xlu0 %v3828, 96
    %v3978 = vpop.permute.xlu0 %3977
    %v3980 = vsel %vm547, %v3824, 0
    %v3983 = vsel %vm799, %v3978, 0
    %3985 = vmatprep.subr.bf16.mxu0 0
    %3986 = vmatpush1.bf16.msra.mxu0 0
    %3987 = vmatprep.subr.bf16.mxu0 0
    %3988 = vmatpush1.bf16.msra.mxu0 0
    %3989 = vmatprep.subr.bf16.mxu0 0
    %3990 = vmatpush1.bf16.msra.mxu0 0
    %3991 = vmatprep.subr.bf16.mxu0 0
    %3992 = vmatpush1.bf16.msra.mxu0 0
    %3993 = vmatprep.subr.bf16.mxu0 0
    %3994 = vmatpush1.bf16.msra.mxu0 0
    %3995 = vmatprep.subr.bf16.mxu0 0
    %3996 = vmatpush1.bf16.msra.mxu0 0
    %3997 = vmatprep.subr.bf16.mxu0 0
    %3998 = vmatpush1.bf16.msra.mxu0 0
    %3999 = vmatprep.subr.bf16.mxu0 0
    %4000 = vmatpush1.bf16.msra.mxu0 %v3983
    %4001 = vmatprep.subr.bf16.mxu0 0
    %4002 = vmatpush2.bf16.msra.mxu0 0
    %4003 = vmatprep.subr.bf16.mxu0 0
    %4004 = vmatpush2.bf16.msra.mxu0 0
    %4005 = vmatprep.subr.bf16.mxu0 0
    %4006 = vmatpush2.bf16.msra.mxu0 0
    %4007 = vmatprep.subr.bf16.mxu0 0
    %4008 = vmatpush2.bf16.msra.mxu0 0
    %4009 = vmatprep.subr.bf16.mxu0 0
    %4010 = vmatpush2.bf16.msra.mxu0 0
    %4011 = vmatprep.subr.bf16.mxu0 0
    %4012 = vmatpush2.bf16.msra.mxu0 0
    %4013 = vmatprep.subr.bf16.mxu0 0
    %4014 = vmatpush2.bf16.msra.mxu0 0
    %4015 = vmatprep.subr.bf16.mxu0 0
    %4016 = vmatpush2.bf16.msra.mxu0 0
    %4017 = vmatprep.mubr.bf16.mxu0 0
    %4018 = vmatmul.mubr.bf16.gmra.mxu0 %v3980
    %v4019 = vpop.f32.mrf.mxu0
    %v4020 = vadd.f32 0.0, %v4019
    %v4021 = vpop.f32.mrf.mxu0
    %v4022 = vpop.f32.mrf.mxu0
    %v4023 = vpop.f32.mrf.mxu0
    %4024 = vdwg.mxu0
    %v4025 = vpack.c.bf16 %v3873, %v3873
    %v4026 = vpack.c.bf16 %v3922, %v3922
    %v4027 = vpack.c.bf16 %v3971, %v3971
    %v4028 = vpack.c.bf16 %v4020, %v4020
    %v4030 = vsel %vm547, %v4025, 0
    %4032 = vmatprep.subr.bf16.mxu0 0
    %4033 = vmatpush1.bf16.msra.mxu0 0
    %4034 = vmatprep.subr.bf16.mxu0 0
    %4035 = vmatpush1.bf16.msra.mxu0 0
    %4036 = vmatprep.subr.bf16.mxu0 0
    %4037 = vmatpush1.bf16.msra.mxu0 0
    %4038 = vmatprep.subr.bf16.mxu0 0
    %4039 = vmatpush1.bf16.msra.mxu0 0
    %4040 = vmatprep.subr.bf16.mxu0 0
    %4041 = vmatpush1.bf16.msra.mxu0 0
    %4042 = vmatprep.subr.bf16.mxu0 0
    %4043 = vmatpush1.bf16.msra.mxu0 0
    %4044 = vmatprep.subr.bf16.mxu0 0
    %4045 = vmatpush1.bf16.msra.mxu0 0
    %4046 = vmatprep.subr.bf16.mxu0 0
    %4047 = vmatpush1.bf16.msra.mxu0 %v998
    %4048 = vmatprep.subr.bf16.mxu0 0
    %4049 = vmatpush2.bf16.msra.mxu0 0
    %4050 = vmatprep.subr.bf16.mxu0 0
    %4051 = vmatpush2.bf16.msra.mxu0 0
    %4052 = vmatprep.subr.bf16.mxu0 0
    %4053 = vmatpush2.bf16.msra.mxu0 0
    %4054 = vmatprep.subr.bf16.mxu0 0
    %4055 = vmatpush2.bf16.msra.mxu0 0
    %4056 = vmatprep.subr.bf16.mxu0 0
    %4057 = vmatpush2.bf16.msra.mxu0 0
    %4058 = vmatprep.subr.bf16.mxu0 0
    %4059 = vmatpush2.bf16.msra.mxu0 0
    %4060 = vmatprep.subr.bf16.mxu0 0
    %4061 = vmatpush2.bf16.msra.mxu0 0
    %4062 = vmatprep.subr.bf16.mxu0 0
    %4063 = vmatpush2.bf16.msra.mxu0 0
    %4064 = vmatprep.mubr.bf16.mxu0 0
    %4065 = vmatmul.mubr.bf16.gmra.mxu0 %v4030
    %v4066 = vpop.f32.mrf.mxu0
    %v4067 = vadd.f32 0.0, %v4066
    %v4068 = vpop.f32.mrf.mxu0
    %v4069 = vpop.f32.mrf.mxu0
    %v4070 = vpop.f32.mrf.mxu0
    %4071 = vdwg.mxu0
    %v4073 = vsel %vm547, %v4026, 0
    %4075 = vmatprep.subr.bf16.mxu0 0
    %4076 = vmatpush1.bf16.msra.mxu0 0
    %4077 = vmatprep.subr.bf16.mxu0 0
    %4078 = vmatpush1.bf16.msra.mxu0 0
    %4079 = vmatprep.subr.bf16.mxu0 0
    %4080 = vmatpush1.bf16.msra.mxu0 0
    %4081 = vmatprep.subr.bf16.mxu0 0
    %4082 = vmatpush1.bf16.msra.mxu0 0
    %4083 = vmatprep.subr.bf16.mxu0 0
    %4084 = vmatpush1.bf16.msra.mxu0 0
    %4085 = vmatprep.subr.bf16.mxu0 0
    %4086 = vmatpush1.bf16.msra.mxu0 0
    %4087 = vmatprep.subr.bf16.mxu0 0
    %4088 = vmatpush1.bf16.msra.mxu0 0
    %4089 = vmatprep.subr.bf16.mxu0 0
    %4090 = vmatpush1.bf16.msra.mxu0 %v1044
    %4091 = vmatprep.subr.bf16.mxu0 0
    %4092 = vmatpush2.bf16.msra.mxu0 0
    %4093 = vmatprep.subr.bf16.mxu0 0
    %4094 = vmatpush2.bf16.msra.mxu0 0
    %4095 = vmatprep.subr.bf16.mxu0 0
    %4096 = vmatpush2.bf16.msra.mxu0 0
    %4097 = vmatprep.subr.bf16.mxu0 0
    %4098 = vmatpush2.bf16.msra.mxu0 0
    %4099 = vmatprep.subr.bf16.mxu0 0
    %4100 = vmatpush2.bf16.msra.mxu0 0
    %4101 = vmatprep.subr.bf16.mxu0 0
    %4102 = vmatpush2.bf16.msra.mxu0 0
    %4103 = vmatprep.subr.bf16.mxu0 0
    %4104 = vmatpush2.bf16.msra.mxu0 0
    %4105 = vmatprep.subr.bf16.mxu0 0
    %4106 = vmatpush2.bf16.msra.mxu0 0
    %4107 = vmatprep.mubr.bf16.mxu0 0
    %4108 = vmatmul.mubr.bf16.gmra.mxu0 %v4073
    %v4109 = vpop.f32.mrf.mxu0
    %v4110 = vadd.f32 0.0, %v4109
    %v4111 = vpop.f32.mrf.mxu0
    %v4112 = vpop.f32.mrf.mxu0
    %v4113 = vpop.f32.mrf.mxu0
    %4114 = vdwg.mxu0
    %v4116 = vsel %vm547, %v4027, 0
    %4118 = vmatprep.subr.bf16.mxu0 0
    %4119 = vmatpush1.bf16.msra.mxu0 0
    %4120 = vmatprep.subr.bf16.mxu0 0
    %4121 = vmatpush1.bf16.msra.mxu0 0
    %4122 = vmatprep.subr.bf16.mxu0 0
    %4123 = vmatpush1.bf16.msra.mxu0 0
    %4124 = vmatprep.subr.bf16.mxu0 0
    %4125 = vmatpush1.bf16.msra.mxu0 0
    %4126 = vmatprep.subr.bf16.mxu0 0
    %4127 = vmatpush1.bf16.msra.mxu0 0
    %4128 = vmatprep.subr.bf16.mxu0 0
    %4129 = vmatpush1.bf16.msra.mxu0 0
    %4130 = vmatprep.subr.bf16.mxu0 0
    %4131 = vmatpush1.bf16.msra.mxu0 0
    %4132 = vmatprep.subr.bf16.mxu0 0
    %4133 = vmatpush1.bf16.msra.mxu0 %v1090
    %4134 = vmatprep.subr.bf16.mxu0 0
    %4135 = vmatpush2.bf16.msra.mxu0 0
    %4136 = vmatprep.subr.bf16.mxu0 0
    %4137 = vmatpush2.bf16.msra.mxu0 0
    %4138 = vmatprep.subr.bf16.mxu0 0
    %4139 = vmatpush2.bf16.msra.mxu0 0
    %4140 = vmatprep.subr.bf16.mxu0 0
    %4141 = vmatpush2.bf16.msra.mxu0 0
    %4142 = vmatprep.subr.bf16.mxu0 0
    %4143 = vmatpush2.bf16.msra.mxu0 0
    %4144 = vmatprep.subr.bf16.mxu0 0
    %4145 = vmatpush2.bf16.msra.mxu0 0
    %4146 = vmatprep.subr.bf16.mxu0 0
    %4147 = vmatpush2.bf16.msra.mxu0 0
    %4148 = vmatprep.subr.bf16.mxu0 0
    %4149 = vmatpush2.bf16.msra.mxu0 0
    %4150 = vmatprep.mubr.bf16.mxu0 0
    %4151 = vmatmul.mubr.bf16.gmra.mxu0 %v4116
    %v4152 = vpop.f32.mrf.mxu0
    %v4153 = vadd.f32 0.0, %v4152
    %v4154 = vpop.f32.mrf.mxu0
    %v4155 = vpop.f32.mrf.mxu0
    %v4156 = vpop.f32.mrf.mxu0
    %4157 = vdwg.mxu0
    %v4159 = vsel %vm547, %v4028, 0
    %4161 = vmatprep.subr.bf16.mxu0 0
    %4162 = vmatpush1.bf16.msra.mxu0 0
    %4163 = vmatprep.subr.bf16.mxu0 0
    %4164 = vmatpush1.bf16.msra.mxu0 0
    %4165 = vmatprep.subr.bf16.mxu0 0
    %4166 = vmatpush1.bf16.msra.mxu0 0
    %4167 = vmatprep.subr.bf16.mxu0 0
    %4168 = vmatpush1.bf16.msra.mxu0 0
    %4169 = vmatprep.subr.bf16.mxu0 0
    %4170 = vmatpush1.bf16.msra.mxu0 0
    %4171 = vmatprep.subr.bf16.mxu0 0
    %4172 = vmatpush1.bf16.msra.mxu0 0
    %4173 = vmatprep.subr.bf16.mxu0 0
    %4174 = vmatpush1.bf16.msra.mxu0 0
    %4175 = vmatprep.subr.bf16.mxu0 0
    %4176 = vmatpush1.bf16.msra.mxu0 %v1136
    %4177 = vmatprep.subr.bf16.mxu0 0
    %4178 = vmatpush2.bf16.msra.mxu0 0
    %4179 = vmatprep.subr.bf16.mxu0 0
    %4180 = vmatpush2.bf16.msra.mxu0 0
    %4181 = vmatprep.subr.bf16.mxu0 0
    %4182 = vmatpush2.bf16.msra.mxu0 0
    %4183 = vmatprep.subr.bf16.mxu0 0
    %4184 = vmatpush2.bf16.msra.mxu0 0
    %4185 = vmatprep.subr.bf16.mxu0 0
    %4186 = vmatpush2.bf16.msra.mxu0 0
    %4187 = vmatprep.subr.bf16.mxu0 0
    %4188 = vmatpush2.bf16.msra.mxu0 0
    %4189 = vmatprep.subr.bf16.mxu0 0
    %4190 = vmatpush2.bf16.msra.mxu0 0
    %4191 = vmatprep.subr.bf16.mxu0 0
    %4192 = vmatpush2.bf16.msra.mxu0 0
    %4193 = vmatprep.mubr.bf16.mxu0 0
    %4194 = vmatmul.mubr.bf16.gmra.mxu0 %v4159
    %v4195 = vpop.f32.mrf.mxu0
    %v4196 = vadd.f32 0.0, %v4195
    %v4197 = vpop.f32.mrf.mxu0
    %v4198 = vpop.f32.mrf.mxu0
    %v4199 = vpop.f32.mrf.mxu0
    %4200 = vdwg.mxu0
    %v4201 = vsel %vm236, %v4067, 0.0
    %v4202 = vsel %vm236, %v4110, 0.0
    %v4203 = vadd.f32 %v4201, %v4202
    %v4204 = vsel %vm236, %v4153, 0.0
    %v4205 = vadd.f32 %v4203, %v4204
    %v4206 = vsel %vm236, %v4196, 0.0
    %v4207 = vadd.f32 %v4205, %v4206
    %v4208 = vadd.f32 %v4207, %v1189
    %v4209 = vadd.f32 %v3352, %v4208
    %v4210 = vsel %vm236, %v4209, 0.0
    %4211 = vadd.xlane.f32.xlu0 %v4210
    %v4212 = vpop.xlane.xlu0 %4211
    %v4213 = vmul.f32 %v4212, %v1196
    %v4214 = vsub.f32 %v4209, %v4213
    %v4215 = vmul.f32 %v4214, %v4214
    %v4216 = vsel %vm236, %v4215, 0.0
    %4217 = vadd.xlane.f32.xlu0 %v4216
    %v4218 = vpop.xlane.xlu0 %4217
    %v4219 = vmul.f32 %v4218, %v1196
    %v4220 = vadd.f32 %v4219, 1e-05
    %v4221 = vrsqrt.pop %v4220
    %v4222 = vmul.f32 %v4214, %v4221
    %v4223 = vmul.f32 %v4222, %v1211
    %v4224 = vadd.f32 %v4223, %v1218
    %v4225 = vpack.c.bf16 %v4224, %v4224
    %v4227 = vsel %vm236, %v4225, 0
    %4229 = vmatprep.subr.bf16.mxu0 0
    %4230 = vmatpush1.bf16.msra.mxu0 0
    %4231 = vmatprep.subr.bf16.mxu0 0
    %4232 = vmatpush1.bf16.msra.mxu0 0
    %4233 = vmatprep.subr.bf16.mxu0 0
    %4234 = vmatpush1.bf16.msra.mxu0 0
    %4235 = vmatprep.subr.bf16.mxu0 0
    %4236 = vmatpush1.bf16.msra.mxu0 0
    %4237 = vmatprep.subr.bf16.mxu0 0
    %4238 = vmatpush1.bf16.msra.mxu0 0
    %4239 = vmatprep.subr.bf16.mxu0 0
    %4240 = vmatpush1.bf16.msra.mxu0 0
    %4241 = vmatprep.subr.bf16.mxu0 0
    %4242 = vmatpush1.bf16.msra.mxu0 %v1237
    %4243 = vmatprep.subr.bf16.mxu0 0
    %4244 = vmatpush1.bf16.msra.mxu0 %v1236
    %4245 = vmatprep.subr.bf16.mxu0 0
    %4246 = vmatpush2.bf16.msra.mxu0 0
    %4247 = vmatprep.subr.bf16.mxu0 0
    %4248 = vmatpush2.bf16.msra.mxu0 0
    %4249 = vmatprep.subr.bf16.mxu0 0
    %4250 = vmatpush2.bf16.msra.mxu0 0
    %4251 = vmatprep.subr.bf16.mxu0 0
    %4252 = vmatpush2.bf16.msra.mxu0 0
    %4253 = vmatprep.subr.bf16.mxu0 0
    %4254 = vmatpush2.bf16.msra.mxu0 0
    %4255 = vmatprep.subr.bf16.mxu0 0
    %4256 = vmatpush2.bf16.msra.mxu0 0
    %4257 = vmatprep.subr.bf16.mxu0 0
    %4258 = vmatpush2.bf16.msra.mxu0 0
    %4259 = vmatprep.subr.bf16.mxu0 0
    %4260 = vmatpush2.bf16.msra.mxu0 0
    %4261 = vmatprep.mubr.bf16.mxu0 0
    %4262 = vmatmul.mubr.bf16.gmra.mxu0 %v4227
    %v4263 = vpop.f32.mrf.mxu0
    %v4264 = vadd.f32 %v1226, %v4263
    %v4265 = vpop.f32.mrf.mxu0
    %v4266 = vpop.f32.mrf.mxu0
    %v4267 = vpop.f32.mrf.mxu0
    %4268 = vdwg.mxu0
    %v4269 = vmax.f32 %v4264, 0.0
    %v4270 = vpack.c.bf16 %v4269, %v4269
    %v4272 = vsel %vm1315, %v4270, 0
    %4274 = vmatprep.subr.bf16.mxu0 0
    %4275 = vmatpush1.bf16.msra.mxu0 0
    %4276 = vmatprep.subr.bf16.mxu0 0
    %4277 = vmatpush1.bf16.msra.mxu0 0
    %4278 = vmatprep.subr.bf16.mxu0 0
    %4279 = vmatpush1.bf16.msra.mxu0 0
    %4280 = vmatprep.subr.bf16.mxu0 0
    %4281 = vmatpush1.bf16.msra.mxu0 0
    %4282 = vmatprep.subr.bf16.mxu0 0
    %4283 = vmatpush1.bf16.msra.mxu0 %v1310
    %4284 = vmatprep.subr.bf16.mxu0 0
    %4285 = vmatpush1.bf16.msra.mxu0 %v1309
    %4286 = vmatprep.subr.bf16.mxu0 0
    %4287 = vmatpush1.bf16.msra.mxu0 %v1308
    %4288 = vmatprep.subr.bf16.mxu0 0
    %4289 = vmatpush1.bf16.msra.mxu0 %v1307
    %4290 = vmatprep.subr.bf16.mxu0 0
    %4291 = vmatpush2.bf16.msra.mxu0 0
    %4292 = vmatprep.subr.bf16.mxu0 0
    %4293 = vmatpush2.bf16.msra.mxu0 0
    %4294 = vmatprep.subr.bf16.mxu0 0
    %4295 = vmatpush2.bf16.msra.mxu0 0
    %4296 = vmatprep.subr.bf16.mxu0 0
    %4297 = vmatpush2.bf16.msra.mxu0 0
    %4298 = vmatprep.subr.bf16.mxu0 0
    %4299 = vmatpush2.bf16.msra.mxu0 0
    %4300 = vmatprep.subr.bf16.mxu0 0
    %4301 = vmatpush2.bf16.msra.mxu0 0
    %4302 = vmatprep.subr.bf16.mxu0 0
    %4303 = vmatpush2.bf16.msra.mxu0 0
    %4304 = vmatprep.subr.bf16.mxu0 0
    %4305 = vmatpush2.bf16.msra.mxu0 0
    %4306 = vmatprep.mubr.bf16.mxu0 0
    %4307 = vmatmul.mubr.bf16.gmra.mxu0 %v4272
    %v4308 = vpop.f32.mrf.mxu0
    %v4309 = vadd.f32 %v1289, %v4308
    %v4310 = vpop.f32.mrf.mxu0
    %v4311 = vpop.f32.mrf.mxu0
    %v4312 = vpop.f32.mrf.mxu0
    %4313 = vdwg.mxu0
    %v4314 = vadd.f32 %v4224, %v4309
    %v4315 = vsel %vm236, %v4314, 0.0
    %4316 = vadd.xlane.f32.xlu0 %v4315
    %v4317 = vpop.xlane.xlu0 %4316
    %v4318 = vmul.f32 %v4317, %v1196
    %v4319 = vsub.f32 %v4314, %v4318
    %v4320 = vmul.f32 %v4319, %v4319
    %v4321 = vsel %vm236, %v4320, 0.0
    %4322 = vadd.xlane.f32.xlu0 %v4321
    %v4323 = vpop.xlane.xlu0 %4322
    %v4324 = vmul.f32 %v4323, %v1196
    %v4325 = vadd.f32 %v4324, 1e-05
    %v4326 = vrsqrt.pop %v4325
    %v4327 = vmul.f32 %v4319, %v4326
    %v4328 = vmul.f32 %v4327, %v1377
    %v4329 = vadd.f32 %v4328, %v1384
    %s4330 = scalar_lea.vmem [#allocation13], 8
    %4331 = vst.msk [vmem:[%s4330] sm:$0xff] %vm236, %v4329
    // Predicated region
    $region94: #{tpu_custom_call.1} parent=1 // pred_check
      _
    $region95: #{tpu_custom_call.1} parent=1 // pred_check_branch
      %4333 = sbr.rel (0) target = $region97
    $region96: #{tpu_custom_call.1} parent=1 // pred_region
      %s4335 = ssub.s32 256, 256
      %4336 = vsyncadd [#allocation4], %s4335
      %s4337 = sshll.u32 [#allocation13], 4
      %s4338 = int_to_ptr.vmem [resolvable:$true] %s4337
      %4343 = dma.vmem_to_hbm [thread:$0]  %s4338, 256, %s17, [#allocation4], 128, 128, 8
    $region97: #{tpu_custom_call.1} parent=1 // pred_fallthru
      _
    // Predicated region
    $region98: #{tpu_custom_call.1} parent=1 // pred_check
      _
    $region99: #{tpu_custom_call.1} parent=1 // pred_check_branch
      %4345 = sbr.rel (0) target = $region101
    $region100: #{tpu_custom_call.1} parent=1 // pred_region
      %4346 = dma.done [#allocation4], 256
    $region101: #{tpu_custom_call.1} parent=1 // pred_fallthru
      _
    %4347 = vsyncpa [#allocation3], 1
    %4348 = vsyncpa [#allocation6], 1
    %4349 = vsyncpa [#allocation9], 1
    %4350 = vsyncpa [#allocation12], 1
    %4351 = vsyncpa [#allocation4], 1

</llo_original>
